<compile_context>
chip_gen: v6e
topology: v6e:2x2x1
jax: 0.10.0
libtpu: 0.0.40
codegen_flags: <defaults>
</compile_context>

<pallas_src>
import functools

import jax
import jax.numpy as jnp
from jax.experimental import pallas as pl
from jax.experimental.pallas import tpu as pltpu

TM = 512        # matmul row tile (rows = N*H*W); full-K / full-N per tile.
EPS = 1e-5      # PyTorch BatchNorm2d default eps.


def _round_up(x, m):
    return -(-x // m) * m


# ---------------------------------------------------------------------------
# Pallas kernel 1: bf16 matmul (full-K, VMEM-resident B) + fused BN stats.
# y = A @ B with f32 accumulation; y stored bf16; per-M-tile sum and
# sum-of-squares of the f32 accumulator are emitted so BatchNorm never makes
# extra HBM passes over y to get its batch statistics.
# ---------------------------------------------------------------------------
def _mm_bn_stats_kernel(a_ref, b_ref, y_ref, sum_ref, sq_ref):
    y = jnp.dot(a_ref[...], b_ref[...], preferred_element_type=jnp.float32)
    y_ref[...] = y.astype(y_ref.dtype)
    s = jnp.sum(y, axis=0, keepdims=True)          # (1, Np)
    q = jnp.sum(y * y, axis=0, keepdims=True)      # (1, Np)
    # Stats blocks are (8, Np) (aligned to the (8,128) tiling); rows duplicated,
    # the wrapper consumes row 0 of each block.
    sum_ref[...] = jnp.broadcast_to(s, sum_ref.shape)
    sq_ref[...] = jnp.broadcast_to(q, sq_ref.shape)


def pallas_mm_bn_stats(a, b):
    """a: (M, K), b: (K, C) -> (y_pad (Mp,Np) bf16, psum (num_m,Np) f32,
    psq (num_m,Np) f32, Np)."""
    a = a.astype(jnp.bfloat16)
    b = b.astype(jnp.bfloat16)
    M, K = a.shape
    _, C = b.shape
    Mp, Kp, Np = _round_up(M, TM), _round_up(K, 128), _round_up(C, 128)
    a_p = jnp.pad(a, ((0, Mp - M), (0, Kp - K)))
    b_p = jnp.pad(b, ((0, Kp - K), (0, Np - C)))
    num_m = Mp // TM
    # Per-step VMEM (double-buffered A/B/y in bf16) stays well under 6 MiB even
    # at dim=128, i.e. far below the 32 MiB scoped default on v7x (64 MiB phys),
    # so no vmem_limit_bytes override is needed.
    y, ps, pq = pl.pallas_call(
        _mm_bn_stats_kernel,
        out_shape=(jax.ShapeDtypeStruct((Mp, Np), jnp.bfloat16),
                   jax.ShapeDtypeStruct((num_m * 8, Np), jnp.float32),
                   jax.ShapeDtypeStruct((num_m * 8, Np), jnp.float32)),
        grid_spec=pltpu.PrefetchScalarGridSpec(
            num_scalar_prefetch=0,
            grid=(num_m,),
            in_specs=[pl.BlockSpec((TM, Kp), lambda i: (i, 0)),
                      pl.BlockSpec((Kp, Np), lambda i: (0, 0))],   # B resident
            out_specs=[pl.BlockSpec((TM, Np), lambda i: (i, 0)),
                       pl.BlockSpec((8, Np), lambda i: (i, 0)),
                       pl.BlockSpec((8, Np), lambda i: (i, 0))]),
        compiler_params=pltpu.CompilerParams(
            dimension_semantics=("parallel",)),
    )(a_p, b_p)
    return y, ps[::8], pq[::8], Np


# ---------------------------------------------------------------------------
# Pallas kernel 2: bf16 matmul + bias + tanh fused epilogue (final layer).
# ---------------------------------------------------------------------------
def _mm_bias_tanh_kernel(a_ref, b_ref, bias_ref, o_ref):
    y = jnp.dot(a_ref[...], b_ref[...], preferred_element_type=jnp.float32)
    o_ref[...] = jnp.tanh(y + bias_ref[...])


def pallas_mm_bias_tanh(a, b, bias):
    a = a.astype(jnp.bfloat16)
    b = b.astype(jnp.bfloat16)
    M, K = a.shape
    _, C = b.shape
    Mp, Kp, Np = _round_up(M, TM), _round_up(K, 128), _round_up(C, 128)
    a_p = jnp.pad(a, ((0, Mp - M), (0, Kp - K)))
    b_p = jnp.pad(b, ((0, Kp - K), (0, Np - C)))
    bias_p = jnp.pad(bias.astype(jnp.float32), (0, Np - C)).reshape(1, Np)
    out = pl.pallas_call(
        _mm_bias_tanh_kernel,
        out_shape=jax.ShapeDtypeStruct((Mp, Np), jnp.float32),
        grid_spec=pltpu.PrefetchScalarGridSpec(
            num_scalar_prefetch=0,
            grid=(Mp // TM,),
            in_specs=[pl.BlockSpec((TM, Kp), lambda i: (i, 0)),
                      pl.BlockSpec((Kp, Np), lambda i: (0, 0)),     # B resident
                      pl.BlockSpec((1, Np), lambda i: (0, 0))],     # bias resident
            out_specs=pl.BlockSpec((TM, Np), lambda i: (i, 0))),
        compiler_params=pltpu.CompilerParams(
            dimension_semantics=("parallel",)),
    )(a_p, b_p, bias_p)
    return out, Np


# ---------------------------------------------------------------------------
# Pallas kernel 3: fused per-column affine + ReLU (the BN normalize pass).
# ---------------------------------------------------------------------------
def _affine_relu_kernel(x_ref, s_ref, b_ref, o_ref):
    x = x_ref[...].astype(jnp.float32)
    o_ref[...] = jnp.maximum(x * s_ref[...] + b_ref[...], 0.0).astype(o_ref.dtype)


def pallas_affine_relu(y_pad, scale, shift):
    """y_pad: (Mp, Np) bf16 (already tile-padded); scale/shift: (Np,) f32."""
    Mp, Np = y_pad.shape
    bm = 1024 if Mp % 1024 == 0 else TM
    s = scale.astype(jnp.float32).reshape(1, Np)
    t = shift.astype(jnp.float32).reshape(1, Np)
    return pl.pallas_call(
        _affine_relu_kernel,
        out_shape=jax.ShapeDtypeStruct((Mp, Np), jnp.bfloat16),
        grid_spec=pltpu.PrefetchScalarGridSpec(
            num_scalar_prefetch=0,
            grid=(Mp // bm,),
            in_specs=[pl.BlockSpec((bm, Np), lambda i: (i, 0)),
                      pl.BlockSpec((1, Np), lambda i: (0, 0)),
                      pl.BlockSpec((1, Np), lambda i: (0, 0))],
            out_specs=pl.BlockSpec((bm, Np), lambda i: (i, 0))),
        compiler_params=pltpu.CompilerParams(
            dimension_semantics=("parallel",)),
    )(y_pad, s, t)


# ---------------------------------------------------------------------------
# Sub-pixel (4-phase) decomposition of ConvTranspose2d(k=4, stride=2, pad=1).
# Output pixel (2a+ph, 2b+pw) = sum over a 2x2 sub-kernel applied to a 2x2
# window of the 1-padded input; all 4 phases live inside the 3x3 window of
# xpad starting at (a, b), so a single (9*Cin, 4*Cout) matmul computes them.
# ---------------------------------------------------------------------------
_PHASES = ((0, 0), (0, 1), (1, 0), (1, 1))


def _combined_weight_s2(w):
    """Torch weight (Cin, Cout, 4, 4) -> combined (9*Cin, 4*Cout) matrix."""
    cin, cout = w.shape[0], w.shape[1]
    wc = jnp.zeros((3, 3, cin, 4, cout), w.dtype)
    for p, (ph, pw) in enumerate(_PHASES):
        for i in range(2):
            for j in range(2):
                wc = wc.at[ph + i, pw + j, :, p, :].set(
                    w[:, :, 3 - ph - 2 * i, 3 - pw - 2 * j])
    return wc.reshape(9 * cin, 4 * cout)


def _patches_3x3(x_nhwc, dtype):
    """All 3x3 windows of the 1-padded NHWC input -> (N*H*W, 9*Cin)."""
    n, h, w, cin = x_nhwc.shape
    xp = jnp.pad(x_nhwc.astype(dtype), ((0, 0), (1, 1), (1, 1), (0, 0)))
    # TODO(synk): fuse this window extraction into the Pallas matmul (halo'd
    # row-band DMA) instead of materializing the 9x-expanded patch slab in HBM.
    pats = jnp.stack([xp[:, r:r + h, c:c + w, :]
                      for r in range(3) for c in range(3)], axis=3)
    return pats.reshape(n * h * w, 9 * cin)


def _pixel_shuffle(y2d, n, h, w, cout):
    """(N*H*W, 4*Cout) phase-grouped columns -> (N, 2H, 2W, Cout)."""
    y = y2d.reshape(n, h, w, 2, 2, cout)
    return jnp.transpose(y, (0, 1, 3, 2, 4, 5)).reshape(n, 2 * h, 2 * w, cout)


# ---------------------------------------------------------------------------
# Layers
# ---------------------------------------------------------------------------
def first_deconv_bn_relu(x, p):
    """ConvTranspose2d(k=4, s=1, p=0) on a 1x1 input + BN(train) + ReLU.
    rows == batch (tiny) -> plain XLA. Conv bias dropped: cancelled by BN."""
    w, gamma, beta = p["w"], p["gamma"], p["beta"]
    cin, cout, k, _ = w.shape
    n = x.shape[0]
    wmat = jnp.transpose(w, (0, 2, 3, 1)).reshape(cin, k * k * cout)
    y = jnp.dot(x, wmat).reshape(n, k, k, cout)                # NHWC (N,4,4,Cout)
    mean = jnp.mean(y, axis=(0, 1, 2))
    var = jnp.mean(jnp.square(y - mean), axis=(0, 1, 2))
    y = (y - mean) * (gamma * jax.lax.rsqrt(var + EPS)) + beta
    return jnp.maximum(y, 0.0)


def deconv_s2_bn_relu(x_nhwc, p):
    """ConvTranspose2d(k=4, s=2, pad=1) + BatchNorm2d (training stats) + ReLU."""
    w, gamma, beta = p["w"], p["gamma"], p["beta"]
    cout = w.shape[1]
    n, h, wd, _ = x_nhwc.shape
    m = n * h * wd
    wc = _combined_weight_s2(w)                                 # (9*Cin, 4*Cout)

    if m >= TM:
        # ---- Pallas hot path: bf16 matmul with fused BN partial stats ----
        patches = _patches_3x3(x_nhwc, jnp.bfloat16)
        y_pad, psum, psq, np_ = pallas_mm_bn_stats(patches, wc)
        # Tiny per-channel finish: fold M-tiles and the 4 output phases.
        csum = jnp.sum(psum[:, :4 * cout], axis=0).reshape(4, cout).sum(0)
        csq = jnp.sum(psq[:, :4 * cout], axis=0).reshape(4, cout).sum(0)
        cnt = 4.0 * m                                           # N*(2H)*(2W) pixels
        mean = csum / cnt
        var = jnp.maximum(csq / cnt - mean * mean, 0.0)         # biased (train mode)
        scale_c = gamma * jax.lax.rsqrt(var + EPS)
        shift_c = beta - mean * scale_c
        scale = jnp.pad(jnp.tile(scale_c, 4), (0, np_ - 4 * cout))
        shift = jnp.pad(jnp.tile(shift_c, 4), (0, np_ - 4 * cout))
        y_pad = pallas_affine_relu(y_pad, scale, shift)         # fused BN + ReLU
        y2d = y_pad[:m, :4 * cout]
    else:
        # ---- tiny layers (< 512 rows): plain XLA dot + BN + ReLU ----
        patches = _patches_3x3(x_nhwc, jnp.float32)
        y2d = jnp.dot(patches, wc)                              # (M, 4*Cout)
        yc = y2d.reshape(m * 4, cout)
        mean = jnp.mean(yc, axis=0)
        var = jnp.mean(jnp.square(yc - mean), axis=0)
        yc = jnp.maximum((yc - mean) * (gamma * jax.lax.rsqrt(var + EPS)) + beta,
                         0.0)
        y2d = yc.reshape(m, 4 * cout)

    return _pixel_shuffle(y2d, n, h, wd, cout)


def deconv_s2_bias_tanh(x_nhwc, p):
    """Final ConvTranspose2d(k=4, s=2, pad=1) + bias + Tanh, fully fused."""
    w, b = p["w"], p["b"]
    cout = w.shape[1]
    n, h, wd, _ = x_nhwc.shape
    m = n * h * wd
    wc = _combined_weight_s2(w)
    patches = _patches_3x3(x_nhwc, jnp.bfloat16)
    y_pad, _ = pallas_mm_bias_tanh(patches, wc, jnp.tile(b, 4))
    return _pixel_shuffle(y_pad[:m, :4 * cout], n, h, wd, cout)


# ---------------------------------------------------------------------------
# GeneratorCGAN forward
# ---------------------------------------------------------------------------
def init_params(key, z_dim, c_dim, dim):
    layer_dims = [(z_dim + c_dim, dim * 4),
                  (dim * 4, dim * 2),
                  (dim * 2, dim),
                  (dim, dim),
                  (dim, dim),
                  (dim, 3)]
    params = []
    for (cin, cout) in layer_dims:
        key, kw, kb = jax.random.split(key, 3)
        w = jax.random.normal(kw, (cin, cout, 4, 4), jnp.float32) * 0.05
        b = jax.random.normal(kb, (cout,), jnp.float32) * 0.01
        gamma = jnp.ones((cout,), jnp.float32)   # PyTorch BN default init
        beta = jnp.zeros((cout,), jnp.float32)
        params.append(dict(w=w, b=b, gamma=gamma, beta=beta))
    return params


def generator_forward(params, z, c):
    """z: (N, z_dim), c: (N, c_dim) -> NCHW image (N, 3, 128, 128)."""
    x = jnp.concatenate([z, c], axis=1).astype(jnp.float32)     # view(N, C, 1, 1)
    h = first_deconv_bn_relu(x, params[0])                      # (N, 4, 4, 4*dim)
    for li in range(1, 5):                                      # 4x up-samplings
        h = deconv_s2_bn_relu(h, params[li])
    img = deconv_s2_bias_tanh(h, params[5])                     # (N, 128, 128, 3)
    return jnp.transpose(img, (0, 3, 1, 2))                     # -> NCHW


if __name__ == "__main__":
    z_dim, c_dim, dim, batch = 8, 4, 16, 2
    key = jax.random.PRNGKey(0)
    kp, kz, kc = jax.random.split(key, 3)

    params = init_params(kp, z_dim, c_dim, dim)
    z = jax.random.normal(kz, (batch, z_dim), jnp.float32)
    c = jax.nn.one_hot(jax.random.randint(kc, (batch,), 0, c_dim), c_dim,
                       dtype=jnp.float32)

    fwd = jax.jit(functools.partial(generator_forward, params))
    img = fwd(z, c)
    jax.block_until_ready(img)

    assert img.shape == (batch, 3, 128, 128), img.shape
    assert bool(jnp.all(jnp.isfinite(img)))
    assert bool(jnp.all(jnp.abs(img) <= 1.0 + 1e-5))  # tanh range
    print("KERNEL_OK")
</pallas_src>

<mosaic_0001>
module attributes {stable_mosaic.version = 11 : i64} {
  func.func @_mm_bn_stats_kernel(%arg0: i32, %arg1: memref<512x256xbf16, #tpu.memory_space<vmem>>, %arg2: memref<256x128xbf16, #tpu.memory_space<vmem>>, %arg3: memref<512x128xbf16, #tpu.memory_space<vmem>>, %arg4: memref<8x128xf32, #tpu.memory_space<vmem>>, %arg5: memref<8x128xf32, #tpu.memory_space<vmem>>) attributes {dimension_semantics = [#tpu.dimension_semantics<parallel>], iteration_bounds = array<i64: 1>, scalar_prefetch = 0 : i64, scratch_operands = 0 : i64, tpu.core_type = #tpu.core_type<tc>, window_params = [{transform_indices = @transform_0, window_bounds = array<i64: 512, 256>}, {pipeline_mode = #tpu.pipeline_mode<synchronous>, transform_indices = @transform_1, window_bounds = array<i64: 256, 128>}, {transform_indices = @transform_2, window_bounds = array<i64: 512, 128>}, {transform_indices = @transform_3, window_bounds = array<i64: 8, 128>}, {transform_indices = @transform_4, window_bounds = array<i64: 8, 128>}]} {
    %c0 = arith.constant 0 : index
    %c0_0 = arith.constant 0 : index
    %0 = vector.load %arg1[%c0, %c0_0] : memref<512x256xbf16, #tpu.memory_space<vmem>>, vector<512x256xbf16>
    %c0_1 = arith.constant 0 : index
    %c0_2 = arith.constant 0 : index
    %1 = vector.load %arg2[%c0_1, %c0_2] : memref<256x128xbf16, #tpu.memory_space<vmem>>, vector<256x128xbf16>
    %cst = arith.constant dense<0.000000e+00> : vector<512x128xf32>
    %2 = tpu.matmul %0, %1, %cst {dimension_numbers = #tpu.dot_dimension_numbers<[1], [0], [0], [1], [0, 0, 1, 1], [], []>} : vector<512x256xbf16>, vector<256x128xbf16>, vector<512x128xf32> -> vector<512x128xf32>
    %3 = arith.truncf %2 : vector<512x128xf32> to vector<512x128xbf16>
    %c0_3 = arith.constant 0 : index
    %c0_4 = arith.constant 0 : index
    %4 = vector.load %arg3[%c0_3, %c0_4] : memref<512x128xbf16, #tpu.memory_space<vmem>>, vector<512x128xbf16>
    tpu.vector_store %arg3[%c0_3, %c0_4], %3 {strides = array<i32>} : memref<512x128xbf16, #tpu.memory_space<vmem>>, vector<512x128xbf16>,
    %cst_5 = arith.constant dense<0.000000e+00> : vector<128xf32>
    %5 = vector.multi_reduction <add>, %2, %cst_5 [0] : vector<512x128xf32> to vector<128xf32>
    %6 = vector.shape_cast %5 : vector<128xf32> to vector<1x128xf32>
    %7 = arith.mulf %2, %2 : vector<512x128xf32>
    %cst_6 = arith.constant dense<0.000000e+00> : vector<128xf32>
    %8 = vector.multi_reduction <add>, %7, %cst_6 [0] : vector<512x128xf32> to vector<128xf32>
    %9 = vector.shape_cast %8 : vector<128xf32> to vector<1x128xf32>
    %10 = vector.shape_cast %6 : vector<1x128xf32> to vector<1x128xf32>
    %11 = vector.broadcast %10 : vector<1x128xf32> to vector<8x128xf32>
    %c0_7 = arith.constant 0 : index
    %c0_8 = arith.constant 0 : index
    %12 = vector.load %arg4[%c0_7, %c0_8] : memref<8x128xf32, #tpu.memory_space<vmem>>, vector<8x128xf32>
    tpu.vector_store %arg4[%c0_7, %c0_8], %11 {strides = array<i32>} : memref<8x128xf32, #tpu.memory_space<vmem>>, vector<8x128xf32>,
    %13 = vector.shape_cast %9 : vector<1x128xf32> to vector<1x128xf32>
    %14 = vector.broadcast %13 : vector<1x128xf32> to vector<8x128xf32>
    %c0_9 = arith.constant 0 : index
    %c0_10 = arith.constant 0 : index
    %15 = vector.load %arg5[%c0_9, %c0_10] : memref<8x128xf32, #tpu.memory_space<vmem>>, vector<8x128xf32>
    tpu.vector_store %arg5[%c0_9, %c0_10], %14 {strides = array<i32>} : memref<8x128xf32, #tpu.memory_space<vmem>>, vector<8x128xf32>,
    return
  }
  func.func @transform_0(%arg0: i32) -> (i32, i32) {
    %c0_i32 = arith.constant 0 : i32
    %c0_i32_0 = arith.constant 0 : i32
    return %arg0, %c0_i32 : i32, i32
  }
  func.func @transform_1(%arg0: i32) -> (i32, i32) {
    %c0_i32 = arith.constant 0 : i32
    %c0_i32_0 = arith.constant 0 : i32
    %c0_i32_1 = arith.constant 0 : i32
    return %c0_i32, %c0_i32_0 : i32, i32
  }
  func.func @transform_2(%arg0: i32) -> (i32, i32) {
    %c0_i32 = arith.constant 0 : i32
    %c0_i32_0 = arith.constant 0 : i32
    return %arg0, %c0_i32 : i32, i32
  }
  func.func @transform_3(%arg0: i32) -> (i32, i32) {
    %c0_i32 = arith.constant 0 : i32
    %c0_i32_0 = arith.constant 0 : i32
    return %arg0, %c0_i32 : i32, i32
  }
  func.func @transform_4(%arg0: i32) -> (i32, i32) {
    %c0_i32 = arith.constant 0 : i32
    %c0_i32_0 = arith.constant 0 : i32
    return %arg0, %c0_i32 : i32, i32
  }
}

module attributes {stable_mosaic.version = 11 : i64} {
  func.func @_affine_relu_kernel(%arg0: i32, %arg1: memref<512x128xbf16, #tpu.memory_space<vmem>>, %arg2: memref<1x128xf32, #tpu.memory_space<vmem>>, %arg3: memref<1x128xf32, #tpu.memory_space<vmem>>, %arg4: memref<512x128xbf16, #tpu.memory_space<vmem>>) attributes {dimension_semantics = [#tpu.dimension_semantics<parallel>], iteration_bounds = array<i64: 1>, scalar_prefetch = 0 : i64, scratch_operands = 0 : i64, tpu.core_type = #tpu.core_type<tc>, window_params = [{transform_indices = @transform_0, window_bounds = array<i64: 512, 128>}, {pipeline_mode = #tpu.pipeline_mode<synchronous>, transform_indices = @transform_1, window_bounds = array<i64: 1, 128>}, {pipeline_mode = #tpu.pipeline_mode<synchronous>, transform_indices = @transform_2, window_bounds = array<i64: 1, 128>}, {transform_indices = @transform_3, window_bounds = array<i64: 512, 128>}]} {
    %c0 = arith.constant 0 : index
    %c0_0 = arith.constant 0 : index
    %0 = vector.load %arg1[%c0, %c0_0] : memref<512x128xbf16, #tpu.memory_space<vmem>>, vector<512x128xbf16>
    %1 = arith.extf %0 : vector<512x128xbf16> to vector<512x128xf32>
    %c0_1 = arith.constant 0 : index
    %c0_2 = arith.constant 0 : index
    %2 = vector.load %arg2[%c0_1, %c0_2] : memref<1x128xf32, #tpu.memory_space<vmem>>, vector<1x128xf32>
    %3 = vector.broadcast %2 : vector<1x128xf32> to vector<512x128xf32>
    %4 = arith.mulf %1, %3 : vector<512x128xf32>
    %c0_3 = arith.constant 0 : index
    %c0_4 = arith.constant 0 : index
    %5 = vector.load %arg3[%c0_3, %c0_4] : memref<1x128xf32, #tpu.memory_space<vmem>>, vector<1x128xf32>
    %6 = vector.broadcast %5 : vector<1x128xf32> to vector<512x128xf32>
    %7 = arith.addf %4, %6 : vector<512x128xf32>
    %cst = arith.constant 0.000000e+00 : f32
    %8 = vector.broadcast %cst : f32 to vector<512x128xf32>
    %9 = arith.maximumf %7, %8 : vector<512x128xf32>
    %10 = arith.truncf %9 : vector<512x128xf32> to vector<512x128xbf16>
    %c0_5 = arith.constant 0 : index
    %c0_6 = arith.constant 0 : index
    %11 = vector.load %arg4[%c0_5, %c0_6] : memref<512x128xbf16, #tpu.memory_space<vmem>>, vector<512x128xbf16>
    tpu.vector_store %arg4[%c0_5, %c0_6], %10 {strides = array<i32>} : memref<512x128xbf16, #tpu.memory_space<vmem>>, vector<512x128xbf16>,
    return
  }
  func.func @transform_0(%arg0: i32) -> (i32, i32) {
    %c0_i32 = arith.constant 0 : i32
    %c0_i32_0 = arith.constant 0 : i32
    return %arg0, %c0_i32 : i32, i32
  }
  func.func @transform_1(%arg0: i32) -> (i32, i32) {
    %c0_i32 = arith.constant 0 : i32
    %c0_i32_0 = arith.constant 0 : i32
    %c0_i32_1 = arith.constant 0 : i32
    return %c0_i32, %c0_i32_0 : i32, i32
  }
  func.func @transform_2(%arg0: i32) -> (i32, i32) {
    %c0_i32 = arith.constant 0 : i32
    %c0_i32_0 = arith.constant 0 : i32
    %c0_i32_1 = arith.constant 0 : i32
    return %c0_i32, %c0_i32_0 : i32, i32
  }
  func.func @transform_3(%arg0: i32) -> (i32, i32) {
    %c0_i32 = arith.constant 0 : i32
    %c0_i32_0 = arith.constant 0 : i32
    return %arg0, %c0_i32 : i32, i32
  }
}

module attributes {stable_mosaic.version = 11 : i64} {
  func.func @_mm_bn_stats_kernel(%arg0: i32, %arg1: memref<512x256xbf16, #tpu.memory_space<vmem>>, %arg2: memref<256x128xbf16, #tpu.memory_space<vmem>>, %arg3: memref<512x128xbf16, #tpu.memory_space<vmem>>, %arg4: memref<8x128xf32, #tpu.memory_space<vmem>>, %arg5: memref<8x128xf32, #tpu.memory_space<vmem>>) attributes {dimension_semantics = [#tpu.dimension_semantics<parallel>], iteration_bounds = array<i64: 4>, scalar_prefetch = 0 : i64, scratch_operands = 0 : i64, tpu.core_type = #tpu.core_type<tc>, window_params = [{transform_indices = @transform_0, window_bounds = array<i64: 512, 256>}, {pipeline_mode = #tpu.pipeline_mode<synchronous>, transform_indices = @transform_1, window_bounds = array<i64: 256, 128>}, {transform_indices = @transform_2, window_bounds = array<i64: 512, 128>}, {transform_indices = @transform_3, window_bounds = array<i64: 8, 128>}, {transform_indices = @transform_4, window_bounds = array<i64: 8, 128>}]} {
    %c0 = arith.constant 0 : index
    %c0_0 = arith.constant 0 : index
    %0 = vector.load %arg1[%c0, %c0_0] : memref<512x256xbf16, #tpu.memory_space<vmem>>, vector<512x256xbf16>
    %c0_1 = arith.constant 0 : index
    %c0_2 = arith.constant 0 : index
    %1 = vector.load %arg2[%c0_1, %c0_2] : memref<256x128xbf16, #tpu.memory_space<vmem>>, vector<256x128xbf16>
    %cst = arith.constant dense<0.000000e+00> : vector<512x128xf32>
    %2 = tpu.matmul %0, %1, %cst {dimension_numbers = #tpu.dot_dimension_numbers<[1], [0], [0], [1], [0, 0, 1, 1], [], []>} : vector<512x256xbf16>, vector<256x128xbf16>, vector<512x128xf32> -> vector<512x128xf32>
    %3 = arith.truncf %2 : vector<512x128xf32> to vector<512x128xbf16>
    %c0_3 = arith.constant 0 : index
    %c0_4 = arith.constant 0 : index
    %4 = vector.load %arg3[%c0_3, %c0_4] : memref<512x128xbf16, #tpu.memory_space<vmem>>, vector<512x128xbf16>
    tpu.vector_store %arg3[%c0_3, %c0_4], %3 {strides = array<i32>} : memref<512x128xbf16, #tpu.memory_space<vmem>>, vector<512x128xbf16>,
    %cst_5 = arith.constant dense<0.000000e+00> : vector<128xf32>
    %5 = vector.multi_reduction <add>, %2, %cst_5 [0] : vector<512x128xf32> to vector<128xf32>
    %6 = vector.shape_cast %5 : vector<128xf32> to vector<1x128xf32>
    %7 = arith.mulf %2, %2 : vector<512x128xf32>
    %cst_6 = arith.constant dense<0.000000e+00> : vector<128xf32>
    %8 = vector.multi_reduction <add>, %7, %cst_6 [0] : vector<512x128xf32> to vector<128xf32>
    %9 = vector.shape_cast %8 : vector<128xf32> to vector<1x128xf32>
    %10 = vector.shape_cast %6 : vector<1x128xf32> to vector<1x128xf32>
    %11 = vector.broadcast %10 : vector<1x128xf32> to vector<8x128xf32>
    %c0_7 = arith.constant 0 : index
    %c0_8 = arith.constant 0 : index
    %12 = vector.load %arg4[%c0_7, %c0_8] : memref<8x128xf32, #tpu.memory_space<vmem>>, vector<8x128xf32>
    tpu.vector_store %arg4[%c0_7, %c0_8], %11 {strides = array<i32>} : memref<8x128xf32, #tpu.memory_space<vmem>>, vector<8x128xf32>,
    %13 = vector.shape_cast %9 : vector<1x128xf32> to vector<1x128xf32>
    %14 = vector.broadcast %13 : vector<1x128xf32> to vector<8x128xf32>
    %c0_9 = arith.constant 0 : index
    %c0_10 = arith.constant 0 : index
    %15 = vector.load %arg5[%c0_9, %c0_10] : memref<8x128xf32, #tpu.memory_space<vmem>>, vector<8x128xf32>
    tpu.vector_store %arg5[%c0_9, %c0_10], %14 {strides = array<i32>} : memref<8x128xf32, #tpu.memory_space<vmem>>, vector<8x128xf32>,
    return
  }
  func.func @transform_0(%arg0: i32) -> (i32, i32) {
    %c0_i32 = arith.constant 0 : i32
    %c0_i32_0 = arith.constant 0 : i32
    return %arg0, %c0_i32 : i32, i32
  }
  func.func @transform_1(%arg0: i32) -> (i32, i32) {
    %c0_i32 = arith.constant 0 : i32
    %c0_i32_0 = arith.constant 0 : i32
    %c0_i32_1 = arith.constant 0 : i32
    return %c0_i32, %c0_i32_0 : i32, i32
  }
  func.func @transform_2(%arg0: i32) -> (i32, i32) {
    %c0_i32 = arith.constant 0 : i32
    %c0_i32_0 = arith.constant 0 : i32
    return %arg0, %c0_i32 : i32, i32
  }
  func.func @transform_3(%arg0: i32) -> (i32, i32) {
    %c0_i32 = arith.constant 0 : i32
    %c0_i32_0 = arith.constant 0 : i32
    return %arg0, %c0_i32 : i32, i32
  }
  func.func @transform_4(%arg0: i32) -> (i32, i32) {
    %c0_i32 = arith.constant 0 : i32
    %c0_i32_0 = arith.constant 0 : i32
    return %arg0, %c0_i32 : i32, i32
  }
}

module attributes {stable_mosaic.version = 11 : i64} {
  func.func @_affine_relu_kernel(%arg0: i32, %arg1: memref<1024x128xbf16, #tpu.memory_space<vmem>>, %arg2: memref<1x128xf32, #tpu.memory_space<vmem>>, %arg3: memref<1x128xf32, #tpu.memory_space<vmem>>, %arg4: memref<1024x128xbf16, #tpu.memory_space<vmem>>) attributes {dimension_semantics = [#tpu.dimension_semantics<parallel>], iteration_bounds = array<i64: 2>, scalar_prefetch = 0 : i64, scratch_operands = 0 : i64, tpu.core_type = #tpu.core_type<tc>, window_params = [{transform_indices = @transform_0, window_bounds = array<i64: 1024, 128>}, {pipeline_mode = #tpu.pipeline_mode<synchronous>, transform_indices = @transform_1, window_bounds = array<i64: 1, 128>}, {pipeline_mode = #tpu.pipeline_mode<synchronous>, transform_indices = @transform_2, window_bounds = array<i64: 1, 128>}, {transform_indices = @transform_3, window_bounds = array<i64: 1024, 128>}]} {
    %c0 = arith.constant 0 : index
    %c0_0 = arith.constant 0 : index
    %0 = vector.load %arg1[%c0, %c0_0] : memref<1024x128xbf16, #tpu.memory_space<vmem>>, vector<1024x128xbf16>
    %1 = arith.extf %0 : vector<1024x128xbf16> to vector<1024x128xf32>
    %c0_1 = arith.constant 0 : index
    %c0_2 = arith.constant 0 : index
    %2 = vector.load %arg2[%c0_1, %c0_2] : memref<1x128xf32, #tpu.memory_space<vmem>>, vector<1x128xf32>
    %3 = vector.broadcast %2 : vector<1x128xf32> to vector<1024x128xf32>
    %4 = arith.mulf %1, %3 : vector<1024x128xf32>
    %c0_3 = arith.constant 0 : index
    %c0_4 = arith.constant 0 : index
    %5 = vector.load %arg3[%c0_3, %c0_4] : memref<1x128xf32, #tpu.memory_space<vmem>>, vector<1x128xf32>
    %6 = vector.broadcast %5 : vector<1x128xf32> to vector<1024x128xf32>
    %7 = arith.addf %4, %6 : vector<1024x128xf32>
    %cst = arith.constant 0.000000e+00 : f32
    %8 = vector.broadcast %cst : f32 to vector<1024x128xf32>
    %9 = arith.maximumf %7, %8 : vector<1024x128xf32>
    %10 = arith.truncf %9 : vector<1024x128xf32> to vector<1024x128xbf16>
    %c0_5 = arith.constant 0 : index
    %c0_6 = arith.constant 0 : index
    %11 = vector.load %arg4[%c0_5, %c0_6] : memref<1024x128xbf16, #tpu.memory_space<vmem>>, vector<1024x128xbf16>
    tpu.vector_store %arg4[%c0_5, %c0_6], %10 {strides = array<i32>} : memref<1024x128xbf16, #tpu.memory_space<vmem>>, vector<1024x128xbf16>,
    return
  }
  func.func @transform_0(%arg0: i32) -> (i32, i32) {
    %c0_i32 = arith.constant 0 : i32
    %c0_i32_0 = arith.constant 0 : i32
    return %arg0, %c0_i32 : i32, i32
  }
  func.func @transform_1(%arg0: i32) -> (i32, i32) {
    %c0_i32 = arith.constant 0 : i32
    %c0_i32_0 = arith.constant 0 : i32
    %c0_i32_1 = arith.constant 0 : i32
    return %c0_i32, %c0_i32_0 : i32, i32
  }
  func.func @transform_2(%arg0: i32) -> (i32, i32) {
    %c0_i32 = arith.constant 0 : i32
    %c0_i32_0 = arith.constant 0 : i32
    %c0_i32_1 = arith.constant 0 : i32
    return %c0_i32, %c0_i32_0 : i32, i32
  }
  func.func @transform_3(%arg0: i32) -> (i32, i32) {
    %c0_i32 = arith.constant 0 : i32
    %c0_i32_0 = arith.constant 0 : i32
    return %arg0, %c0_i32 : i32, i32
  }
}

module attributes {stable_mosaic.version = 11 : i64} {
  func.func @_mm_bias_tanh_kernel(%arg0: i32, %arg1: memref<512x256xbf16, #tpu.memory_space<vmem>>, %arg2: memref<256x128xbf16, #tpu.memory_space<vmem>>, %arg3: memref<1x128xf32, #tpu.memory_space<vmem>>, %arg4: memref<512x128xf32, #tpu.memory_space<vmem>>) attributes {dimension_semantics = [#tpu.dimension_semantics<parallel>], iteration_bounds = array<i64: 16>, scalar_prefetch = 0 : i64, scratch_operands = 0 : i64, tpu.core_type = #tpu.core_type<tc>, window_params = [{transform_indices = @transform_0, window_bounds = array<i64: 512, 256>}, {pipeline_mode = #tpu.pipeline_mode<synchronous>, transform_indices = @transform_1, window_bounds = array<i64: 256, 128>}, {pipeline_mode = #tpu.pipeline_mode<synchronous>, transform_indices = @transform_2, window_bounds = array<i64: 1, 128>}, {transform_indices = @transform_3, window_bounds = array<i64: 512, 128>}]} {
    %c0 = arith.constant 0 : index
    %c0_0 = arith.constant 0 : index
    %0 = vector.load %arg1[%c0, %c0_0] : memref<512x256xbf16, #tpu.memory_space<vmem>>, vector<512x256xbf16>
    %c0_1 = arith.constant 0 : index
    %c0_2 = arith.constant 0 : index
    %1 = vector.load %arg2[%c0_1, %c0_2] : memref<256x128xbf16, #tpu.memory_space<vmem>>, vector<256x128xbf16>
    %cst = arith.constant dense<0.000000e+00> : vector<512x128xf32>
    %2 = tpu.matmul %0, %1, %cst {dimension_numbers = #tpu.dot_dimension_numbers<[1], [0], [0], [1], [0, 0, 1, 1], [], []>} : vector<512x256xbf16>, vector<256x128xbf16>, vector<512x128xf32> -> vector<512x128xf32>
    %c0_3 = arith.constant 0 : index
    %c0_4 = arith.constant 0 : index
    %3 = vector.load %arg3[%c0_3, %c0_4] : memref<1x128xf32, #tpu.memory_space<vmem>>, vector<1x128xf32>
    %4 = vector.broadcast %3 : vector<1x128xf32> to vector<512x128xf32>
    %5 = arith.addf %2, %4 : vector<512x128xf32>
    %6 = math.tanh %5 : vector<512x128xf32>
    %c0_5 = arith.constant 0 : index
    %c0_6 = arith.constant 0 : index
    %7 = vector.load %arg4[%c0_5, %c0_6] : memref<512x128xf32, #tpu.memory_space<vmem>>, vector<512x128xf32>
    tpu.vector_store %arg4[%c0_5, %c0_6], %6 {strides = array<i32>} : memref<512x128xf32, #tpu.memory_space<vmem>>, vector<512x128xf32>,
    return
  }
  func.func @transform_0(%arg0: i32) -> (i32, i32) {
    %c0_i32 = arith.constant 0 : i32
    %c0_i32_0 = arith.constant 0 : i32
    return %arg0, %c0_i32 : i32, i32
  }
  func.func @transform_1(%arg0: i32) -> (i32, i32) {
    %c0_i32 = arith.constant 0 : i32
    %c0_i32_0 = arith.constant 0 : i32
    %c0_i32_1 = arith.constant 0 : i32
    return %c0_i32, %c0_i32_0 : i32, i32
  }
  func.func @transform_2(%arg0: i32) -> (i32, i32) {
    %c0_i32 = arith.constant 0 : i32
    %c0_i32_0 = arith.constant 0 : i32
    %c0_i32_1 = arith.constant 0 : i32
    return %c0_i32, %c0_i32_0 : i32, i32
  }
  func.func @transform_3(%arg0: i32) -> (i32, i32) {
    %c0_i32 = arith.constant 0 : i32
    %c0_i32_0 = arith.constant 0 : i32
    return %arg0, %c0_i32 : i32, i32
  }
}

</mosaic_0001>

<llo_original>
// kernel: tile.32
$region0: #{tile.32}
  #allocation0 [shape = 's32[1]{0}', space=sflag, size = 0x4, scoped, tag = 'scoped memory for tile.32']
  %s0 = inlined_call_operand.vmem [shape: f32[16], index: 0, kind: input, shape index: {}]
  %s1 = inlined_call_operand.vmem [shape: f32[4,16], index: 1, kind: output, shape index: {}]
  // Predicated region
  $region2: #{tile.32} parent=0 // pred_check
    _
  $region3: #{tile.32} parent=0 // pred_check_branch
    %3 = sbr.rel (0) target = $region5
  $region4: #{tile.32} parent=0 // pred_region
    _
  $region5: #{tile.32} parent=0 // pred_fallthru
    _
  %v4 = vld [vmem:[%s0] ss:$0 sm:$0xff]
  %5 = vst [vmem:[%s1] sm:$0xf] %v4

// kernel: tile.33
$region0: #{tile.33}
  %s0 = inlined_call_operand.vmem [shape: f32[4,16], index: 0, kind: input, shape index: {}]
  %s1 = inlined_call_operand.vmem [shape: f32[64], index: 1, kind: output, shape index: {}]
  $region1: #{tile.33} parent=0
    #allocation0 [shape = 'u8[4096]{0}', space=vmem, size = 0x1000, scoped, tag = 'scoped mem for output reshape']
    #allocation1 [shape = 'u8[4096]{0}', space=vmem, size = 0x1000, scoped, tag = 'scoped mem for input reshape']
    %s3 = sshll.u32 1, 4
    %s4 = ssub.s32 %s3, 1
    %v5 = vld [vmem:[%s0] sm:%s4]
    %6 = vst [vmem:[#allocation1] sm:%s4] %v5
    %v7 = vld [vmem:[#allocation1] sm:$0x1]
    %vm8 = vcmask 130048
    %9 = vst.msk [vmem:[#allocation0] sm:$0x1] %vm8, %v7
    %s10 = scalar_lea.vmem [#allocation1], 3
    %v11 = vld [vmem:[%s10] sm:$0x1]
    %12 = vrot.lane.b32.xlu0 %v11, 48
    %v13 = vpop.permute.xlu0 %12
    %vm14 = vcmask 523648
    %15 = vst.msk [vmem:[#allocation0] sm:$0x1] %vm14, %v13
    %s16 = scalar_lea.vmem [#allocation1], 2
    %v17 = vld [vmem:[%s16] sm:$0x1]
    %18 = vrot.lane.b32.xlu0 %v17, 32
    %v19 = vpop.permute.xlu0 %18
    %vm20 = vcmask 392448
    %21 = vst.msk [vmem:[#allocation0] sm:$0x1] %vm20, %v19
    %s22 = scalar_lea.vmem [#allocation1], 1
    %v23 = vld [vmem:[%s22] sm:$0x1]
    %24 = vrot.lane.b32.xlu0 %v23, 16
    %v25 = vpop.permute.xlu0 %24
    %vm26 = vcmask 261248
    %27 = vst.msk [vmem:[#allocation0] sm:$0x1] %vm26, %v25
    %s29 = sshll.u32 1, 1
    %s30 = ssub.s32 %s29, 1
    %v32 = vld [vmem:[#allocation0] sm:%s30]
    %s33 = sshll.u32 1, 1
    %s34 = ssub.s32 %s33, 1
    %35 = vst [vmem:[%s1] sm:%s34] %v32

// kernel: generator_forward.5
$region0: #{generator_forward.5}
  #allocation0 [shape = 'u32[]', space=smem, size = 0x4, offset = 0x4, fixed_abs, tag = 'smem constant byte address 0x4 - core index']
  #allocation1 [shape = 'u32[144,128]{1,0:T(1,128)}', space=vmem, size = 0x12000, scoped, tag = 'internal scratch']
  %s0 = inlined_call_operand.vmem [shape: bf16[512,256], index: 0, kind: input, shape index: {}]
  %s1 = inlined_call_operand.vmem [shape: bf16[256,128], index: 1, kind: input, shape index: {}]
  %s2 = inlined_call_operand.vmem [shape: bf16[512,128], index: 2, kind: output, shape index: {0}]
  %s3 = inlined_call_operand.vmem [shape: f32[8,128], index: 3, kind: output, shape index: {1}]
  %s4 = inlined_call_operand.vmem [shape: f32[8,128], index: 4, kind: output, shape index: {2}]
  %5 = xla_tuple %s2, %s3, %s4
  %s6 = sld [smem:[#allocation0]]
  $region34: #{generator_forward.5} parent=0
    _
  %s8 = ssub.s32 1, %s6
  %s9 = scalar_select 0, %s8, %s6
  // Predicated region
  $region2: #{generator_forward.5} parent=0 // pred_check
    _
  $region3: #{generator_forward.5} parent=0 // pred_check_branch
    %11 = sbr.rel (0) target = $region5
  $region4: #{generator_forward.5} parent=0 // pred_region
    _
  $region5: #{generator_forward.5} parent=0 // pred_fallthru
    _
  // Predicated region
  $region6: #{generator_forward.5} parent=0 // pred_check
    _
  $region7: #{generator_forward.5} parent=0 // pred_check_branch
    %13 = sbr.rel (0) target = $region9
  $region8: #{generator_forward.5} parent=0 // pred_region
    _
  $region9: #{generator_forward.5} parent=0 // pred_fallthru
    _
  %v15 = vld [vmem:[%s0] sm:$0xff]
  %v16 = vld [vmem:[%s0 + $0x8] sm:$0xff]
  %v17 = vld [vmem:[%s0 + $0x10] sm:$0xff]
  %v18 = vld [vmem:[%s0 + $0x18] sm:$0xff]
  %v19 = vld [vmem:[%s0 + $0x20] sm:$0xff]
  %v20 = vld [vmem:[%s0 + $0x28] sm:$0xff]
  %v21 = vld [vmem:[%s0 + $0x30] sm:$0xff]
  %v22 = vld [vmem:[%s0 + $0x38] sm:$0xff]
  %v23 = vld [vmem:[%s0 + $0x40] sm:$0xff]
  %v24 = vld [vmem:[%s0 + $0x48] sm:$0xff]
  %v25 = vld [vmem:[%s0 + $0x50] sm:$0xff]
  %v26 = vld [vmem:[%s0 + $0x58] sm:$0xff]
  %v27 = vld [vmem:[%s0 + $0x60] sm:$0xff]
  %v28 = vld [vmem:[%s0 + $0x68] sm:$0xff]
  %v29 = vld [vmem:[%s0 + $0x70] sm:$0xff]
  %v30 = vld [vmem:[%s0 + $0x78] sm:$0xff]
  %v31 = vld [vmem:[%s0 + $0x80] sm:$0xff]
  %v32 = vld [vmem:[%s0 + $0x88] sm:$0xff]
  %v33 = vld [vmem:[%s0 + $0x90] sm:$0xff]
  %v34 = vld [vmem:[%s0 + $0x98] sm:$0xff]
  %v35 = vld [vmem:[%s0 + $0xa0] sm:$0xff]
  %v36 = vld [vmem:[%s0 + $0xa8] sm:$0xff]
  %v37 = vld [vmem:[%s0 + $0xb0] sm:$0xff]
  %v38 = vld [vmem:[%s0 + $0xb8] sm:$0xff]
  %v39 = vld [vmem:[%s0 + $0xc0] sm:$0xff]
  %v40 = vld [vmem:[%s0 + $0xc8] sm:$0xff]
  %v41 = vld [vmem:[%s0 + $0xd0] sm:$0xff]
  %v42 = vld [vmem:[%s0 + $0xd8] sm:$0xff]
  %v43 = vld [vmem:[%s0 + $0xe0] sm:$0xff]
  %v44 = vld [vmem:[%s0 + $0xe8] sm:$0xff]
  %v45 = vld [vmem:[%s0 + $0xf0] sm:$0xff]
  %v46 = vld [vmem:[%s0 + $0xf8] sm:$0xff]
  %v47 = vld [vmem:[%s0 + $0x100] sm:$0xff]
  %v48 = vld [vmem:[%s0 + $0x108] sm:$0xff]
  %v49 = vld [vmem:[%s0 + $0x110] sm:$0xff]
  %v50 = vld [vmem:[%s0 + $0x118] sm:$0xff]
  %v51 = vld [vmem:[%s0 + $0x120] sm:$0xff]
  %v52 = vld [vmem:[%s0 + $0x128] sm:$0xff]
  %v53 = vld [vmem:[%s0 + $0x130] sm:$0xff]
  %v54 = vld [vmem:[%s0 + $0x138] sm:$0xff]
  %v55 = vld [vmem:[%s0 + $0x140] sm:$0xff]
  %v56 = vld [vmem:[%s0 + $0x148] sm:$0xff]
  %v57 = vld [vmem:[%s0 + $0x150] sm:$0xff]
  %v58 = vld [vmem:[%s0 + $0x158] sm:$0xff]
  %v59 = vld [vmem:[%s0 + $0x160] sm:$0xff]
  %v60 = vld [vmem:[%s0 + $0x168] sm:$0xff]
  %v61 = vld [vmem:[%s0 + $0x170] sm:$0xff]
  %v62 = vld [vmem:[%s0 + $0x178] sm:$0xff]
  %v63 = vld [vmem:[%s0 + $0x180] sm:$0xff]
  %v64 = vld [vmem:[%s0 + $0x188] sm:$0xff]
  %v65 = vld [vmem:[%s0 + $0x190] sm:$0xff]
  %v66 = vld [vmem:[%s0 + $0x198] sm:$0xff]
  %v67 = vld [vmem:[%s0 + $0x1a0] sm:$0xff]
  %v68 = vld [vmem:[%s0 + $0x1a8] sm:$0xff]
  %v69 = vld [vmem:[%s0 + $0x1b0] sm:$0xff]
  %v70 = vld [vmem:[%s0 + $0x1b8] sm:$0xff]
  %v71 = vld [vmem:[%s0 + $0x1c0] sm:$0xff]
  %v72 = vld [vmem:[%s0 + $0x1c8] sm:$0xff]
  %v73 = vld [vmem:[%s0 + $0x1d0] sm:$0xff]
  %v74 = vld [vmem:[%s0 + $0x1d8] sm:$0xff]
  %v75 = vld [vmem:[%s0 + $0x1e0] sm:$0xff]
  %v76 = vld [vmem:[%s0 + $0x1e8] sm:$0xff]
  %v77 = vld [vmem:[%s0 + $0x1f0] sm:$0xff]
  %v78 = vld [vmem:[%s0 + $0x1f8] sm:$0xff]
  %v79 = vld [vmem:[%s1] sm:$0xf]
  %v80 = vld [vmem:[%s1 + $0x4] sm:$0xf]
  %v81 = vld [vmem:[%s1 + $0x8] sm:$0xf]
  %v82 = vld [vmem:[%s1 + $0xc] sm:$0xf]
  %v83 = vld [vmem:[%s1 + $0x10] sm:$0xf]
  %v84 = vld [vmem:[%s1 + $0x14] sm:$0xf]
  %v85 = vld [vmem:[%s1 + $0x18] sm:$0xf]
  %v86 = vld [vmem:[%s1 + $0x1c] sm:$0xf]
  %v87 = vld [vmem:[%s1 + $0x20] sm:$0xf]
  %v88 = vld [vmem:[%s1 + $0x24] sm:$0xf]
  %v89 = vld [vmem:[%s1 + $0x28] sm:$0xf]
  %v90 = vld [vmem:[%s1 + $0x2c] sm:$0xf]
  %v91 = vld [vmem:[%s1 + $0x30] sm:$0xf]
  %v92 = vld [vmem:[%s1 + $0x34] sm:$0xf]
  %v93 = vld [vmem:[%s1 + $0x38] sm:$0xf]
  %v94 = vld [vmem:[%s1 + $0x3c] sm:$0xf]
  %v95 = vld [vmem:[%s1 + $0x40] sm:$0xf]
  %v96 = vld [vmem:[%s1 + $0x44] sm:$0xf]
  %v97 = vld [vmem:[%s1 + $0x48] sm:$0xf]
  %v98 = vld [vmem:[%s1 + $0x4c] sm:$0xf]
  %v99 = vld [vmem:[%s1 + $0x50] sm:$0xf]
  %v100 = vld [vmem:[%s1 + $0x54] sm:$0xf]
  %v101 = vld [vmem:[%s1 + $0x58] sm:$0xf]
  %v102 = vld [vmem:[%s1 + $0x5c] sm:$0xf]
  %v103 = vld [vmem:[%s1 + $0x60] sm:$0xf]
  %v104 = vld [vmem:[%s1 + $0x64] sm:$0xf]
  %v105 = vld [vmem:[%s1 + $0x68] sm:$0xf]
  %v106 = vld [vmem:[%s1 + $0x6c] sm:$0xf]
  %v107 = vld [vmem:[%s1 + $0x70] sm:$0xf]
  %v108 = vld [vmem:[%s1 + $0x74] sm:$0xf]
  %v109 = vld [vmem:[%s1 + $0x78] sm:$0xf]
  %v110 = vld [vmem:[%s1 + $0x7c] sm:$0xf]
  %v175 = vunpack.c.l.b16 %v15
  %v176 = vunpack.c.h.b16 %v15
  %v177 = vunpack.c.l.b16 %v16
  %v178 = vunpack.c.h.b16 %v16
  %v179 = vunpack.c.l.b16 %v17
  %v180 = vunpack.c.h.b16 %v17
  %v181 = vunpack.c.l.b16 %v18
  %v182 = vunpack.c.h.b16 %v18
  %v183 = vunpack.c.l.b16 %v19
  %v184 = vunpack.c.h.b16 %v19
  %v185 = vunpack.c.l.b16 %v20
  %v186 = vunpack.c.h.b16 %v20
  %v187 = vunpack.c.l.b16 %v21
  %v188 = vunpack.c.h.b16 %v21
  %v189 = vunpack.c.l.b16 %v22
  %v190 = vunpack.c.h.b16 %v22
  %v191 = vunpack.c.l.b16 %v23
  %v192 = vunpack.c.h.b16 %v23
  %v193 = vunpack.c.l.b16 %v24
  %v194 = vunpack.c.h.b16 %v24
  %v195 = vunpack.c.l.b16 %v25
  %v196 = vunpack.c.h.b16 %v25
  %v197 = vunpack.c.l.b16 %v26
  %v198 = vunpack.c.h.b16 %v26
  %v199 = vunpack.c.l.b16 %v27
  %v200 = vunpack.c.h.b16 %v27
  %v201 = vunpack.c.l.b16 %v28
  %v202 = vunpack.c.h.b16 %v28
  %v203 = vunpack.c.l.b16 %v29
  %v204 = vunpack.c.h.b16 %v29
  %v205 = vunpack.c.l.b16 %v30
  %v206 = vunpack.c.h.b16 %v30
  %v207 = vunpack.c.l.b16 %v31
  %v208 = vunpack.c.h.b16 %v31
  %v209 = vunpack.c.l.b16 %v32
  %v210 = vunpack.c.h.b16 %v32
  %v211 = vunpack.c.l.b16 %v33
  %v212 = vunpack.c.h.b16 %v33
  %v213 = vunpack.c.l.b16 %v34
  %v214 = vunpack.c.h.b16 %v34
  %v215 = vunpack.c.l.b16 %v35
  %v216 = vunpack.c.h.b16 %v35
  %v217 = vunpack.c.l.b16 %v36
  %v218 = vunpack.c.h.b16 %v36
  %v219 = vunpack.c.l.b16 %v37
  %v220 = vunpack.c.h.b16 %v37
  %v221 = vunpack.c.l.b16 %v38
  %v222 = vunpack.c.h.b16 %v38
  %v223 = vunpack.c.l.b16 %v39
  %v224 = vunpack.c.h.b16 %v39
  %v225 = vunpack.c.l.b16 %v40
  %v226 = vunpack.c.h.b16 %v40
  %v227 = vunpack.c.l.b16 %v41
  %v228 = vunpack.c.h.b16 %v41
  %v229 = vunpack.c.l.b16 %v42
  %v230 = vunpack.c.h.b16 %v42
  %v231 = vunpack.c.l.b16 %v43
  %v232 = vunpack.c.h.b16 %v43
  %v233 = vunpack.c.l.b16 %v44
  %v234 = vunpack.c.h.b16 %v44
  %v235 = vunpack.c.l.b16 %v45
  %v236 = vunpack.c.h.b16 %v45
  %v237 = vunpack.c.l.b16 %v46
  %v238 = vunpack.c.h.b16 %v46
  %v239 = vunpack.c.l.b16 %v47
  %v240 = vunpack.c.h.b16 %v47
  %v241 = vunpack.c.l.b16 %v48
  %v242 = vunpack.c.h.b16 %v48
  %v243 = vunpack.c.l.b16 %v49
  %v244 = vunpack.c.h.b16 %v49
  %v245 = vunpack.c.l.b16 %v50
  %v246 = vunpack.c.h.b16 %v50
  %v247 = vunpack.c.l.b16 %v51
  %v248 = vunpack.c.h.b16 %v51
  %v249 = vunpack.c.l.b16 %v52
  %v250 = vunpack.c.h.b16 %v52
  %v251 = vunpack.c.l.b16 %v53
  %v252 = vunpack.c.h.b16 %v53
  %v253 = vunpack.c.l.b16 %v54
  %v254 = vunpack.c.h.b16 %v54
  %v255 = vunpack.c.l.b16 %v55
  %v256 = vunpack.c.h.b16 %v55
  %v257 = vunpack.c.l.b16 %v56
  %v258 = vunpack.c.h.b16 %v56
  %v259 = vunpack.c.l.b16 %v57
  %v260 = vunpack.c.h.b16 %v57
  %v261 = vunpack.c.l.b16 %v58
  %v262 = vunpack.c.h.b16 %v58
  %v263 = vunpack.c.l.b16 %v59
  %v264 = vunpack.c.h.b16 %v59
  %v265 = vunpack.c.l.b16 %v60
  %v266 = vunpack.c.h.b16 %v60
  %v267 = vunpack.c.l.b16 %v61
  %v268 = vunpack.c.h.b16 %v61
  %v269 = vunpack.c.l.b16 %v62
  %v270 = vunpack.c.h.b16 %v62
  %v271 = vunpack.c.l.b16 %v63
  %v272 = vunpack.c.h.b16 %v63
  %v273 = vunpack.c.l.b16 %v64
  %v274 = vunpack.c.h.b16 %v64
  %v275 = vunpack.c.l.b16 %v65
  %v276 = vunpack.c.h.b16 %v65
  %v277 = vunpack.c.l.b16 %v66
  %v278 = vunpack.c.h.b16 %v66
  %v279 = vunpack.c.l.b16 %v67
  %v280 = vunpack.c.h.b16 %v67
  %v281 = vunpack.c.l.b16 %v68
  %v282 = vunpack.c.h.b16 %v68
  %v283 = vunpack.c.l.b16 %v69
  %v284 = vunpack.c.h.b16 %v69
  %v285 = vunpack.c.l.b16 %v70
  %v286 = vunpack.c.h.b16 %v70
  %v287 = vunpack.c.l.b16 %v71
  %v288 = vunpack.c.h.b16 %v71
  %v289 = vunpack.c.l.b16 %v72
  %v290 = vunpack.c.h.b16 %v72
  %v291 = vunpack.c.l.b16 %v73
  %v292 = vunpack.c.h.b16 %v73
  %v293 = vunpack.c.l.b16 %v74
  %v294 = vunpack.c.h.b16 %v74
  %v295 = vunpack.c.l.b16 %v75
  %v296 = vunpack.c.h.b16 %v75
  %v297 = vunpack.c.l.b16 %v76
  %v298 = vunpack.c.h.b16 %v76
  %v299 = vunpack.c.l.b16 %v77
  %v300 = vunpack.c.h.b16 %v77
  %v301 = vunpack.c.l.b16 %v78
  %v302 = vunpack.c.h.b16 %v78
  %v303 = vpack.c.b16 %v177, %v175
  %v304 = vpack.c.b16 %v178, %v176
  %v305 = vpack.c.b16 %v181, %v179
  %v306 = vpack.c.b16 %v182, %v180
  %v307 = vpack.c.b16 %v185, %v183
  %v308 = vpack.c.b16 %v186, %v184
  %v309 = vpack.c.b16 %v189, %v187
  %v310 = vpack.c.b16 %v190, %v188
  %v311 = vpack.c.b16 %v193, %v191
  %v312 = vpack.c.b16 %v194, %v192
  %v313 = vpack.c.b16 %v197, %v195
  %v314 = vpack.c.b16 %v198, %v196
  %v315 = vpack.c.b16 %v201, %v199
  %v316 = vpack.c.b16 %v202, %v200
  %v317 = vpack.c.b16 %v205, %v203
  %v318 = vpack.c.b16 %v206, %v204
  %v319 = vpack.c.b16 %v209, %v207
  %v320 = vpack.c.b16 %v210, %v208
  %v321 = vpack.c.b16 %v213, %v211
  %v322 = vpack.c.b16 %v214, %v212
  %v323 = vpack.c.b16 %v217, %v215
  %v324 = vpack.c.b16 %v218, %v216
  %v325 = vpack.c.b16 %v221, %v219
  %v326 = vpack.c.b16 %v222, %v220
  %v327 = vpack.c.b16 %v225, %v223
  %v328 = vpack.c.b16 %v226, %v224
  %v329 = vpack.c.b16 %v229, %v227
  %v330 = vpack.c.b16 %v230, %v228
  %v331 = vpack.c.b16 %v233, %v231
  %v332 = vpack.c.b16 %v234, %v232
  %v333 = vpack.c.b16 %v237, %v235
  %v334 = vpack.c.b16 %v238, %v236
  %v335 = vpack.c.b16 %v241, %v239
  %v336 = vpack.c.b16 %v242, %v240
  %v337 = vpack.c.b16 %v245, %v243
  %v338 = vpack.c.b16 %v246, %v244
  %v339 = vpack.c.b16 %v249, %v247
  %v340 = vpack.c.b16 %v250, %v248
  %v341 = vpack.c.b16 %v253, %v251
  %v342 = vpack.c.b16 %v254, %v252
  %v343 = vpack.c.b16 %v257, %v255
  %v344 = vpack.c.b16 %v258, %v256
  %v345 = vpack.c.b16 %v261, %v259
  %v346 = vpack.c.b16 %v262, %v260
  %v347 = vpack.c.b16 %v265, %v263
  %v348 = vpack.c.b16 %v266, %v264
  %v349 = vpack.c.b16 %v269, %v267
  %v350 = vpack.c.b16 %v270, %v268
  %v351 = vpack.c.b16 %v273, %v271
  %v352 = vpack.c.b16 %v274, %v272
  %v353 = vpack.c.b16 %v277, %v275
  %v354 = vpack.c.b16 %v278, %v276
  %v355 = vpack.c.b16 %v281, %v279
  %v356 = vpack.c.b16 %v282, %v280
  %v357 = vpack.c.b16 %v285, %v283
  %v358 = vpack.c.b16 %v286, %v284
  %v359 = vpack.c.b16 %v289, %v287
  %v360 = vpack.c.b16 %v290, %v288
  %v361 = vpack.c.b16 %v293, %v291
  %v362 = vpack.c.b16 %v294, %v292
  %v363 = vpack.c.b16 %v297, %v295
  %v364 = vpack.c.b16 %v298, %v296
  %v365 = vpack.c.b16 %v301, %v299
  %v366 = vpack.c.b16 %v302, %v300
  %v463 = vunpack.c.l.b16 %v79
  %v464 = vunpack.c.l.b16 %v80
  %v465 = vunpack.c.l.b16 %v81
  %v466 = vunpack.c.l.b16 %v82
  %v467 = vunpack.c.l.b16 %v83
  %v468 = vunpack.c.l.b16 %v84
  %v469 = vunpack.c.l.b16 %v85
  %v470 = vunpack.c.l.b16 %v86
  %v471 = vunpack.c.l.b16 %v87
  %v472 = vunpack.c.l.b16 %v88
  %v473 = vunpack.c.l.b16 %v89
  %v474 = vunpack.c.l.b16 %v90
  %v475 = vunpack.c.l.b16 %v91
  %v476 = vunpack.c.l.b16 %v92
  %v477 = vunpack.c.l.b16 %v93
  %v478 = vunpack.c.l.b16 %v94
  %v479 = vunpack.c.l.b16 %v95
  %v480 = vunpack.c.l.b16 %v96
  %v481 = vunpack.c.l.b16 %v97
  %v482 = vunpack.c.l.b16 %v98
  %v483 = vunpack.c.l.b16 %v99
  %v484 = vunpack.c.l.b16 %v100
  %v485 = vunpack.c.l.b16 %v101
  %v486 = vunpack.c.l.b16 %v102
  %v487 = vunpack.c.l.b16 %v103
  %v488 = vunpack.c.l.b16 %v104
  %v489 = vunpack.c.l.b16 %v105
  %v490 = vunpack.c.l.b16 %v106
  %v491 = vunpack.c.l.b16 %v107
  %v492 = vunpack.c.l.b16 %v108
  %v493 = vunpack.c.l.b16 %v109
  %v494 = vunpack.c.l.b16 %v110
  %v495 = vpack.c.b16 %v464, %v463
  %v496 = vpack.c.b16 %v466, %v465
  %v497 = vpack.c.b16 %v468, %v467
  %v498 = vpack.c.b16 %v470, %v469
  %v499 = vpack.c.b16 %v472, %v471
  %v500 = vpack.c.b16 %v474, %v473
  %v501 = vpack.c.b16 %v476, %v475
  %v502 = vpack.c.b16 %v478, %v477
  %v503 = vpack.c.b16 %v480, %v479
  %v504 = vpack.c.b16 %v482, %v481
  %v505 = vpack.c.b16 %v484, %v483
  %v506 = vpack.c.b16 %v486, %v485
  %v507 = vpack.c.b16 %v488, %v487
  %v508 = vpack.c.b16 %v490, %v489
  %v509 = vpack.c.b16 %v492, %v491
  %v510 = vpack.c.b16 %v494, %v493
  %527 = vmatprep.subr.bf16.mxu0 0
  %528 = vmatpush1.bf16.msra.mxu0 %v502
  %529 = vmatprep.subr.bf16.mxu0 0
  %530 = vmatpush1.bf16.msra.mxu0 %v501
  %531 = vmatprep.subr.bf16.mxu0 0
  %532 = vmatpush1.bf16.msra.mxu0 %v500
  %533 = vmatprep.subr.bf16.mxu0 0
  %534 = vmatpush1.bf16.msra.mxu0 %v499
  %535 = vmatprep.subr.bf16.mxu0 0
  %536 = vmatpush1.bf16.msra.mxu0 %v498
  %537 = vmatprep.subr.bf16.mxu0 0
  %538 = vmatpush1.bf16.msra.mxu0 %v497
  %539 = vmatprep.subr.bf16.mxu0 0
  %540 = vmatpush1.bf16.msra.mxu0 %v496
  %541 = vmatprep.subr.bf16.mxu0 0
  %542 = vmatpush1.bf16.msra.mxu0 %v495
  %543 = vmatprep.subr.bf16.mxu0 0
  %544 = vmatpush2.bf16.msra.mxu0 %v510
  %545 = vmatprep.subr.bf16.mxu0 0
  %546 = vmatpush2.bf16.msra.mxu0 %v509
  %547 = vmatprep.subr.bf16.mxu0 0
  %548 = vmatpush2.bf16.msra.mxu0 %v508
  %549 = vmatprep.subr.bf16.mxu0 0
  %550 = vmatpush2.bf16.msra.mxu0 %v507
  %551 = vmatprep.subr.bf16.mxu0 0
  %552 = vmatpush2.bf16.msra.mxu0 %v506
  %553 = vmatprep.subr.bf16.mxu0 0
  %554 = vmatpush2.bf16.msra.mxu0 %v505
  %555 = vmatprep.subr.bf16.mxu0 0
  %556 = vmatpush2.bf16.msra.mxu0 %v504
  %557 = vmatprep.subr.bf16.mxu0 0
  %558 = vmatpush2.bf16.msra.mxu0 %v503
  %559 = vmatprep.mubr.bf16.mxu0 %v304
  %560 = vmatmul.mubr.bf16.gmra.mxu0 %v303
  %v561 = vpop.f32.mrf.mxu0
  %v562 = vadd.f32 0.0, %v561
  %v563 = vpop.f32.mrf.mxu0
  %v564 = vpop.f32.mrf.mxu0
  %v565 = vadd.f32 0.0, %v564
  %v566 = vpop.f32.mrf.mxu0
  %567 = vmatprep.mubr.bf16.mxu0 %v306
  %568 = vmatmul.mubr.bf16.gmra.mxu0 %v305
  %v569 = vpop.f32.mrf.mxu0
  %v570 = vadd.f32 0.0, %v569
  %v571 = vpop.f32.mrf.mxu0
  %v572 = vpop.f32.mrf.mxu0
  %v573 = vadd.f32 0.0, %v572
  %v574 = vpop.f32.mrf.mxu0
  %575 = vmatprep.mubr.bf16.mxu0 %v308
  %576 = vmatmul.mubr.bf16.gmra.mxu0 %v307
  %v577 = vpop.f32.mrf.mxu0
  %v578 = vadd.f32 0.0, %v577
  %v579 = vpop.f32.mrf.mxu0
  %v580 = vpop.f32.mrf.mxu0
  %v581 = vadd.f32 0.0, %v580
  %v582 = vpop.f32.mrf.mxu0
  %583 = vmatprep.mubr.bf16.mxu0 %v310
  %584 = vmatmul.mubr.bf16.gmra.mxu0 %v309
  %v585 = vpop.f32.mrf.mxu0
  %v586 = vadd.f32 0.0, %v585
  %v587 = vpop.f32.mrf.mxu0
  %v588 = vpop.f32.mrf.mxu0
  %v589 = vadd.f32 0.0, %v588
  %v590 = vpop.f32.mrf.mxu0
  %591 = vmatprep.mubr.bf16.mxu0 %v312
  %592 = vmatmul.mubr.bf16.gmra.mxu0 %v311
  %v593 = vpop.f32.mrf.mxu0
  %v594 = vadd.f32 0.0, %v593
  %v595 = vpop.f32.mrf.mxu0
  %v596 = vpop.f32.mrf.mxu0
  %v597 = vadd.f32 0.0, %v596
  %v598 = vpop.f32.mrf.mxu0
  %599 = vmatprep.mubr.bf16.mxu0 %v314
  %600 = vmatmul.mubr.bf16.gmra.mxu0 %v313
  %v601 = vpop.f32.mrf.mxu0
  %v602 = vadd.f32 0.0, %v601
  %v603 = vpop.f32.mrf.mxu0
  %v604 = vpop.f32.mrf.mxu0
  %v605 = vadd.f32 0.0, %v604
  %v606 = vpop.f32.mrf.mxu0
  %607 = vmatprep.mubr.bf16.mxu0 %v316
  %608 = vmatmul.mubr.bf16.gmra.mxu0 %v315
  %v609 = vpop.f32.mrf.mxu0
  %v610 = vadd.f32 0.0, %v609
  %v611 = vpop.f32.mrf.mxu0
  %v612 = vpop.f32.mrf.mxu0
  %v613 = vadd.f32 0.0, %v612
  %v614 = vpop.f32.mrf.mxu0
  %615 = vmatprep.mubr.bf16.mxu0 %v318
  %616 = vmatmul.mubr.bf16.gmra.mxu0 %v317
  %v617 = vpop.f32.mrf.mxu0
  %v618 = vadd.f32 0.0, %v617
  %v619 = vpop.f32.mrf.mxu0
  %v620 = vpop.f32.mrf.mxu0
  %v621 = vadd.f32 0.0, %v620
  %v622 = vpop.f32.mrf.mxu0
  %623 = vmatprep.mubr.bf16.mxu0 %v320
  %624 = vmatmul.mubr.bf16.gmra.mxu0 %v319
  %v625 = vpop.f32.mrf.mxu0
  %v626 = vadd.f32 0.0, %v625
  %v627 = vpop.f32.mrf.mxu0
  %v628 = vpop.f32.mrf.mxu0
  %v629 = vadd.f32 0.0, %v628
  %v630 = vpop.f32.mrf.mxu0
  %631 = vmatprep.mubr.bf16.mxu0 %v322
  %632 = vmatmul.mubr.bf16.gmra.mxu0 %v321
  %v633 = vpop.f32.mrf.mxu0
  %v634 = vadd.f32 0.0, %v633
  %v635 = vpop.f32.mrf.mxu0
  %v636 = vpop.f32.mrf.mxu0
  %v637 = vadd.f32 0.0, %v636
  %v638 = vpop.f32.mrf.mxu0
  %639 = vmatprep.mubr.bf16.mxu0 %v324
  %640 = vmatmul.mubr.bf16.gmra.mxu0 %v323
  %v641 = vpop.f32.mrf.mxu0
  %v642 = vadd.f32 0.0, %v641
  %v643 = vpop.f32.mrf.mxu0
  %v644 = vpop.f32.mrf.mxu0
  %v645 = vadd.f32 0.0, %v644
  %v646 = vpop.f32.mrf.mxu0
  %647 = vmatprep.mubr.bf16.mxu0 %v326
  %648 = vmatmul.mubr.bf16.gmra.mxu0 %v325
  %v649 = vpop.f32.mrf.mxu0
  %v650 = vadd.f32 0.0, %v649
  %v651 = vpop.f32.mrf.mxu0
  %v652 = vpop.f32.mrf.mxu0
  %v653 = vadd.f32 0.0, %v652
  %v654 = vpop.f32.mrf.mxu0
  %655 = vmatprep.mubr.bf16.mxu0 %v328
  %656 = vmatmul.mubr.bf16.gmra.mxu0 %v327
  %v657 = vpop.f32.mrf.mxu0
  %v658 = vadd.f32 0.0, %v657
  %v659 = vpop.f32.mrf.mxu0
  %v660 = vpop.f32.mrf.mxu0
  %v661 = vadd.f32 0.0, %v660
  %v662 = vpop.f32.mrf.mxu0
  %663 = vmatprep.mubr.bf16.mxu0 %v330
  %664 = vmatmul.mubr.bf16.gmra.mxu0 %v329
  %v665 = vpop.f32.mrf.mxu0
  %v666 = vadd.f32 0.0, %v665
  %v667 = vpop.f32.mrf.mxu0
  %v668 = vpop.f32.mrf.mxu0
  %v669 = vadd.f32 0.0, %v668
  %v670 = vpop.f32.mrf.mxu0
  %671 = vmatprep.mubr.bf16.mxu0 %v332
  %672 = vmatmul.mubr.bf16.gmra.mxu0 %v331
  %v673 = vpop.f32.mrf.mxu0
  %v674 = vadd.f32 0.0, %v673
  %v675 = vpop.f32.mrf.mxu0
  %v676 = vpop.f32.mrf.mxu0
  %v677 = vadd.f32 0.0, %v676
  %v678 = vpop.f32.mrf.mxu0
  %679 = vmatprep.mubr.bf16.mxu0 %v334
  %680 = vmatmul.mubr.bf16.gmra.mxu0 %v333
  %v681 = vpop.f32.mrf.mxu0
  %v682 = vadd.f32 0.0, %v681
  %v683 = vpop.f32.mrf.mxu0
  %v684 = vpop.f32.mrf.mxu0
  %v685 = vadd.f32 0.0, %v684
  %v686 = vpop.f32.mrf.mxu0
  %687 = vmatprep.mubr.bf16.mxu0 %v336
  %688 = vmatmul.mubr.bf16.gmra.mxu0 %v335
  %v689 = vpop.f32.mrf.mxu0
  %v690 = vadd.f32 0.0, %v689
  %v691 = vpop.f32.mrf.mxu0
  %v692 = vpop.f32.mrf.mxu0
  %v693 = vadd.f32 0.0, %v692
  %v694 = vpop.f32.mrf.mxu0
  %695 = vmatprep.mubr.bf16.mxu0 %v338
  %696 = vmatmul.mubr.bf16.gmra.mxu0 %v337
  %v697 = vpop.f32.mrf.mxu0
  %v698 = vadd.f32 0.0, %v697
  %v699 = vpop.f32.mrf.mxu0
  %v700 = vpop.f32.mrf.mxu0
  %v701 = vadd.f32 0.0, %v700
  %v702 = vpop.f32.mrf.mxu0
  %703 = vmatprep.mubr.bf16.mxu0 %v340
  %704 = vmatmul.mubr.bf16.gmra.mxu0 %v339
  %v705 = vpop.f32.mrf.mxu0
  %v706 = vadd.f32 0.0, %v705
  %v707 = vpop.f32.mrf.mxu0
  %v708 = vpop.f32.mrf.mxu0
  %v709 = vadd.f32 0.0, %v708
  %v710 = vpop.f32.mrf.mxu0
  %711 = vmatprep.mubr.bf16.mxu0 %v342
  %712 = vmatmul.mubr.bf16.gmra.mxu0 %v341
  %v713 = vpop.f32.mrf.mxu0
  %v714 = vadd.f32 0.0, %v713
  %v715 = vpop.f32.mrf.mxu0
  %v716 = vpop.f32.mrf.mxu0
  %v717 = vadd.f32 0.0, %v716
  %v718 = vpop.f32.mrf.mxu0
  %719 = vmatprep.mubr.bf16.mxu0 %v344
  %720 = vmatmul.mubr.bf16.gmra.mxu0 %v343
  %v721 = vpop.f32.mrf.mxu0
  %v722 = vadd.f32 0.0, %v721
  %v723 = vpop.f32.mrf.mxu0
  %v724 = vpop.f32.mrf.mxu0
  %v725 = vadd.f32 0.0, %v724
  %v726 = vpop.f32.mrf.mxu0
  %727 = vmatprep.mubr.bf16.mxu0 %v346
  %728 = vmatmul.mubr.bf16.gmra.mxu0 %v345
  %v729 = vpop.f32.mrf.mxu0
  %v730 = vadd.f32 0.0, %v729
  %v731 = vpop.f32.mrf.mxu0
  %v732 = vpop.f32.mrf.mxu0
  %v733 = vadd.f32 0.0, %v732
  %v734 = vpop.f32.mrf.mxu0
  %735 = vmatprep.mubr.bf16.mxu0 %v348
  %736 = vmatmul.mubr.bf16.gmra.mxu0 %v347
  %v737 = vpop.f32.mrf.mxu0
  %v738 = vadd.f32 0.0, %v737
  %v739 = vpop.f32.mrf.mxu0
  %v740 = vpop.f32.mrf.mxu0
  %v741 = vadd.f32 0.0, %v740
  %v742 = vpop.f32.mrf.mxu0
  %743 = vmatprep.mubr.bf16.mxu0 %v350
  %744 = vmatmul.mubr.bf16.gmra.mxu0 %v349
  %v745 = vpop.f32.mrf.mxu0
  %v746 = vadd.f32 0.0, %v745
  %v747 = vpop.f32.mrf.mxu0
  %v748 = vpop.f32.mrf.mxu0
  %v749 = vadd.f32 0.0, %v748
  %v750 = vpop.f32.mrf.mxu0
  %751 = vmatprep.mubr.bf16.mxu0 %v352
  %752 = vmatmul.mubr.bf16.gmra.mxu0 %v351
  %v753 = vpop.f32.mrf.mxu0
  %v754 = vadd.f32 0.0, %v753
  %v755 = vpop.f32.mrf.mxu0
  %v756 = vpop.f32.mrf.mxu0
  %v757 = vadd.f32 0.0, %v756
  %v758 = vpop.f32.mrf.mxu0
  %759 = vmatprep.mubr.bf16.mxu0 %v354
  %760 = vmatmul.mubr.bf16.gmra.mxu0 %v353
  %v761 = vpop.f32.mrf.mxu0
  %v762 = vadd.f32 0.0, %v761
  %v763 = vpop.f32.mrf.mxu0
  %v764 = vpop.f32.mrf.mxu0
  %v765 = vadd.f32 0.0, %v764
  %v766 = vpop.f32.mrf.mxu0
  %767 = vmatprep.mubr.bf16.mxu0 %v356
  %768 = vmatmul.mubr.bf16.gmra.mxu0 %v355
  %v769 = vpop.f32.mrf.mxu0
  %v770 = vadd.f32 0.0, %v769
  %v771 = vpop.f32.mrf.mxu0
  %v772 = vpop.f32.mrf.mxu0
  %v773 = vadd.f32 0.0, %v772
  %v774 = vpop.f32.mrf.mxu0
  %775 = vmatprep.mubr.bf16.mxu0 %v358
  %776 = vmatmul.mubr.bf16.gmra.mxu0 %v357
  %v777 = vpop.f32.mrf.mxu0
  %v778 = vadd.f32 0.0, %v777
  %v779 = vpop.f32.mrf.mxu0
  %v780 = vpop.f32.mrf.mxu0
  %v781 = vadd.f32 0.0, %v780
  %v782 = vpop.f32.mrf.mxu0
  %783 = vmatprep.mubr.bf16.mxu0 %v360
  %784 = vmatmul.mubr.bf16.gmra.mxu0 %v359
  %v785 = vpop.f32.mrf.mxu0
  %v786 = vadd.f32 0.0, %v785
  %v787 = vpop.f32.mrf.mxu0
  %v788 = vpop.f32.mrf.mxu0
  %v789 = vadd.f32 0.0, %v788
  %v790 = vpop.f32.mrf.mxu0
  %791 = vmatprep.mubr.bf16.mxu0 %v362
  %792 = vmatmul.mubr.bf16.gmra.mxu0 %v361
  %v793 = vpop.f32.mrf.mxu0
  %v794 = vadd.f32 0.0, %v793
  %v795 = vpop.f32.mrf.mxu0
  %v796 = vpop.f32.mrf.mxu0
  %v797 = vadd.f32 0.0, %v796
  %v798 = vpop.f32.mrf.mxu0
  %799 = vmatprep.mubr.bf16.mxu0 %v364
  %800 = vmatmul.mubr.bf16.gmra.mxu0 %v363
  %v801 = vpop.f32.mrf.mxu0
  %v802 = vadd.f32 0.0, %v801
  %v803 = vpop.f32.mrf.mxu0
  %v804 = vpop.f32.mrf.mxu0
  %v805 = vadd.f32 0.0, %v804
  %v806 = vpop.f32.mrf.mxu0
  %807 = vmatprep.mubr.bf16.mxu0 %v366
  %808 = vmatmul.mubr.bf16.gmra.mxu0 %v365
  %v809 = vpop.f32.mrf.mxu0
  %v810 = vadd.f32 0.0, %v809
  %v811 = vpop.f32.mrf.mxu0
  %v812 = vpop.f32.mrf.mxu0
  %v813 = vadd.f32 0.0, %v812
  %v814 = vpop.f32.mrf.mxu0
  %815 = vdwg.mxu0
  %v816 = vpack.c.bf16 %v565, %v562
  %v817 = vpack.c.bf16 %v573, %v570
  %v818 = vpack.c.bf16 %v581, %v578
  %v819 = vpack.c.bf16 %v589, %v586
  %v820 = vpack.c.bf16 %v597, %v594
  %v821 = vpack.c.bf16 %v605, %v602
  %v822 = vpack.c.bf16 %v613, %v610
  %v823 = vpack.c.bf16 %v621, %v618
  %v824 = vpack.c.bf16 %v629, %v626
  %v825 = vpack.c.bf16 %v637, %v634
  %v826 = vpack.c.bf16 %v645, %v642
  %v827 = vpack.c.bf16 %v653, %v650
  %v828 = vpack.c.bf16 %v661, %v658
  %v829 = vpack.c.bf16 %v669, %v666
  %v830 = vpack.c.bf16 %v677, %v674
  %v831 = vpack.c.bf16 %v685, %v682
  %v832 = vpack.c.bf16 %v693, %v690
  %v833 = vpack.c.bf16 %v701, %v698
  %v834 = vpack.c.bf16 %v709, %v706
  %v835 = vpack.c.bf16 %v717, %v714
  %v836 = vpack.c.bf16 %v725, %v722
  %v837 = vpack.c.bf16 %v733, %v730
  %v838 = vpack.c.bf16 %v741, %v738
  %v839 = vpack.c.bf16 %v749, %v746
  %v840 = vpack.c.bf16 %v757, %v754
  %v841 = vpack.c.bf16 %v765, %v762
  %v842 = vpack.c.bf16 %v773, %v770
  %v843 = vpack.c.bf16 %v781, %v778
  %v844 = vpack.c.bf16 %v789, %v786
  %v845 = vpack.c.bf16 %v797, %v794
  %v846 = vpack.c.bf16 %v805, %v802
  %v847 = vpack.c.bf16 %v813, %v810
  %v880 = vunpack.c.l.b16 %v816
  %v881 = vunpack.c.h.b16 %v816
  %v882 = vunpack.c.l.b16 %v817
  %v883 = vunpack.c.h.b16 %v817
  %v884 = vunpack.c.l.b16 %v818
  %v885 = vunpack.c.h.b16 %v818
  %v886 = vunpack.c.l.b16 %v819
  %v887 = vunpack.c.h.b16 %v819
  %v888 = vunpack.c.l.b16 %v820
  %v889 = vunpack.c.h.b16 %v820
  %v890 = vunpack.c.l.b16 %v821
  %v891 = vunpack.c.h.b16 %v821
  %v892 = vunpack.c.l.b16 %v822
  %v893 = vunpack.c.h.b16 %v822
  %v894 = vunpack.c.l.b16 %v823
  %v895 = vunpack.c.h.b16 %v823
  %v896 = vunpack.c.l.b16 %v824
  %v897 = vunpack.c.h.b16 %v824
  %v898 = vunpack.c.l.b16 %v825
  %v899 = vunpack.c.h.b16 %v825
  %v900 = vunpack.c.l.b16 %v826
  %v901 = vunpack.c.h.b16 %v826
  %v902 = vunpack.c.l.b16 %v827
  %v903 = vunpack.c.h.b16 %v827
  %v904 = vunpack.c.l.b16 %v828
  %v905 = vunpack.c.h.b16 %v828
  %v906 = vunpack.c.l.b16 %v829
  %v907 = vunpack.c.h.b16 %v829
  %v908 = vunpack.c.l.b16 %v830
  %v909 = vunpack.c.h.b16 %v830
  %v910 = vunpack.c.l.b16 %v831
  %v911 = vunpack.c.h.b16 %v831
  %v912 = vunpack.c.l.b16 %v832
  %v913 = vunpack.c.h.b16 %v832
  %v914 = vunpack.c.l.b16 %v833
  %v915 = vunpack.c.h.b16 %v833
  %v916 = vunpack.c.l.b16 %v834
  %v917 = vunpack.c.h.b16 %v834
  %v918 = vunpack.c.l.b16 %v835
  %v919 = vunpack.c.h.b16 %v835
  %v920 = vunpack.c.l.b16 %v836
  %v921 = vunpack.c.h.b16 %v836
  %v922 = vunpack.c.l.b16 %v837
  %v923 = vunpack.c.h.b16 %v837
  %v924 = vunpack.c.l.b16 %v838
  %v925 = vunpack.c.h.b16 %v838
  %v926 = vunpack.c.l.b16 %v839
  %v927 = vunpack.c.h.b16 %v839
  %v928 = vunpack.c.l.b16 %v840
  %v929 = vunpack.c.h.b16 %v840
  %v930 = vunpack.c.l.b16 %v841
  %v931 = vunpack.c.h.b16 %v841
  %v932 = vunpack.c.l.b16 %v842
  %v933 = vunpack.c.h.b16 %v842
  %v934 = vunpack.c.l.b16 %v843
  %v935 = vunpack.c.h.b16 %v843
  %v936 = vunpack.c.l.b16 %v844
  %v937 = vunpack.c.h.b16 %v844
  %v938 = vunpack.c.l.b16 %v845
  %v939 = vunpack.c.h.b16 %v845
  %v940 = vunpack.c.l.b16 %v846
  %v941 = vunpack.c.h.b16 %v846
  %v942 = vunpack.c.l.b16 %v847
  %v943 = vunpack.c.h.b16 %v847
  %v944 = vpack.c.b16 %v880, %v880
  %v945 = vpack.c.b16 %v881, %v881
  %v946 = vpack.c.b16 %v882, %v882
  %v947 = vpack.c.b16 %v883, %v883
  %v948 = vpack.c.b16 %v884, %v884
  %v949 = vpack.c.b16 %v885, %v885
  %v950 = vpack.c.b16 %v886, %v886
  %v951 = vpack.c.b16 %v887, %v887
  %v952 = vpack.c.b16 %v888, %v888
  %v953 = vpack.c.b16 %v889, %v889
  %v954 = vpack.c.b16 %v890, %v890
  %v955 = vpack.c.b16 %v891, %v891
  %v956 = vpack.c.b16 %v892, %v892
  %v957 = vpack.c.b16 %v893, %v893
  %v958 = vpack.c.b16 %v894, %v894
  %v959 = vpack.c.b16 %v895, %v895
  %v960 = vpack.c.b16 %v896, %v896
  %v961 = vpack.c.b16 %v897, %v897
  %v962 = vpack.c.b16 %v898, %v898
  %v963 = vpack.c.b16 %v899, %v899
  %v964 = vpack.c.b16 %v900, %v900
  %v965 = vpack.c.b16 %v901, %v901
  %v966 = vpack.c.b16 %v902, %v902
  %v967 = vpack.c.b16 %v903, %v903
  %v968 = vpack.c.b16 %v904, %v904
  %v969 = vpack.c.b16 %v905, %v905
  %v970 = vpack.c.b16 %v906, %v906
  %v971 = vpack.c.b16 %v907, %v907
  %v972 = vpack.c.b16 %v908, %v908
  %v973 = vpack.c.b16 %v909, %v909
  %v974 = vpack.c.b16 %v910, %v910
  %v975 = vpack.c.b16 %v911, %v911
  %v976 = vpack.c.b16 %v912, %v912
  %v977 = vpack.c.b16 %v913, %v913
  %v978 = vpack.c.b16 %v914, %v914
  %v979 = vpack.c.b16 %v915, %v915
  %v980 = vpack.c.b16 %v916, %v916
  %v981 = vpack.c.b16 %v917, %v917
  %v982 = vpack.c.b16 %v918, %v918
  %v983 = vpack.c.b16 %v919, %v919
  %v984 = vpack.c.b16 %v920, %v920
  %v985 = vpack.c.b16 %v921, %v921
  %v986 = vpack.c.b16 %v922, %v922
  %v987 = vpack.c.b16 %v923, %v923
  %v988 = vpack.c.b16 %v924, %v924
  %v989 = vpack.c.b16 %v925, %v925
  %v990 = vpack.c.b16 %v926, %v926
  %v991 = vpack.c.b16 %v927, %v927
  %v992 = vpack.c.b16 %v928, %v928
  %v993 = vpack.c.b16 %v929, %v929
  %v994 = vpack.c.b16 %v930, %v930
  %v995 = vpack.c.b16 %v931, %v931
  %v996 = vpack.c.b16 %v932, %v932
  %v997 = vpack.c.b16 %v933, %v933
  %v998 = vpack.c.b16 %v934, %v934
  %v999 = vpack.c.b16 %v935, %v935
  %v1000 = vpack.c.b16 %v936, %v936
  %v1001 = vpack.c.b16 %v937, %v937
  %v1002 = vpack.c.b16 %v938, %v938
  %v1003 = vpack.c.b16 %v939, %v939
  %v1004 = vpack.c.b16 %v940, %v940
  %v1005 = vpack.c.b16 %v941, %v941
  %v1006 = vpack.c.b16 %v942, %v942
  %v1007 = vpack.c.b16 %v943, %v943
  %1072 = vst [vmem:[%s2] sm:$0xf] %v944
  %1073 = vst [vmem:[%s2 + $0x4] sm:$0xf] %v945
  %1074 = vst [vmem:[%s2 + $0x8] sm:$0xf] %v946
  %1075 = vst [vmem:[%s2 + $0xc] sm:$0xf] %v947
  %1076 = vst [vmem:[%s2 + $0x10] sm:$0xf] %v948
  %1077 = vst [vmem:[%s2 + $0x14] sm:$0xf] %v949
  %1078 = vst [vmem:[%s2 + $0x18] sm:$0xf] %v950
  %1079 = vst [vmem:[%s2 + $0x1c] sm:$0xf] %v951
  %1080 = vst [vmem:[%s2 + $0x20] sm:$0xf] %v952
  %1081 = vst [vmem:[%s2 + $0x24] sm:$0xf] %v953
  %1082 = vst [vmem:[%s2 + $0x28] sm:$0xf] %v954
  %1083 = vst [vmem:[%s2 + $0x2c] sm:$0xf] %v955
  %1084 = vst [vmem:[%s2 + $0x30] sm:$0xf] %v956
  %1085 = vst [vmem:[%s2 + $0x34] sm:$0xf] %v957
  %1086 = vst [vmem:[%s2 + $0x38] sm:$0xf] %v958
  %1087 = vst [vmem:[%s2 + $0x3c] sm:$0xf] %v959
  %1088 = vst [vmem:[%s2 + $0x40] sm:$0xf] %v960
  %1089 = vst [vmem:[%s2 + $0x44] sm:$0xf] %v961
  %1090 = vst [vmem:[%s2 + $0x48] sm:$0xf] %v962
  %1091 = vst [vmem:[%s2 + $0x4c] sm:$0xf] %v963
  %1092 = vst [vmem:[%s2 + $0x50] sm:$0xf] %v964
  %1093 = vst [vmem:[%s2 + $0x54] sm:$0xf] %v965
  %1094 = vst [vmem:[%s2 + $0x58] sm:$0xf] %v966
  %1095 = vst [vmem:[%s2 + $0x5c] sm:$0xf] %v967
  %1096 = vst [vmem:[%s2 + $0x60] sm:$0xf] %v968
  %1097 = vst [vmem:[%s2 + $0x64] sm:$0xf] %v969
  %1098 = vst [vmem:[%s2 + $0x68] sm:$0xf] %v970
  %1099 = vst [vmem:[%s2 + $0x6c] sm:$0xf] %v971
  %1100 = vst [vmem:[%s2 + $0x70] sm:$0xf] %v972
  %1101 = vst [vmem:[%s2 + $0x74] sm:$0xf] %v973
  %1102 = vst [vmem:[%s2 + $0x78] sm:$0xf] %v974
  %1103 = vst [vmem:[%s2 + $0x7c] sm:$0xf] %v975
  %1104 = vst [vmem:[%s2 + $0x80] sm:$0xf] %v976
  %1105 = vst [vmem:[%s2 + $0x84] sm:$0xf] %v977
  %1106 = vst [vmem:[%s2 + $0x88] sm:$0xf] %v978
  %1107 = vst [vmem:[%s2 + $0x8c] sm:$0xf] %v979
  %1108 = vst [vmem:[%s2 + $0x90] sm:$0xf] %v980
  %1109 = vst [vmem:[%s2 + $0x94] sm:$0xf] %v981
  %1110 = vst [vmem:[%s2 + $0x98] sm:$0xf] %v982
  %1111 = vst [vmem:[%s2 + $0x9c] sm:$0xf] %v983
  %1112 = vst [vmem:[%s2 + $0xa0] sm:$0xf] %v984
  %1113 = vst [vmem:[%s2 + $0xa4] sm:$0xf] %v985
  %1114 = vst [vmem:[%s2 + $0xa8] sm:$0xf] %v986
  %1115 = vst [vmem:[%s2 + $0xac] sm:$0xf] %v987
  %1116 = vst [vmem:[%s2 + $0xb0] sm:$0xf] %v988
  %1117 = vst [vmem:[%s2 + $0xb4] sm:$0xf] %v989
  %1118 = vst [vmem:[%s2 + $0xb8] sm:$0xf] %v990
  %1119 = vst [vmem:[%s2 + $0xbc] sm:$0xf] %v991
  %1120 = vst [vmem:[%s2 + $0xc0] sm:$0xf] %v992
  %1121 = vst [vmem:[%s2 + $0xc4] sm:$0xf] %v993
  %1122 = vst [vmem:[%s2 + $0xc8] sm:$0xf] %v994
  %1123 = vst [vmem:[%s2 + $0xcc] sm:$0xf] %v995
  %1124 = vst [vmem:[%s2 + $0xd0] sm:$0xf] %v996
  %1125 = vst [vmem:[%s2 + $0xd4] sm:$0xf] %v997
  %1126 = vst [vmem:[%s2 + $0xd8] sm:$0xf] %v998
  %1127 = vst [vmem:[%s2 + $0xdc] sm:$0xf] %v999
  %1128 = vst [vmem:[%s2 + $0xe0] sm:$0xf] %v1000
  %1129 = vst [vmem:[%s2 + $0xe4] sm:$0xf] %v1001
  %1130 = vst [vmem:[%s2 + $0xe8] sm:$0xf] %v1002
  %1131 = vst [vmem:[%s2 + $0xec] sm:$0xf] %v1003
  %1132 = vst [vmem:[%s2 + $0xf0] sm:$0xf] %v1004
  %1133 = vst [vmem:[%s2 + $0xf4] sm:$0xf] %v1005
  %1134 = vst [vmem:[%s2 + $0xf8] sm:$0xf] %v1006
  %1135 = vst [vmem:[%s2 + $0xfc] sm:$0xf] %v1007
  %v1136 = vadd.f32 %v562, %v565
  %v1137 = vadd.f32 %v1136, %v570
  %v1138 = vadd.f32 %v1137, %v573
  %v1139 = vadd.f32 %v1138, %v578
  %v1140 = vadd.f32 %v1139, %v581
  %v1141 = vadd.f32 %v1140, %v586
  %v1142 = vadd.f32 %v1141, %v589
  %v1143 = vadd.f32 %v1142, %v594
  %v1144 = vadd.f32 %v1143, %v597
  %v1145 = vadd.f32 %v1144, %v602
  %v1146 = vadd.f32 %v1145, %v605
  %v1147 = vadd.f32 %v1146, %v610
  %v1148 = vadd.f32 %v1147, %v613
  %v1149 = vadd.f32 %v1148, %v618
  %v1150 = vadd.f32 %v1149, %v621
  %v1151 = vadd.f32 %v1150, %v626
  %v1152 = vadd.f32 %v1151, %v629
  %v1153 = vadd.f32 %v1152, %v634
  %v1154 = vadd.f32 %v1153, %v637
  %v1155 = vadd.f32 %v1154, %v642
  %v1156 = vadd.f32 %v1155, %v645
  %v1157 = vadd.f32 %v1156, %v650
  %v1158 = vadd.f32 %v1157, %v653
  %v1159 = vadd.f32 %v1158, %v658
  %v1160 = vadd.f32 %v1159, %v661
  %v1161 = vadd.f32 %v1160, %v666
  %v1162 = vadd.f32 %v1161, %v669
  %v1163 = vadd.f32 %v1162, %v674
  %v1164 = vadd.f32 %v1163, %v677
  %v1165 = vadd.f32 %v1164, %v682
  %v1166 = vadd.f32 %v1165, %v685
  %v1167 = vadd.f32 %v1166, %v690
  %v1168 = vadd.f32 %v1167, %v693
  %v1169 = vadd.f32 %v1168, %v698
  %v1170 = vadd.f32 %v1169, %v701
  %v1171 = vadd.f32 %v1170, %v706
  %v1172 = vadd.f32 %v1171, %v709
  %v1173 = vadd.f32 %v1172, %v714
  %v1174 = vadd.f32 %v1173, %v717
  %v1175 = vadd.f32 %v1174, %v722
  %v1176 = vadd.f32 %v1175, %v725
  %v1177 = vadd.f32 %v1176, %v730
  %v1178 = vadd.f32 %v1177, %v733
  %v1179 = vadd.f32 %v1178, %v738
  %v1180 = vadd.f32 %v1179, %v741
  %v1181 = vadd.f32 %v1180, %v746
  %v1182 = vadd.f32 %v1181, %v749
  %v1183 = vadd.f32 %v1182, %v754
  %v1184 = vadd.f32 %v1183, %v757
  %v1185 = vadd.f32 %v1184, %v762
  %v1186 = vadd.f32 %v1185, %v765
  %v1187 = vadd.f32 %v1186, %v770
  %v1188 = vadd.f32 %v1187, %v773
  %v1189 = vadd.f32 %v1188, %v778
  %v1190 = vadd.f32 %v1189, %v781
  %v1191 = vadd.f32 %v1190, %v786
  %v1192 = vadd.f32 %v1191, %v789
  %v1193 = vadd.f32 %v1192, %v794
  %v1194 = vadd.f32 %v1193, %v797
  %v1195 = vadd.f32 %v1194, %v802
  %v1196 = vadd.f32 %v1195, %v805
  %v1197 = vadd.f32 %v1196, %v810
  %v1198 = vadd.f32 %v1197, %v813
  %v1199 = vrot.slane %v1198, 4
  %v1200 = vadd.f32 %v1198, %v1199
  %v1201 = vrot.slane %v1200, 2
  %v1202 = vadd.f32 %v1200, %v1201
  %v1203 = vrot.slane %v1202, 1
  %v1204 = vadd.f32 %v1202, %v1203
  %v1205 = vmul.f32 %v562, %v562
  %v1206 = vmul.f32 %v565, %v565
  %v1207 = vmul.f32 %v570, %v570
  %v1208 = vmul.f32 %v573, %v573
  %v1209 = vmul.f32 %v578, %v578
  %v1210 = vmul.f32 %v581, %v581
  %v1211 = vmul.f32 %v586, %v586
  %v1212 = vmul.f32 %v589, %v589
  %v1213 = vmul.f32 %v594, %v594
  %v1214 = vmul.f32 %v597, %v597
  %v1215 = vmul.f32 %v602, %v602
  %v1216 = vmul.f32 %v605, %v605
  %v1217 = vmul.f32 %v610, %v610
  %v1218 = vmul.f32 %v613, %v613
  %v1219 = vmul.f32 %v618, %v618
  %v1220 = vmul.f32 %v621, %v621
  %v1221 = vmul.f32 %v626, %v626
  %v1222 = vmul.f32 %v629, %v629
  %v1223 = vmul.f32 %v634, %v634
  %v1224 = vmul.f32 %v637, %v637
  %v1225 = vmul.f32 %v642, %v642
  %v1226 = vmul.f32 %v645, %v645
  %v1227 = vmul.f32 %v650, %v650
  %v1228 = vmul.f32 %v653, %v653
  %v1229 = vmul.f32 %v658, %v658
  %v1230 = vmul.f32 %v661, %v661
  %v1231 = vmul.f32 %v666, %v666
  %v1232 = vmul.f32 %v669, %v669
  %v1233 = vmul.f32 %v674, %v674
  %v1234 = vmul.f32 %v677, %v677
  %v1235 = vmul.f32 %v682, %v682
  %v1236 = vmul.f32 %v685, %v685
  %v1237 = vmul.f32 %v690, %v690
  %v1238 = vmul.f32 %v693, %v693
  %v1239 = vmul.f32 %v698, %v698
  %v1240 = vmul.f32 %v701, %v701
  %v1241 = vmul.f32 %v706, %v706
  %v1242 = vmul.f32 %v709, %v709
  %v1243 = vmul.f32 %v714, %v714
  %v1244 = vmul.f32 %v717, %v717
  %v1245 = vmul.f32 %v722, %v722
  %v1246 = vmul.f32 %v725, %v725
  %v1247 = vmul.f32 %v730, %v730
  %v1248 = vmul.f32 %v733, %v733
  %v1249 = vmul.f32 %v738, %v738
  %v1250 = vmul.f32 %v741, %v741
  %v1251 = vmul.f32 %v746, %v746
  %v1252 = vmul.f32 %v749, %v749
  %v1253 = vmul.f32 %v754, %v754
  %v1254 = vmul.f32 %v757, %v757
  %v1255 = vmul.f32 %v762, %v762
  %v1256 = vmul.f32 %v765, %v765
  %v1257 = vmul.f32 %v770, %v770
  %v1258 = vmul.f32 %v773, %v773
  %v1259 = vmul.f32 %v778, %v778
  %v1260 = vmul.f32 %v781, %v781
  %v1261 = vmul.f32 %v786, %v786
  %v1262 = vmul.f32 %v789, %v789
  %v1263 = vmul.f32 %v794, %v794
  %v1264 = vmul.f32 %v797, %v797
  %v1265 = vmul.f32 %v802, %v802
  %v1266 = vmul.f32 %v805, %v805
  %v1267 = vmul.f32 %v810, %v810
  %v1268 = vmul.f32 %v813, %v813
  %v1269 = vadd.f32 %v1205, %v1206
  %v1270 = vadd.f32 %v1269, %v1207
  %v1271 = vadd.f32 %v1270, %v1208
  %v1272 = vadd.f32 %v1271, %v1209
  %v1273 = vadd.f32 %v1272, %v1210
  %v1274 = vadd.f32 %v1273, %v1211
  %v1275 = vadd.f32 %v1274, %v1212
  %v1276 = vadd.f32 %v1275, %v1213
  %v1277 = vadd.f32 %v1276, %v1214
  %v1278 = vadd.f32 %v1277, %v1215
  %v1279 = vadd.f32 %v1278, %v1216
  %v1280 = vadd.f32 %v1279, %v1217
  %v1281 = vadd.f32 %v1280, %v1218
  %v1282 = vadd.f32 %v1281, %v1219
  %v1283 = vadd.f32 %v1282, %v1220
  %v1284 = vadd.f32 %v1283, %v1221
  %v1285 = vadd.f32 %v1284, %v1222
  %v1286 = vadd.f32 %v1285, %v1223
  %v1287 = vadd.f32 %v1286, %v1224
  %v1288 = vadd.f32 %v1287, %v1225
  %v1289 = vadd.f32 %v1288, %v1226
  %v1290 = vadd.f32 %v1289, %v1227
  %v1291 = vadd.f32 %v1290, %v1228
  %v1292 = vadd.f32 %v1291, %v1229
  %v1293 = vadd.f32 %v1292, %v1230
  %v1294 = vadd.f32 %v1293, %v1231
  %v1295 = vadd.f32 %v1294, %v1232
  %v1296 = vadd.f32 %v1295, %v1233
  %v1297 = vadd.f32 %v1296, %v1234
  %v1298 = vadd.f32 %v1297, %v1235
  %v1299 = vadd.f32 %v1298, %v1236
  %v1300 = vadd.f32 %v1299, %v1237
  %v1301 = vadd.f32 %v1300, %v1238
  %v1302 = vadd.f32 %v1301, %v1239
  %v1303 = vadd.f32 %v1302, %v1240
  %v1304 = vadd.f32 %v1303, %v1241
  %v1305 = vadd.f32 %v1304, %v1242
  %v1306 = vadd.f32 %v1305, %v1243
  %v1307 = vadd.f32 %v1306, %v1244
  %v1308 = vadd.f32 %v1307, %v1245
  %v1309 = vadd.f32 %v1308, %v1246
  %v1310 = vadd.f32 %v1309, %v1247
  %v1311 = vadd.f32 %v1310, %v1248
  %v1312 = vadd.f32 %v1311, %v1249
  %v1313 = vadd.f32 %v1312, %v1250
  %v1314 = vadd.f32 %v1313, %v1251
  %v1315 = vadd.f32 %v1314, %v1252
  %v1316 = vadd.f32 %v1315, %v1253
  %v1317 = vadd.f32 %v1316, %v1254
  %v1318 = vadd.f32 %v1317, %v1255
  %v1319 = vadd.f32 %v1318, %v1256
  %v1320 = vadd.f32 %v1319, %v1257
  %v1321 = vadd.f32 %v1320, %v1258
  %v1322 = vadd.f32 %v1321, %v1259
  %v1323 = vadd.f32 %v1322, %v1260
  %v1324 = vadd.f32 %v1323, %v1261
  %v1325 = vadd.f32 %v1324, %v1262
  %v1326 = vadd.f32 %v1325, %v1263
  %v1327 = vadd.f32 %v1326, %v1264
  %v1328 = vadd.f32 %v1327, %v1265
  %v1329 = vadd.f32 %v1328, %v1266
  %v1330 = vadd.f32 %v1329, %v1267
  %v1331 = vadd.f32 %v1330, %v1268
  %v1332 = vrot.slane %v1331, 4
  %v1333 = vadd.f32 %v1331, %v1332
  %v1334 = vrot.slane %v1333, 2
  %v1335 = vadd.f32 %v1333, %v1334
  %v1336 = vrot.slane %v1335, 1
  %v1337 = vadd.f32 %v1335, %v1336
  %1338 = vst [vmem:[%s3] sm:$0xff] %v1204
  %1339 = vst [vmem:[%s4] sm:$0xff] %v1337
  // Predicated region
  $region10: #{generator_forward.5} parent=0 // pred_check
    _
  $region11: #{generator_forward.5} parent=0 // pred_check_branch
    %1341 = sbr.rel (0) target = $region13
  $region12: #{generator_forward.5} parent=0 // pred_region
    _
  $region13: #{generator_forward.5} parent=0 // pred_fallthru
    _
  // Predicated region
  $region14: #{generator_forward.5} parent=0 // pred_check
    _
  $region15: #{generator_forward.5} parent=0 // pred_check_branch
    %1343 = sbr.rel (0) target = $region17
  $region16: #{generator_forward.5} parent=0 // pred_region
    _
  $region17: #{generator_forward.5} parent=0 // pred_fallthru
    _
  // Predicated region
  $region18: #{generator_forward.5} parent=0 // pred_check
    _
  $region19: #{generator_forward.5} parent=0 // pred_check_branch
    %1345 = sbr.rel (0) target = $region21
  $region20: #{generator_forward.5} parent=0 // pred_region
    _
  $region21: #{generator_forward.5} parent=0 // pred_fallthru
    _
  // Predicated region
  $region22: #{generator_forward.5} parent=0 // pred_check
    _
  $region23: #{generator_forward.5} parent=0 // pred_check_branch
    %1347 = sbr.rel (0) target = $region25
  $region24: #{generator_forward.5} parent=0 // pred_region
    _
  $region25: #{generator_forward.5} parent=0 // pred_fallthru
    _
  // Predicated region
  $region26: #{generator_forward.5} parent=0 // pred_check
    _
  $region27: #{generator_forward.5} parent=0 // pred_check_branch
    %1349 = sbr.rel (0) target = $region29
  $region28: #{generator_forward.5} parent=0 // pred_region
    _
  $region29: #{generator_forward.5} parent=0 // pred_fallthru
    _
  // Predicated region
  $region30: #{generator_forward.5} parent=0 // pred_check
    _
  $region31: #{generator_forward.5} parent=0 // pred_check_branch
    %1351 = sbr.rel (0) target = $region33
  $region32: #{generator_forward.5} parent=0 // pred_region
    _
  $region33: #{generator_forward.5} parent=0 // pred_fallthru
    _

// kernel: generator_forward.6
$region0: #{generator_forward.6}
  #allocation0 [shape = 'u32[]', space=smem, size = 0x4, offset = 0x4, fixed_abs, tag = 'smem constant byte address 0x4 - core index']
  #allocation1 [shape = 'u32[144,128]{1,0:T(1,128)}', space=vmem, size = 0x12000, scoped, tag = 'internal scratch']
  %s0 = inlined_call_operand.vmem [shape: bf16[512,128], index: 0, kind: input, shape index: {}]
  %s1 = inlined_call_operand.vmem [shape: f32[1,128], index: 1, kind: input, shape index: {}]
  %s2 = inlined_call_operand.vmem [shape: f32[1,128], index: 2, kind: input, shape index: {}]
  %s3 = inlined_call_operand.vmem [shape: bf16[512,128], index: 3, kind: output, shape index: {}]
  %s4 = sld [smem:[#allocation0]]
  $region22: #{generator_forward.6} parent=0
    _
  %s6 = ssub.s32 1, %s4
  %s7 = scalar_select 0, %s6, %s4
  // Predicated region
  $region2: #{generator_forward.6} parent=0 // pred_check
    _
  $region3: #{generator_forward.6} parent=0 // pred_check_branch
    %9 = sbr.rel (0) target = $region5
  $region4: #{generator_forward.6} parent=0 // pred_region
    _
  $region5: #{generator_forward.6} parent=0 // pred_fallthru
    _
  // Predicated region
  $region6: #{generator_forward.6} parent=0 // pred_check
    _
  $region7: #{generator_forward.6} parent=0 // pred_check_branch
    %11 = sbr.rel (0) target = $region9
  $region8: #{generator_forward.6} parent=0 // pred_region
    _
  $region9: #{generator_forward.6} parent=0 // pred_fallthru
    _
  // Predicated region
  $region10: #{generator_forward.6} parent=0 // pred_check
    _
  $region11: #{generator_forward.6} parent=0 // pred_check_branch
    %13 = sbr.rel (0) target = $region13
  $region12: #{generator_forward.6} parent=0 // pred_region
    _
  $region13: #{generator_forward.6} parent=0 // pred_fallthru
    _
  %v14 = vld [vmem:[%s0] sm:$0xf]
  %v15 = vld [vmem:[%s0 + $0x4] sm:$0xf]
  %v16 = vld [vmem:[%s0 + $0x8] sm:$0xf]
  %v17 = vld [vmem:[%s0 + $0xc] sm:$0xf]
  %v18 = vld [vmem:[%s0 + $0x10] sm:$0xf]
  %v19 = vld [vmem:[%s0 + $0x14] sm:$0xf]
  %v20 = vld [vmem:[%s0 + $0x18] sm:$0xf]
  %v21 = vld [vmem:[%s0 + $0x1c] sm:$0xf]
  %v22 = vld [vmem:[%s0 + $0x20] sm:$0xf]
  %v23 = vld [vmem:[%s0 + $0x24] sm:$0xf]
  %v24 = vld [vmem:[%s0 + $0x28] sm:$0xf]
  %v25 = vld [vmem:[%s0 + $0x2c] sm:$0xf]
  %v26 = vld [vmem:[%s0 + $0x30] sm:$0xf]
  %v27 = vld [vmem:[%s0 + $0x34] sm:$0xf]
  %v28 = vld [vmem:[%s0 + $0x38] sm:$0xf]
  %v29 = vld [vmem:[%s0 + $0x3c] sm:$0xf]
  %v30 = vld [vmem:[%s0 + $0x40] sm:$0xf]
  %v31 = vld [vmem:[%s0 + $0x44] sm:$0xf]
  %v32 = vld [vmem:[%s0 + $0x48] sm:$0xf]
  %v33 = vld [vmem:[%s0 + $0x4c] sm:$0xf]
  %v34 = vld [vmem:[%s0 + $0x50] sm:$0xf]
  %v35 = vld [vmem:[%s0 + $0x54] sm:$0xf]
  %v36 = vld [vmem:[%s0 + $0x58] sm:$0xf]
  %v37 = vld [vmem:[%s0 + $0x5c] sm:$0xf]
  %v38 = vld [vmem:[%s0 + $0x60] sm:$0xf]
  %v39 = vld [vmem:[%s0 + $0x64] sm:$0xf]
  %v40 = vld [vmem:[%s0 + $0x68] sm:$0xf]
  %v41 = vld [vmem:[%s0 + $0x6c] sm:$0xf]
  %v42 = vld [vmem:[%s0 + $0x70] sm:$0xf]
  %v43 = vld [vmem:[%s0 + $0x74] sm:$0xf]
  %v44 = vld [vmem:[%s0 + $0x78] sm:$0xf]
  %v45 = vld [vmem:[%s0 + $0x7c] sm:$0xf]
  %v46 = vld [vmem:[%s0 + $0x80] sm:$0xf]
  %v47 = vld [vmem:[%s0 + $0x84] sm:$0xf]
  %v48 = vld [vmem:[%s0 + $0x88] sm:$0xf]
  %v49 = vld [vmem:[%s0 + $0x8c] sm:$0xf]
  %v50 = vld [vmem:[%s0 + $0x90] sm:$0xf]
  %v51 = vld [vmem:[%s0 + $0x94] sm:$0xf]
  %v52 = vld [vmem:[%s0 + $0x98] sm:$0xf]
  %v53 = vld [vmem:[%s0 + $0x9c] sm:$0xf]
  %v54 = vld [vmem:[%s0 + $0xa0] sm:$0xf]
  %v55 = vld [vmem:[%s0 + $0xa4] sm:$0xf]
  %v56 = vld [vmem:[%s0 + $0xa8] sm:$0xf]
  %v57 = vld [vmem:[%s0 + $0xac] sm:$0xf]
  %v58 = vld [vmem:[%s0 + $0xb0] sm:$0xf]
  %v59 = vld [vmem:[%s0 + $0xb4] sm:$0xf]
  %v60 = vld [vmem:[%s0 + $0xb8] sm:$0xf]
  %v61 = vld [vmem:[%s0 + $0xbc] sm:$0xf]
  %v62 = vld [vmem:[%s0 + $0xc0] sm:$0xf]
  %v63 = vld [vmem:[%s0 + $0xc4] sm:$0xf]
  %v64 = vld [vmem:[%s0 + $0xc8] sm:$0xf]
  %v65 = vld [vmem:[%s0 + $0xcc] sm:$0xf]
  %v66 = vld [vmem:[%s0 + $0xd0] sm:$0xf]
  %v67 = vld [vmem:[%s0 + $0xd4] sm:$0xf]
  %v68 = vld [vmem:[%s0 + $0xd8] sm:$0xf]
  %v69 = vld [vmem:[%s0 + $0xdc] sm:$0xf]
  %v70 = vld [vmem:[%s0 + $0xe0] sm:$0xf]
  %v71 = vld [vmem:[%s0 + $0xe4] sm:$0xf]
  %v72 = vld [vmem:[%s0 + $0xe8] sm:$0xf]
  %v73 = vld [vmem:[%s0 + $0xec] sm:$0xf]
  %v74 = vld [vmem:[%s0 + $0xf0] sm:$0xf]
  %v75 = vld [vmem:[%s0 + $0xf4] sm:$0xf]
  %v76 = vld [vmem:[%s0 + $0xf8] sm:$0xf]
  %v77 = vld [vmem:[%s0 + $0xfc] sm:$0xf]
  %v78 = vunpack.c.l.bf16 %v14
  %v79 = vunpack.c.l.bf16 %v15
  %v80 = vunpack.c.l.bf16 %v16
  %v81 = vunpack.c.l.bf16 %v17
  %v82 = vunpack.c.l.bf16 %v18
  %v83 = vunpack.c.l.bf16 %v19
  %v84 = vunpack.c.l.bf16 %v20
  %v85 = vunpack.c.l.bf16 %v21
  %v86 = vunpack.c.l.bf16 %v22
  %v87 = vunpack.c.l.bf16 %v23
  %v88 = vunpack.c.l.bf16 %v24
  %v89 = vunpack.c.l.bf16 %v25
  %v90 = vunpack.c.l.bf16 %v26
  %v91 = vunpack.c.l.bf16 %v27
  %v92 = vunpack.c.l.bf16 %v28
  %v93 = vunpack.c.l.bf16 %v29
  %v94 = vunpack.c.l.bf16 %v30
  %v95 = vunpack.c.l.bf16 %v31
  %v96 = vunpack.c.l.bf16 %v32
  %v97 = vunpack.c.l.bf16 %v33
  %v98 = vunpack.c.l.bf16 %v34
  %v99 = vunpack.c.l.bf16 %v35
  %v100 = vunpack.c.l.bf16 %v36
  %v101 = vunpack.c.l.bf16 %v37
  %v102 = vunpack.c.l.bf16 %v38
  %v103 = vunpack.c.l.bf16 %v39
  %v104 = vunpack.c.l.bf16 %v40
  %v105 = vunpack.c.l.bf16 %v41
  %v106 = vunpack.c.l.bf16 %v42
  %v107 = vunpack.c.l.bf16 %v43
  %v108 = vunpack.c.l.bf16 %v44
  %v109 = vunpack.c.l.bf16 %v45
  %v110 = vunpack.c.l.bf16 %v46
  %v111 = vunpack.c.l.bf16 %v47
  %v112 = vunpack.c.l.bf16 %v48
  %v113 = vunpack.c.l.bf16 %v49
  %v114 = vunpack.c.l.bf16 %v50
  %v115 = vunpack.c.l.bf16 %v51
  %v116 = vunpack.c.l.bf16 %v52
  %v117 = vunpack.c.l.bf16 %v53
  %v118 = vunpack.c.l.bf16 %v54
  %v119 = vunpack.c.l.bf16 %v55
  %v120 = vunpack.c.l.bf16 %v56
  %v121 = vunpack.c.l.bf16 %v57
  %v122 = vunpack.c.l.bf16 %v58
  %v123 = vunpack.c.l.bf16 %v59
  %v124 = vunpack.c.l.bf16 %v60
  %v125 = vunpack.c.l.bf16 %v61
  %v126 = vunpack.c.l.bf16 %v62
  %v127 = vunpack.c.l.bf16 %v63
  %v128 = vunpack.c.l.bf16 %v64
  %v129 = vunpack.c.l.bf16 %v65
  %v130 = vunpack.c.l.bf16 %v66
  %v131 = vunpack.c.l.bf16 %v67
  %v132 = vunpack.c.l.bf16 %v68
  %v133 = vunpack.c.l.bf16 %v69
  %v134 = vunpack.c.l.bf16 %v70
  %v135 = vunpack.c.l.bf16 %v71
  %v136 = vunpack.c.l.bf16 %v72
  %v137 = vunpack.c.l.bf16 %v73
  %v138 = vunpack.c.l.bf16 %v74
  %v139 = vunpack.c.l.bf16 %v75
  %v140 = vunpack.c.l.bf16 %v76
  %v141 = vunpack.c.l.bf16 %v77
  %v142 = vld [vmem:[%s1] sm:$0x1]
  %v144 = vlaneseq
  %v145 = vshrl.u32 %v144, 7
  %v146 = vsub.s32 0, %v145
  %v147 = vrot.slane %v142, %v146
  %v149 = vmul.f32 %v78, %v147
  %v150 = vmul.f32 %v79, %v147
  %v151 = vmul.f32 %v80, %v147
  %v152 = vmul.f32 %v81, %v147
  %v153 = vmul.f32 %v82, %v147
  %v154 = vmul.f32 %v83, %v147
  %v155 = vmul.f32 %v84, %v147
  %v156 = vmul.f32 %v85, %v147
  %v157 = vmul.f32 %v86, %v147
  %v158 = vmul.f32 %v87, %v147
  %v159 = vmul.f32 %v88, %v147
  %v160 = vmul.f32 %v89, %v147
  %v161 = vmul.f32 %v90, %v147
  %v162 = vmul.f32 %v91, %v147
  %v163 = vmul.f32 %v92, %v147
  %v164 = vmul.f32 %v93, %v147
  %v165 = vmul.f32 %v94, %v147
  %v166 = vmul.f32 %v95, %v147
  %v167 = vmul.f32 %v96, %v147
  %v168 = vmul.f32 %v97, %v147
  %v169 = vmul.f32 %v98, %v147
  %v170 = vmul.f32 %v99, %v147
  %v171 = vmul.f32 %v100, %v147
  %v172 = vmul.f32 %v101, %v147
  %v173 = vmul.f32 %v102, %v147
  %v174 = vmul.f32 %v103, %v147
  %v175 = vmul.f32 %v104, %v147
  %v176 = vmul.f32 %v105, %v147
  %v177 = vmul.f32 %v106, %v147
  %v178 = vmul.f32 %v107, %v147
  %v179 = vmul.f32 %v108, %v147
  %v180 = vmul.f32 %v109, %v147
  %v181 = vmul.f32 %v110, %v147
  %v182 = vmul.f32 %v111, %v147
  %v183 = vmul.f32 %v112, %v147
  %v184 = vmul.f32 %v113, %v147
  %v185 = vmul.f32 %v114, %v147
  %v186 = vmul.f32 %v115, %v147
  %v187 = vmul.f32 %v116, %v147
  %v188 = vmul.f32 %v117, %v147
  %v189 = vmul.f32 %v118, %v147
  %v190 = vmul.f32 %v119, %v147
  %v191 = vmul.f32 %v120, %v147
  %v192 = vmul.f32 %v121, %v147
  %v193 = vmul.f32 %v122, %v147
  %v194 = vmul.f32 %v123, %v147
  %v195 = vmul.f32 %v124, %v147
  %v196 = vmul.f32 %v125, %v147
  %v197 = vmul.f32 %v126, %v147
  %v198 = vmul.f32 %v127, %v147
  %v199 = vmul.f32 %v128, %v147
  %v200 = vmul.f32 %v129, %v147
  %v201 = vmul.f32 %v130, %v147
  %v202 = vmul.f32 %v131, %v147
  %v203 = vmul.f32 %v132, %v147
  %v204 = vmul.f32 %v133, %v147
  %v205 = vmul.f32 %v134, %v147
  %v206 = vmul.f32 %v135, %v147
  %v207 = vmul.f32 %v136, %v147
  %v208 = vmul.f32 %v137, %v147
  %v209 = vmul.f32 %v138, %v147
  %v210 = vmul.f32 %v139, %v147
  %v211 = vmul.f32 %v140, %v147
  %v212 = vmul.f32 %v141, %v147
  %v213 = vld [vmem:[%s2] sm:$0x1]
  %v215 = vlaneseq
  %v216 = vshrl.u32 %v215, 7
  %v217 = vsub.s32 0, %v216
  %v218 = vrot.slane %v213, %v217
  %v220 = vadd.f32 %v149, %v218
  %v221 = vadd.f32 %v150, %v218
  %v222 = vadd.f32 %v151, %v218
  %v223 = vadd.f32 %v152, %v218
  %v224 = vadd.f32 %v153, %v218
  %v225 = vadd.f32 %v154, %v218
  %v226 = vadd.f32 %v155, %v218
  %v227 = vadd.f32 %v156, %v218
  %v228 = vadd.f32 %v157, %v218
  %v229 = vadd.f32 %v158, %v218
  %v230 = vadd.f32 %v159, %v218
  %v231 = vadd.f32 %v160, %v218
  %v232 = vadd.f32 %v161, %v218
  %v233 = vadd.f32 %v162, %v218
  %v234 = vadd.f32 %v163, %v218
  %v235 = vadd.f32 %v164, %v218
  %v236 = vadd.f32 %v165, %v218
  %v237 = vadd.f32 %v166, %v218
  %v238 = vadd.f32 %v167, %v218
  %v239 = vadd.f32 %v168, %v218
  %v240 = vadd.f32 %v169, %v218
  %v241 = vadd.f32 %v170, %v218
  %v242 = vadd.f32 %v171, %v218
  %v243 = vadd.f32 %v172, %v218
  %v244 = vadd.f32 %v173, %v218
  %v245 = vadd.f32 %v174, %v218
  %v246 = vadd.f32 %v175, %v218
  %v247 = vadd.f32 %v176, %v218
  %v248 = vadd.f32 %v177, %v218
  %v249 = vadd.f32 %v178, %v218
  %v250 = vadd.f32 %v179, %v218
  %v251 = vadd.f32 %v180, %v218
  %v252 = vadd.f32 %v181, %v218
  %v253 = vadd.f32 %v182, %v218
  %v254 = vadd.f32 %v183, %v218
  %v255 = vadd.f32 %v184, %v218
  %v256 = vadd.f32 %v185, %v218
  %v257 = vadd.f32 %v186, %v218
  %v258 = vadd.f32 %v187, %v218
  %v259 = vadd.f32 %v188, %v218
  %v260 = vadd.f32 %v189, %v218
  %v261 = vadd.f32 %v190, %v218
  %v262 = vadd.f32 %v191, %v218
  %v263 = vadd.f32 %v192, %v218
  %v264 = vadd.f32 %v193, %v218
  %v265 = vadd.f32 %v194, %v218
  %v266 = vadd.f32 %v195, %v218
  %v267 = vadd.f32 %v196, %v218
  %v268 = vadd.f32 %v197, %v218
  %v269 = vadd.f32 %v198, %v218
  %v270 = vadd.f32 %v199, %v218
  %v271 = vadd.f32 %v200, %v218
  %v272 = vadd.f32 %v201, %v218
  %v273 = vadd.f32 %v202, %v218
  %v274 = vadd.f32 %v203, %v218
  %v275 = vadd.f32 %v204, %v218
  %v276 = vadd.f32 %v205, %v218
  %v277 = vadd.f32 %v206, %v218
  %v278 = vadd.f32 %v207, %v218
  %v279 = vadd.f32 %v208, %v218
  %v280 = vadd.f32 %v209, %v218
  %v281 = vadd.f32 %v210, %v218
  %v282 = vadd.f32 %v211, %v218
  %v283 = vadd.f32 %v212, %v218
  %v284 = vmax.f32 %v220, 0.0
  %v285 = vmax.f32 %v221, 0.0
  %v286 = vmax.f32 %v222, 0.0
  %v287 = vmax.f32 %v223, 0.0
  %v288 = vmax.f32 %v224, 0.0
  %v289 = vmax.f32 %v225, 0.0
  %v290 = vmax.f32 %v226, 0.0
  %v291 = vmax.f32 %v227, 0.0
  %v292 = vmax.f32 %v228, 0.0
  %v293 = vmax.f32 %v229, 0.0
  %v294 = vmax.f32 %v230, 0.0
  %v295 = vmax.f32 %v231, 0.0
  %v296 = vmax.f32 %v232, 0.0
  %v297 = vmax.f32 %v233, 0.0
  %v298 = vmax.f32 %v234, 0.0
  %v299 = vmax.f32 %v235, 0.0
  %v300 = vmax.f32 %v236, 0.0
  %v301 = vmax.f32 %v237, 0.0
  %v302 = vmax.f32 %v238, 0.0
  %v303 = vmax.f32 %v239, 0.0
  %v304 = vmax.f32 %v240, 0.0
  %v305 = vmax.f32 %v241, 0.0
  %v306 = vmax.f32 %v242, 0.0
  %v307 = vmax.f32 %v243, 0.0
  %v308 = vmax.f32 %v244, 0.0
  %v309 = vmax.f32 %v245, 0.0
  %v310 = vmax.f32 %v246, 0.0
  %v311 = vmax.f32 %v247, 0.0
  %v312 = vmax.f32 %v248, 0.0
  %v313 = vmax.f32 %v249, 0.0
  %v314 = vmax.f32 %v250, 0.0
  %v315 = vmax.f32 %v251, 0.0
  %v316 = vmax.f32 %v252, 0.0
  %v317 = vmax.f32 %v253, 0.0
  %v318 = vmax.f32 %v254, 0.0
  %v319 = vmax.f32 %v255, 0.0
  %v320 = vmax.f32 %v256, 0.0
  %v321 = vmax.f32 %v257, 0.0
  %v322 = vmax.f32 %v258, 0.0
  %v323 = vmax.f32 %v259, 0.0
  %v324 = vmax.f32 %v260, 0.0
  %v325 = vmax.f32 %v261, 0.0
  %v326 = vmax.f32 %v262, 0.0
  %v327 = vmax.f32 %v263, 0.0
  %v328 = vmax.f32 %v264, 0.0
  %v329 = vmax.f32 %v265, 0.0
  %v330 = vmax.f32 %v266, 0.0
  %v331 = vmax.f32 %v267, 0.0
  %v332 = vmax.f32 %v268, 0.0
  %v333 = vmax.f32 %v269, 0.0
  %v334 = vmax.f32 %v270, 0.0
  %v335 = vmax.f32 %v271, 0.0
  %v336 = vmax.f32 %v272, 0.0
  %v337 = vmax.f32 %v273, 0.0
  %v338 = vmax.f32 %v274, 0.0
  %v339 = vmax.f32 %v275, 0.0
  %v340 = vmax.f32 %v276, 0.0
  %v341 = vmax.f32 %v277, 0.0
  %v342 = vmax.f32 %v278, 0.0
  %v343 = vmax.f32 %v279, 0.0
  %v344 = vmax.f32 %v280, 0.0
  %v345 = vmax.f32 %v281, 0.0
  %v346 = vmax.f32 %v282, 0.0
  %v347 = vmax.f32 %v283, 0.0
  %v348 = vpack.c.bf16 %v285, %v284
  %v349 = vpack.c.bf16 %v287, %v286
  %v350 = vpack.c.bf16 %v289, %v288
  %v351 = vpack.c.bf16 %v291, %v290
  %v352 = vpack.c.bf16 %v293, %v292
  %v353 = vpack.c.bf16 %v295, %v294
  %v354 = vpack.c.bf16 %v297, %v296
  %v355 = vpack.c.bf16 %v299, %v298
  %v356 = vpack.c.bf16 %v301, %v300
  %v357 = vpack.c.bf16 %v303, %v302
  %v358 = vpack.c.bf16 %v305, %v304
  %v359 = vpack.c.bf16 %v307, %v306
  %v360 = vpack.c.bf16 %v309, %v308
  %v361 = vpack.c.bf16 %v311, %v310
  %v362 = vpack.c.bf16 %v313, %v312
  %v363 = vpack.c.bf16 %v315, %v314
  %v364 = vpack.c.bf16 %v317, %v316
  %v365 = vpack.c.bf16 %v319, %v318
  %v366 = vpack.c.bf16 %v321, %v320
  %v367 = vpack.c.bf16 %v323, %v322
  %v368 = vpack.c.bf16 %v325, %v324
  %v369 = vpack.c.bf16 %v327, %v326
  %v370 = vpack.c.bf16 %v329, %v328
  %v371 = vpack.c.bf16 %v331, %v330
  %v372 = vpack.c.bf16 %v333, %v332
  %v373 = vpack.c.bf16 %v335, %v334
  %v374 = vpack.c.bf16 %v337, %v336
  %v375 = vpack.c.bf16 %v339, %v338
  %v376 = vpack.c.bf16 %v341, %v340
  %v377 = vpack.c.bf16 %v343, %v342
  %v378 = vpack.c.bf16 %v345, %v344
  %v379 = vpack.c.bf16 %v347, %v346
  %v412 = vunpack.c.l.b16 %v348
  %v413 = vunpack.c.h.b16 %v348
  %v414 = vunpack.c.l.b16 %v349
  %v415 = vunpack.c.h.b16 %v349
  %v416 = vunpack.c.l.b16 %v350
  %v417 = vunpack.c.h.b16 %v350
  %v418 = vunpack.c.l.b16 %v351
  %v419 = vunpack.c.h.b16 %v351
  %v420 = vunpack.c.l.b16 %v352
  %v421 = vunpack.c.h.b16 %v352
  %v422 = vunpack.c.l.b16 %v353
  %v423 = vunpack.c.h.b16 %v353
  %v424 = vunpack.c.l.b16 %v354
  %v425 = vunpack.c.h.b16 %v354
  %v426 = vunpack.c.l.b16 %v355
  %v427 = vunpack.c.h.b16 %v355
  %v428 = vunpack.c.l.b16 %v356
  %v429 = vunpack.c.h.b16 %v356
  %v430 = vunpack.c.l.b16 %v357
  %v431 = vunpack.c.h.b16 %v357
  %v432 = vunpack.c.l.b16 %v358
  %v433 = vunpack.c.h.b16 %v358
  %v434 = vunpack.c.l.b16 %v359
  %v435 = vunpack.c.h.b16 %v359
  %v436 = vunpack.c.l.b16 %v360
  %v437 = vunpack.c.h.b16 %v360
  %v438 = vunpack.c.l.b16 %v361
  %v439 = vunpack.c.h.b16 %v361
  %v440 = vunpack.c.l.b16 %v362
  %v441 = vunpack.c.h.b16 %v362
  %v442 = vunpack.c.l.b16 %v363
  %v443 = vunpack.c.h.b16 %v363
  %v444 = vunpack.c.l.b16 %v364
  %v445 = vunpack.c.h.b16 %v364
  %v446 = vunpack.c.l.b16 %v365
  %v447 = vunpack.c.h.b16 %v365
  %v448 = vunpack.c.l.b16 %v366
  %v449 = vunpack.c.h.b16 %v366
  %v450 = vunpack.c.l.b16 %v367
  %v451 = vunpack.c.h.b16 %v367
  %v452 = vunpack.c.l.b16 %v368
  %v453 = vunpack.c.h.b16 %v368
  %v454 = vunpack.c.l.b16 %v369
  %v455 = vunpack.c.h.b16 %v369
  %v456 = vunpack.c.l.b16 %v370
  %v457 = vunpack.c.h.b16 %v370
  %v458 = vunpack.c.l.b16 %v371
  %v459 = vunpack.c.h.b16 %v371
  %v460 = vunpack.c.l.b16 %v372
  %v461 = vunpack.c.h.b16 %v372
  %v462 = vunpack.c.l.b16 %v373
  %v463 = vunpack.c.h.b16 %v373
  %v464 = vunpack.c.l.b16 %v374
  %v465 = vunpack.c.h.b16 %v374
  %v466 = vunpack.c.l.b16 %v375
  %v467 = vunpack.c.h.b16 %v375
  %v468 = vunpack.c.l.b16 %v376
  %v469 = vunpack.c.h.b16 %v376
  %v470 = vunpack.c.l.b16 %v377
  %v471 = vunpack.c.h.b16 %v377
  %v472 = vunpack.c.l.b16 %v378
  %v473 = vunpack.c.h.b16 %v378
  %v474 = vunpack.c.l.b16 %v379
  %v475 = vunpack.c.h.b16 %v379
  %v476 = vpack.c.b16 %v412, %v412
  %v477 = vpack.c.b16 %v413, %v413
  %v478 = vpack.c.b16 %v414, %v414
  %v479 = vpack.c.b16 %v415, %v415
  %v480 = vpack.c.b16 %v416, %v416
  %v481 = vpack.c.b16 %v417, %v417
  %v482 = vpack.c.b16 %v418, %v418
  %v483 = vpack.c.b16 %v419, %v419
  %v484 = vpack.c.b16 %v420, %v420
  %v485 = vpack.c.b16 %v421, %v421
  %v486 = vpack.c.b16 %v422, %v422
  %v487 = vpack.c.b16 %v423, %v423
  %v488 = vpack.c.b16 %v424, %v424
  %v489 = vpack.c.b16 %v425, %v425
  %v490 = vpack.c.b16 %v426, %v426
  %v491 = vpack.c.b16 %v427, %v427
  %v492 = vpack.c.b16 %v428, %v428
  %v493 = vpack.c.b16 %v429, %v429
  %v494 = vpack.c.b16 %v430, %v430
  %v495 = vpack.c.b16 %v431, %v431
  %v496 = vpack.c.b16 %v432, %v432
  %v497 = vpack.c.b16 %v433, %v433
  %v498 = vpack.c.b16 %v434, %v434
  %v499 = vpack.c.b16 %v435, %v435
  %v500 = vpack.c.b16 %v436, %v436
  %v501 = vpack.c.b16 %v437, %v437
  %v502 = vpack.c.b16 %v438, %v438
  %v503 = vpack.c.b16 %v439, %v439
  %v504 = vpack.c.b16 %v440, %v440
  %v505 = vpack.c.b16 %v441, %v441
  %v506 = vpack.c.b16 %v442, %v442
  %v507 = vpack.c.b16 %v443, %v443
  %v508 = vpack.c.b16 %v444, %v444
  %v509 = vpack.c.b16 %v445, %v445
  %v510 = vpack.c.b16 %v446, %v446
  %v511 = vpack.c.b16 %v447, %v447
  %v512 = vpack.c.b16 %v448, %v448
  %v513 = vpack.c.b16 %v449, %v449
  %v514 = vpack.c.b16 %v450, %v450
  %v515 = vpack.c.b16 %v451, %v451
  %v516 = vpack.c.b16 %v452, %v452
  %v517 = vpack.c.b16 %v453, %v453
  %v518 = vpack.c.b16 %v454, %v454
  %v519 = vpack.c.b16 %v455, %v455
  %v520 = vpack.c.b16 %v456, %v456
  %v521 = vpack.c.b16 %v457, %v457
  %v522 = vpack.c.b16 %v458, %v458
  %v523 = vpack.c.b16 %v459, %v459
  %v524 = vpack.c.b16 %v460, %v460
  %v525 = vpack.c.b16 %v461, %v461
  %v526 = vpack.c.b16 %v462, %v462
  %v527 = vpack.c.b16 %v463, %v463
  %v528 = vpack.c.b16 %v464, %v464
  %v529 = vpack.c.b16 %v465, %v465
  %v530 = vpack.c.b16 %v466, %v466
  %v531 = vpack.c.b16 %v467, %v467
  %v532 = vpack.c.b16 %v468, %v468
  %v533 = vpack.c.b16 %v469, %v469
  %v534 = vpack.c.b16 %v470, %v470
  %v535 = vpack.c.b16 %v471, %v471
  %v536 = vpack.c.b16 %v472, %v472
  %v537 = vpack.c.b16 %v473, %v473
  %v538 = vpack.c.b16 %v474, %v474
  %v539 = vpack.c.b16 %v475, %v475
  %604 = vst [vmem:[%s3] sm:$0xf] %v476
  %605 = vst [vmem:[%s3 + $0x4] sm:$0xf] %v477
  %606 = vst [vmem:[%s3 + $0x8] sm:$0xf] %v478
  %607 = vst [vmem:[%s3 + $0xc] sm:$0xf] %v479
  %608 = vst [vmem:[%s3 + $0x10] sm:$0xf] %v480
  %609 = vst [vmem:[%s3 + $0x14] sm:$0xf] %v481
  %610 = vst [vmem:[%s3 + $0x18] sm:$0xf] %v482
  %611 = vst [vmem:[%s3 + $0x1c] sm:$0xf] %v483
  %612 = vst [vmem:[%s3 + $0x20] sm:$0xf] %v484
  %613 = vst [vmem:[%s3 + $0x24] sm:$0xf] %v485
  %614 = vst [vmem:[%s3 + $0x28] sm:$0xf] %v486
  %615 = vst [vmem:[%s3 + $0x2c] sm:$0xf] %v487
  %616 = vst [vmem:[%s3 + $0x30] sm:$0xf] %v488
  %617 = vst [vmem:[%s3 + $0x34] sm:$0xf] %v489
  %618 = vst [vmem:[%s3 + $0x38] sm:$0xf] %v490
  %619 = vst [vmem:[%s3 + $0x3c] sm:$0xf] %v491
  %620 = vst [vmem:[%s3 + $0x40] sm:$0xf] %v492
  %621 = vst [vmem:[%s3 + $0x44] sm:$0xf] %v493
  %622 = vst [vmem:[%s3 + $0x48] sm:$0xf] %v494
  %623 = vst [vmem:[%s3 + $0x4c] sm:$0xf] %v495
  %624 = vst [vmem:[%s3 + $0x50] sm:$0xf] %v496
  %625 = vst [vmem:[%s3 + $0x54] sm:$0xf] %v497
  %626 = vst [vmem:[%s3 + $0x58] sm:$0xf] %v498
  %627 = vst [vmem:[%s3 + $0x5c] sm:$0xf] %v499
  %628 = vst [vmem:[%s3 + $0x60] sm:$0xf] %v500
  %629 = vst [vmem:[%s3 + $0x64] sm:$0xf] %v501
  %630 = vst [vmem:[%s3 + $0x68] sm:$0xf] %v502
  %631 = vst [vmem:[%s3 + $0x6c] sm:$0xf] %v503
  %632 = vst [vmem:[%s3 + $0x70] sm:$0xf] %v504
  %633 = vst [vmem:[%s3 + $0x74] sm:$0xf] %v505
  %634 = vst [vmem:[%s3 + $0x78] sm:$0xf] %v506
  %635 = vst [vmem:[%s3 + $0x7c] sm:$0xf] %v507
  %636 = vst [vmem:[%s3 + $0x80] sm:$0xf] %v508
  %637 = vst [vmem:[%s3 + $0x84] sm:$0xf] %v509
  %638 = vst [vmem:[%s3 + $0x88] sm:$0xf] %v510
  %639 = vst [vmem:[%s3 + $0x8c] sm:$0xf] %v511
  %640 = vst [vmem:[%s3 + $0x90] sm:$0xf] %v512
  %641 = vst [vmem:[%s3 + $0x94] sm:$0xf] %v513
  %642 = vst [vmem:[%s3 + $0x98] sm:$0xf] %v514
  %643 = vst [vmem:[%s3 + $0x9c] sm:$0xf] %v515
  %644 = vst [vmem:[%s3 + $0xa0] sm:$0xf] %v516
  %645 = vst [vmem:[%s3 + $0xa4] sm:$0xf] %v517
  %646 = vst [vmem:[%s3 + $0xa8] sm:$0xf] %v518
  %647 = vst [vmem:[%s3 + $0xac] sm:$0xf] %v519
  %648 = vst [vmem:[%s3 + $0xb0] sm:$0xf] %v520
  %649 = vst [vmem:[%s3 + $0xb4] sm:$0xf] %v521
  %650 = vst [vmem:[%s3 + $0xb8] sm:$0xf] %v522
  %651 = vst [vmem:[%s3 + $0xbc] sm:$0xf] %v523
  %652 = vst [vmem:[%s3 + $0xc0] sm:$0xf] %v524
  %653 = vst [vmem:[%s3 + $0xc4] sm:$0xf] %v525
  %654 = vst [vmem:[%s3 + $0xc8] sm:$0xf] %v526
  %655 = vst [vmem:[%s3 + $0xcc] sm:$0xf] %v527
  %656 = vst [vmem:[%s3 + $0xd0] sm:$0xf] %v528
  %657 = vst [vmem:[%s3 + $0xd4] sm:$0xf] %v529
  %658 = vst [vmem:[%s3 + $0xd8] sm:$0xf] %v530
  %659 = vst [vmem:[%s3 + $0xdc] sm:$0xf] %v531
  %660 = vst [vmem:[%s3 + $0xe0] sm:$0xf] %v532
  %661 = vst [vmem:[%s3 + $0xe4] sm:$0xf] %v533
  %662 = vst [vmem:[%s3 + $0xe8] sm:$0xf] %v534
  %663 = vst [vmem:[%s3 + $0xec] sm:$0xf] %v535
  %664 = vst [vmem:[%s3 + $0xf0] sm:$0xf] %v536
  %665 = vst [vmem:[%s3 + $0xf4] sm:$0xf] %v537
  %666 = vst [vmem:[%s3 + $0xf8] sm:$0xf] %v538
  %667 = vst [vmem:[%s3 + $0xfc] sm:$0xf] %v539
  // Predicated region
  $region14: #{generator_forward.6} parent=0 // pred_check
    _
  $region15: #{generator_forward.6} parent=0 // pred_check_branch
    %669 = sbr.rel (0) target = $region17
  $region16: #{generator_forward.6} parent=0 // pred_region
    _
  $region17: #{generator_forward.6} parent=0 // pred_fallthru
    _
  // Predicated region
  $region18: #{generator_forward.6} parent=0 // pred_check
    _
  $region19: #{generator_forward.6} parent=0 // pred_check_branch
    %671 = sbr.rel (0) target = $region21
  $region20: #{generator_forward.6} parent=0 // pred_region
    _
  $region21: #{generator_forward.6} parent=0 // pred_fallthru
    _

// kernel: generator_forward.8
$region0: #{generator_forward.8}
  #allocation0 [shape = 'u32[]', space=smem, size = 0x4, offset = 0x4, fixed_abs, tag = 'smem constant byte address 0x4 - core index']
  #allocation1 [shape = 'u32[144,128]{1,0:T(1,128)}', space=vmem, size = 0x12000, scoped, tag = 'internal scratch']
  %s0 = inlined_call_operand.vmem [shape: bf16[2048,128], index: 0, kind: input, shape index: {}]
  %s1 = inlined_call_operand.vmem [shape: f32[1,128], index: 1, kind: input, shape index: {}]
  %s2 = inlined_call_operand.vmem [shape: f32[1,128], index: 2, kind: input, shape index: {}]
  %s3 = inlined_call_operand.vmem [shape: bf16[2048,128], index: 3, kind: output, shape index: {}]
  %s4 = sld [smem:[#allocation0]]
  $region45: #{generator_forward.8} parent=0
    _
  %s6 = ssub.s32 1, %s4
  %s7 = scalar_select 0, %s6, %s4
  loop: start=0, step=1, limit=4
  $region2: #{generator_forward.8} parent=0 // loop_pre_header
    _
  $region3: #{generator_forward.8} parent=0 // loop_header
    %s9 = sphi 0, %s13
    %p10 = scmp.ge.s32.totalorder %s9, 4
    %s19 = sphi 0, %s21
    %s22 = sphi 0, %s19
    %s23 = sphi 0, %s22
    %s39 = sphi 0, %s23
    %s43 = sphi 0, %s43
    %s45 = sphi 0, %s43
    %s46 = sphi 0, %s45
    %s60 = sphi 0, %s46
    %s64 = sphi 0, %s64
    %s66 = sphi 0, %s64
    %s67 = sphi 0, %s66
    %s81 = sphi 0, %s67
    %s87 = sphi 0, %s89
    %s90 = sphi 0, %s87
    %s91 = sphi 0, %s90
    %s107 = sphi 0, %s91
  $region4: #{generator_forward.8} parent=0 // loop_header_branch
    %12 = sbr.rel (%p10) target = $region8
  $region5: #{generator_forward.8} parent=0 // loop_body
    %s14 = ssub.s32 %s9, 1
    %s15 = ssub.s32 %s9, 2
    %s16 = sadd.s32 %s9, 1
    %s17 = ssub.s32 %s9, %s16
    %p18 = scmp.eq.s32.totalorder %s17, 0
    %s20 = sadd.s32 %s19, 1
    %s21 = scalar_select %p18, %s19, %s20
    %p24 = pneg %p18
    %p25 = scmp.eq.s32.totalorder %s9, 1
    %p26 = por %p24, %p25
    %p27 = scmp.ne.s32.totalorder %s19, %s22
    %p28 = scmp.eq.s32.totalorder %s9, 0
    %p29 = por %p27, %p28
    %p30 = scmp.ne.s32.totalorder %s19, %s22
    %p31 = scmp.eq.s32.totalorder %s14, 1
    %p32 = por %p30, %p31
    %p33 = scmp.ne.s32.totalorder %s22, %s23
    %p34 = scmp.eq.s32.totalorder %s14, 0
    %p35 = por %p33, %p34
    %p36 = scmp.ne.s32.totalorder %s22, %s23
    %p37 = scmp.eq.s32.totalorder %s15, 1
    %p38 = por %p36, %p37
    %p40 = scmp.ne.s32.totalorder %s23, %s39
    %p41 = scmp.eq.s32.totalorder %s15, 0
    %p42 = por %p40, %p41
    %s44 = sadd.s32 %s43, 1
    %p47 = scmp.eq.s32.totalorder %s9, 1
    %p48 = scmp.ne.s32.totalorder %s43, %s45
    %p49 = scmp.eq.s32.totalorder %s9, 0
    %p50 = por %p48, %p49
    %p51 = scmp.ne.s32.totalorder %s43, %s45
    %p52 = scmp.eq.s32.totalorder %s14, 1
    %p53 = por %p51, %p52
    %p54 = scmp.ne.s32.totalorder %s45, %s46
    %p55 = scmp.eq.s32.totalorder %s14, 0
    %p56 = por %p54, %p55
    %p57 = scmp.ne.s32.totalorder %s45, %s46
    %p58 = scmp.eq.s32.totalorder %s15, 1
    %p59 = por %p57, %p58
    %p61 = scmp.ne.s32.totalorder %s46, %s60
    %p62 = scmp.eq.s32.totalorder %s15, 0
    %p63 = por %p61, %p62
    %s65 = sadd.s32 %s64, 1
    %p68 = scmp.eq.s32.totalorder %s9, 1
    %p69 = scmp.ne.s32.totalorder %s64, %s66
    %p70 = scmp.eq.s32.totalorder %s9, 0
    %p71 = por %p69, %p70
    %p72 = scmp.ne.s32.totalorder %s64, %s66
    %p73 = scmp.eq.s32.totalorder %s14, 1
    %p74 = por %p72, %p73
    %p75 = scmp.ne.s32.totalorder %s66, %s67
    %p76 = scmp.eq.s32.totalorder %s14, 0
    %p77 = por %p75, %p76
    %p78 = scmp.ne.s32.totalorder %s66, %s67
    %p79 = scmp.eq.s32.totalorder %s15, 1
    %p80 = por %p78, %p79
    %p82 = scmp.ne.s32.totalorder %s67, %s81
    %p83 = scmp.eq.s32.totalorder %s15, 0
    %p84 = por %p82, %p83
    %s85 = ssub.s32 %s9, %s16
    %p86 = scmp.eq.s32.totalorder %s85, 0
    %s88 = sadd.s32 %s87, 1
    %s89 = scalar_select %p86, %s87, %s88
    %p92 = pneg %p86
    %p93 = scmp.eq.s32.totalorder %s9, 1
    %p94 = por %p92, %p93
    %p95 = scmp.ne.s32.totalorder %s87, %s90
    %p96 = scmp.eq.s32.totalorder %s9, 0
    %p97 = por %p95, %p96
    %p98 = scmp.ne.s32.totalorder %s87, %s90
    %p99 = scmp.eq.s32.totalorder %s14, 1
    %p100 = por %p98, %p99
    %p101 = scmp.ne.s32.totalorder %s90, %s91
    %p102 = scmp.eq.s32.totalorder %s14, 0
    %p103 = por %p101, %p102
    %p104 = scmp.ne.s32.totalorder %s90, %s91
    %p105 = scmp.eq.s32.totalorder %s15, 1
    %p106 = por %p104, %p105
    %p108 = scmp.ne.s32.totalorder %s91, %s107
    %p109 = scmp.eq.s32.totalorder %s15, 0
    %p110 = por %p108, %p109
    %p111 = scmp.le.s32.totalorder 1, %s9
    %p112 = scmp.lt.s32.totalorder %s9, 3
    %p113 = pnand %p111, %p112
    %p114 = pneg %p113
    // Predicated region
    $region9: #{generator_forward.8} parent=5 // pred_check
      _
    $region10: #{generator_forward.8} parent=5 // pred_check_branch
      %116 = sbr.rel (%p113) target = $region12
    $region11: #{generator_forward.8} parent=5 // pred_region
      %s117 = ssub.s32 %s9, 1
      // Predicated region
      $region13: #{generator_forward.8} parent=11 // pred_check
        %p118 = pneg %p56
      $region14: #{generator_forward.8} parent=11 // pred_check_branch
        %120 = sbr.rel (%p118) target = $region16
      $region15: #{generator_forward.8} parent=11 // pred_region
        _
      $region16: #{generator_forward.8} parent=11 // pred_fallthru
        _
      // Predicated region
      $region17: #{generator_forward.8} parent=11 // pred_check
        %p121 = pneg %p77
      $region18: #{generator_forward.8} parent=11 // pred_check_branch
        %123 = sbr.rel (%p121) target = $region20
      $region19: #{generator_forward.8} parent=11 // pred_region
        _
      $region20: #{generator_forward.8} parent=11 // pred_fallthru
        _
    $region12: #{generator_forward.8} parent=5 // pred_fallthru
      _
    %p124 = scmp.lt.s32.totalorder %s9, 2
    // Predicated region
    $region21: #{generator_forward.8} parent=5 // pred_check
      %p125 = pneg %p124
    $region22: #{generator_forward.8} parent=5 // pred_check_branch
      %127 = sbr.rel (%p125) target = $region24
    $region23: #{generator_forward.8} parent=5 // pred_region
      // Predicated region
      $region25: #{generator_forward.8} parent=23 // pred_check
        %p128 = pneg %p29
      $region26: #{generator_forward.8} parent=23 // pred_check_branch
        %130 = sbr.rel (%p128) target = $region28
      $region27: #{generator_forward.8} parent=23 // pred_region
        %s131 = smul.u32 128, %s9
        %p132 = scmp.lt.s32.totalorder %s131, 255
        %s133 = scalar_select %p132, %s131, 255
        %s134 = smul.addr %s133, 4
        %s135 = scalar_lea.vmem %s0, %s134
        %s136 = smul.u32 128, %s9
      $region28: #{generator_forward.8} parent=23 // pred_fallthru
        _
    $region24: #{generator_forward.8} parent=5 // pred_fallthru
      _
    %p137 = scmp.le.s32.totalorder 1, %s9
    %p138 = scmp.lt.s32.totalorder %s9, 3
    %p139 = pnand %p137, %p138
    %p140 = pneg %p139
    // Predicated region
    $region29: #{generator_forward.8} parent=5 // pred_check
      _
    $region30: #{generator_forward.8} parent=5 // pred_check_branch
      %142 = sbr.rel (%p139) target = $region32
    $region31: #{generator_forward.8} parent=5 // pred_region
      %s143 = ssub.s32 %s9, 1
      %s144 = smul.u32 128, %s14
      %p145 = scmp.lt.s32.totalorder %s144, 255
      %s146 = scalar_select %p145, %s144, 255
      %s147 = smul.addr %s146, 4
      %s148 = scalar_lea.vmem %s0, %s147
      %p149 = pneg %p35
      %p150 = pneg %p32
      %p151 = pneg %p56
      %p152 = pneg %p53
      %p153 = pneg %p77
      %p154 = pneg %p74
      %p155 = pneg %p103
      %p156 = pneg %p100
      %s157 = smul.u32 128, %s14
      %p158 = scmp.lt.s32.totalorder %s157, 255
      %s159 = scalar_select %p158, %s157, 255
      %s160 = smul.addr %s159, 4
      %s161 = scalar_lea.vmem %s3, %s160
      %s162 = smul.u32 128, %s14
      %p163 = scmp.lt.s32.totalorder %s162, 255
      %s164 = scalar_select %p163, %s162, 255
      %s165 = smul.addr %s164, 4
      %s166 = scalar_lea.vmem %s0, %s165
      %s167 = smul.u32 128, %s14
      %s168 = smul.u32 128, %s14
      %p169 = scmp.lt.s32.totalorder %s168, 255
      %s170 = scalar_select %p169, %s168, 255
      %s171 = smul.addr %s170, 4
      %s172 = scalar_lea.vmem %s3, %s171
      %s173 = smul.u32 128, %s14
      %v174 = vld [vmem:[%s166] sm:$0xf]
      %v175 = vld [vmem:[%s166 + $0x4] sm:$0xf]
      %v176 = vld [vmem:[%s166 + $0x8] sm:$0xf]
      %v177 = vld [vmem:[%s166 + $0xc] sm:$0xf]
      %v178 = vld [vmem:[%s166 + $0x10] sm:$0xf]
      %v179 = vld [vmem:[%s166 + $0x14] sm:$0xf]
      %v180 = vld [vmem:[%s166 + $0x18] sm:$0xf]
      %v181 = vld [vmem:[%s166 + $0x1c] sm:$0xf]
      %v182 = vld [vmem:[%s166 + $0x20] sm:$0xf]
      %v183 = vld [vmem:[%s166 + $0x24] sm:$0xf]
      %v184 = vld [vmem:[%s166 + $0x28] sm:$0xf]
      %v185 = vld [vmem:[%s166 + $0x2c] sm:$0xf]
      %v186 = vld [vmem:[%s166 + $0x30] sm:$0xf]
      %v187 = vld [vmem:[%s166 + $0x34] sm:$0xf]
      %v188 = vld [vmem:[%s166 + $0x38] sm:$0xf]
      %v189 = vld [vmem:[%s166 + $0x3c] sm:$0xf]
      %v190 = vld [vmem:[%s166 + $0x40] sm:$0xf]
      %v191 = vld [vmem:[%s166 + $0x44] sm:$0xf]
      %v192 = vld [vmem:[%s166 + $0x48] sm:$0xf]
      %v193 = vld [vmem:[%s166 + $0x4c] sm:$0xf]
      %v194 = vld [vmem:[%s166 + $0x50] sm:$0xf]
      %v195 = vld [vmem:[%s166 + $0x54] sm:$0xf]
      %v196 = vld [vmem:[%s166 + $0x58] sm:$0xf]
      %v197 = vld [vmem:[%s166 + $0x5c] sm:$0xf]
      %v198 = vld [vmem:[%s166 + $0x60] sm:$0xf]
      %v199 = vld [vmem:[%s166 + $0x64] sm:$0xf]
      %v200 = vld [vmem:[%s166 + $0x68] sm:$0xf]
      %v201 = vld [vmem:[%s166 + $0x6c] sm:$0xf]
      %v202 = vld [vmem:[%s166 + $0x70] sm:$0xf]
      %v203 = vld [vmem:[%s166 + $0x74] sm:$0xf]
      %v204 = vld [vmem:[%s166 + $0x78] sm:$0xf]
      %v205 = vld [vmem:[%s166 + $0x7c] sm:$0xf]
      %v206 = vld [vmem:[%s166 + $0x80] sm:$0xf]
      %v207 = vld [vmem:[%s166 + $0x84] sm:$0xf]
      %v208 = vld [vmem:[%s166 + $0x88] sm:$0xf]
      %v209 = vld [vmem:[%s166 + $0x8c] sm:$0xf]
      %v210 = vld [vmem:[%s166 + $0x90] sm:$0xf]
      %v211 = vld [vmem:[%s166 + $0x94] sm:$0xf]
      %v212 = vld [vmem:[%s166 + $0x98] sm:$0xf]
      %v213 = vld [vmem:[%s166 + $0x9c] sm:$0xf]
      %v214 = vld [vmem:[%s166 + $0xa0] sm:$0xf]
      %v215 = vld [vmem:[%s166 + $0xa4] sm:$0xf]
      %v216 = vld [vmem:[%s166 + $0xa8] sm:$0xf]
      %v217 = vld [vmem:[%s166 + $0xac] sm:$0xf]
      %v218 = vld [vmem:[%s166 + $0xb0] sm:$0xf]
      %v219 = vld [vmem:[%s166 + $0xb4] sm:$0xf]
      %v220 = vld [vmem:[%s166 + $0xb8] sm:$0xf]
      %v221 = vld [vmem:[%s166 + $0xbc] sm:$0xf]
      %v222 = vld [vmem:[%s166 + $0xc0] sm:$0xf]
      %v223 = vld [vmem:[%s166 + $0xc4] sm:$0xf]
      %v224 = vld [vmem:[%s166 + $0xc8] sm:$0xf]
      %v225 = vld [vmem:[%s166 + $0xcc] sm:$0xf]
      %v226 = vld [vmem:[%s166 + $0xd0] sm:$0xf]
      %v227 = vld [vmem:[%s166 + $0xd4] sm:$0xf]
      %v228 = vld [vmem:[%s166 + $0xd8] sm:$0xf]
      %v229 = vld [vmem:[%s166 + $0xdc] sm:$0xf]
      %v230 = vld [vmem:[%s166 + $0xe0] sm:$0xf]
      %v231 = vld [vmem:[%s166 + $0xe4] sm:$0xf]
      %v232 = vld [vmem:[%s166 + $0xe8] sm:$0xf]
      %v233 = vld [vmem:[%s166 + $0xec] sm:$0xf]
      %v234 = vld [vmem:[%s166 + $0xf0] sm:$0xf]
      %v235 = vld [vmem:[%s166 + $0xf4] sm:$0xf]
      %v236 = vld [vmem:[%s166 + $0xf8] sm:$0xf]
      %v237 = vld [vmem:[%s166 + $0xfc] sm:$0xf]
      %v238 = vld [vmem:[%s166 + $0x100] sm:$0xf]
      %v239 = vld [vmem:[%s166 + $0x104] sm:$0xf]
      %v240 = vld [vmem:[%s166 + $0x108] sm:$0xf]
      %v241 = vld [vmem:[%s166 + $0x10c] sm:$0xf]
      %v242 = vld [vmem:[%s166 + $0x110] sm:$0xf]
      %v243 = vld [vmem:[%s166 + $0x114] sm:$0xf]
      %v244 = vld [vmem:[%s166 + $0x118] sm:$0xf]
      %v245 = vld [vmem:[%s166 + $0x11c] sm:$0xf]
      %v246 = vld [vmem:[%s166 + $0x120] sm:$0xf]
      %v247 = vld [vmem:[%s166 + $0x124] sm:$0xf]
      %v248 = vld [vmem:[%s166 + $0x128] sm:$0xf]
      %v249 = vld [vmem:[%s166 + $0x12c] sm:$0xf]
      %v250 = vld [vmem:[%s166 + $0x130] sm:$0xf]
      %v251 = vld [vmem:[%s166 + $0x134] sm:$0xf]
      %v252 = vld [vmem:[%s166 + $0x138] sm:$0xf]
      %v253 = vld [vmem:[%s166 + $0x13c] sm:$0xf]
      %v254 = vld [vmem:[%s166 + $0x140] sm:$0xf]
      %v255 = vld [vmem:[%s166 + $0x144] sm:$0xf]
      %v256 = vld [vmem:[%s166 + $0x148] sm:$0xf]
      %v257 = vld [vmem:[%s166 + $0x14c] sm:$0xf]
      %v258 = vld [vmem:[%s166 + $0x150] sm:$0xf]
      %v259 = vld [vmem:[%s166 + $0x154] sm:$0xf]
      %v260 = vld [vmem:[%s166 + $0x158] sm:$0xf]
      %v261 = vld [vmem:[%s166 + $0x15c] sm:$0xf]
      %v262 = vld [vmem:[%s166 + $0x160] sm:$0xf]
      %v263 = vld [vmem:[%s166 + $0x164] sm:$0xf]
      %v264 = vld [vmem:[%s166 + $0x168] sm:$0xf]
      %v265 = vld [vmem:[%s166 + $0x16c] sm:$0xf]
      %v266 = vld [vmem:[%s166 + $0x170] sm:$0xf]
      %v267 = vld [vmem:[%s166 + $0x174] sm:$0xf]
      %v268 = vld [vmem:[%s166 + $0x178] sm:$0xf]
      %v269 = vld [vmem:[%s166 + $0x17c] sm:$0xf]
      %v270 = vld [vmem:[%s166 + $0x180] sm:$0xf]
      %v271 = vld [vmem:[%s166 + $0x184] sm:$0xf]
      %v272 = vld [vmem:[%s166 + $0x188] sm:$0xf]
      %v273 = vld [vmem:[%s166 + $0x18c] sm:$0xf]
      %v274 = vld [vmem:[%s166 + $0x190] sm:$0xf]
      %v275 = vld [vmem:[%s166 + $0x194] sm:$0xf]
      %v276 = vld [vmem:[%s166 + $0x198] sm:$0xf]
      %v277 = vld [vmem:[%s166 + $0x19c] sm:$0xf]
      %v278 = vld [vmem:[%s166 + $0x1a0] sm:$0xf]
      %v279 = vld [vmem:[%s166 + $0x1a4] sm:$0xf]
      %v280 = vld [vmem:[%s166 + $0x1a8] sm:$0xf]
      %v281 = vld [vmem:[%s166 + $0x1ac] sm:$0xf]
      %v282 = vld [vmem:[%s166 + $0x1b0] sm:$0xf]
      %v283 = vld [vmem:[%s166 + $0x1b4] sm:$0xf]
      %v284 = vld [vmem:[%s166 + $0x1b8] sm:$0xf]
      %v285 = vld [vmem:[%s166 + $0x1bc] sm:$0xf]
      %v286 = vld [vmem:[%s166 + $0x1c0] sm:$0xf]
      %v287 = vld [vmem:[%s166 + $0x1c4] sm:$0xf]
      %v288 = vld [vmem:[%s166 + $0x1c8] sm:$0xf]
      %v289 = vld [vmem:[%s166 + $0x1cc] sm:$0xf]
      %v290 = vld [vmem:[%s166 + $0x1d0] sm:$0xf]
      %v291 = vld [vmem:[%s166 + $0x1d4] sm:$0xf]
      %v292 = vld [vmem:[%s166 + $0x1d8] sm:$0xf]
      %v293 = vld [vmem:[%s166 + $0x1dc] sm:$0xf]
      %v294 = vld [vmem:[%s166 + $0x1e0] sm:$0xf]
      %v295 = vld [vmem:[%s166 + $0x1e4] sm:$0xf]
      %v296 = vld [vmem:[%s166 + $0x1e8] sm:$0xf]
      %v297 = vld [vmem:[%s166 + $0x1ec] sm:$0xf]
      %v298 = vld [vmem:[%s166 + $0x1f0] sm:$0xf]
      %v299 = vld [vmem:[%s166 + $0x1f4] sm:$0xf]
      %v300 = vld [vmem:[%s166 + $0x1f8] sm:$0xf]
      %v301 = vld [vmem:[%s166 + $0x1fc] sm:$0xf]
      %v302 = vunpack.c.l.bf16 %v174
      %v303 = vunpack.c.l.bf16 %v175
      %v304 = vunpack.c.l.bf16 %v176
      %v305 = vunpack.c.l.bf16 %v177
      %v306 = vunpack.c.l.bf16 %v178
      %v307 = vunpack.c.l.bf16 %v179
      %v308 = vunpack.c.l.bf16 %v180
      %v309 = vunpack.c.l.bf16 %v181
      %v310 = vunpack.c.l.bf16 %v182
      %v311 = vunpack.c.l.bf16 %v183
      %v312 = vunpack.c.l.bf16 %v184
      %v313 = vunpack.c.l.bf16 %v185
      %v314 = vunpack.c.l.bf16 %v186
      %v315 = vunpack.c.l.bf16 %v187
      %v316 = vunpack.c.l.bf16 %v188
      %v317 = vunpack.c.l.bf16 %v189
      %v318 = vunpack.c.l.bf16 %v190
      %v319 = vunpack.c.l.bf16 %v191
      %v320 = vunpack.c.l.bf16 %v192
      %v321 = vunpack.c.l.bf16 %v193
      %v322 = vunpack.c.l.bf16 %v194
      %v323 = vunpack.c.l.bf16 %v195
      %v324 = vunpack.c.l.bf16 %v196
      %v325 = vunpack.c.l.bf16 %v197
      %v326 = vunpack.c.l.bf16 %v198
      %v327 = vunpack.c.l.bf16 %v199
      %v328 = vunpack.c.l.bf16 %v200
      %v329 = vunpack.c.l.bf16 %v201
      %v330 = vunpack.c.l.bf16 %v202
      %v331 = vunpack.c.l.bf16 %v203
      %v332 = vunpack.c.l.bf16 %v204
      %v333 = vunpack.c.l.bf16 %v205
      %v334 = vunpack.c.l.bf16 %v206
      %v335 = vunpack.c.l.bf16 %v207
      %v336 = vunpack.c.l.bf16 %v208
      %v337 = vunpack.c.l.bf16 %v209
      %v338 = vunpack.c.l.bf16 %v210
      %v339 = vunpack.c.l.bf16 %v211
      %v340 = vunpack.c.l.bf16 %v212
      %v341 = vunpack.c.l.bf16 %v213
      %v342 = vunpack.c.l.bf16 %v214
      %v343 = vunpack.c.l.bf16 %v215
      %v344 = vunpack.c.l.bf16 %v216
      %v345 = vunpack.c.l.bf16 %v217
      %v346 = vunpack.c.l.bf16 %v218
      %v347 = vunpack.c.l.bf16 %v219
      %v348 = vunpack.c.l.bf16 %v220
      %v349 = vunpack.c.l.bf16 %v221
      %v350 = vunpack.c.l.bf16 %v222
      %v351 = vunpack.c.l.bf16 %v223
      %v352 = vunpack.c.l.bf16 %v224
      %v353 = vunpack.c.l.bf16 %v225
      %v354 = vunpack.c.l.bf16 %v226
      %v355 = vunpack.c.l.bf16 %v227
      %v356 = vunpack.c.l.bf16 %v228
      %v357 = vunpack.c.l.bf16 %v229
      %v358 = vunpack.c.l.bf16 %v230
      %v359 = vunpack.c.l.bf16 %v231
      %v360 = vunpack.c.l.bf16 %v232
      %v361 = vunpack.c.l.bf16 %v233
      %v362 = vunpack.c.l.bf16 %v234
      %v363 = vunpack.c.l.bf16 %v235
      %v364 = vunpack.c.l.bf16 %v236
      %v365 = vunpack.c.l.bf16 %v237
      %v366 = vunpack.c.l.bf16 %v238
      %v367 = vunpack.c.l.bf16 %v239
      %v368 = vunpack.c.l.bf16 %v240
      %v369 = vunpack.c.l.bf16 %v241
      %v370 = vunpack.c.l.bf16 %v242
      %v371 = vunpack.c.l.bf16 %v243
      %v372 = vunpack.c.l.bf16 %v244
      %v373 = vunpack.c.l.bf16 %v245
      %v374 = vunpack.c.l.bf16 %v246
      %v375 = vunpack.c.l.bf16 %v247
      %v376 = vunpack.c.l.bf16 %v248
      %v377 = vunpack.c.l.bf16 %v249
      %v378 = vunpack.c.l.bf16 %v250
      %v379 = vunpack.c.l.bf16 %v251
      %v380 = vunpack.c.l.bf16 %v252
      %v381 = vunpack.c.l.bf16 %v253
      %v382 = vunpack.c.l.bf16 %v254
      %v383 = vunpack.c.l.bf16 %v255
      %v384 = vunpack.c.l.bf16 %v256
      %v385 = vunpack.c.l.bf16 %v257
      %v386 = vunpack.c.l.bf16 %v258
      %v387 = vunpack.c.l.bf16 %v259
      %v388 = vunpack.c.l.bf16 %v260
      %v389 = vunpack.c.l.bf16 %v261
      %v390 = vunpack.c.l.bf16 %v262
      %v391 = vunpack.c.l.bf16 %v263
      %v392 = vunpack.c.l.bf16 %v264
      %v393 = vunpack.c.l.bf16 %v265
      %v394 = vunpack.c.l.bf16 %v266
      %v395 = vunpack.c.l.bf16 %v267
      %v396 = vunpack.c.l.bf16 %v268
      %v397 = vunpack.c.l.bf16 %v269
      %v398 = vunpack.c.l.bf16 %v270
      %v399 = vunpack.c.l.bf16 %v271
      %v400 = vunpack.c.l.bf16 %v272
      %v401 = vunpack.c.l.bf16 %v273
      %v402 = vunpack.c.l.bf16 %v274
      %v403 = vunpack.c.l.bf16 %v275
      %v404 = vunpack.c.l.bf16 %v276
      %v405 = vunpack.c.l.bf16 %v277
      %v406 = vunpack.c.l.bf16 %v278
      %v407 = vunpack.c.l.bf16 %v279
      %v408 = vunpack.c.l.bf16 %v280
      %v409 = vunpack.c.l.bf16 %v281
      %v410 = vunpack.c.l.bf16 %v282
      %v411 = vunpack.c.l.bf16 %v283
      %v412 = vunpack.c.l.bf16 %v284
      %v413 = vunpack.c.l.bf16 %v285
      %v414 = vunpack.c.l.bf16 %v286
      %v415 = vunpack.c.l.bf16 %v287
      %v416 = vunpack.c.l.bf16 %v288
      %v417 = vunpack.c.l.bf16 %v289
      %v418 = vunpack.c.l.bf16 %v290
      %v419 = vunpack.c.l.bf16 %v291
      %v420 = vunpack.c.l.bf16 %v292
      %v421 = vunpack.c.l.bf16 %v293
      %v422 = vunpack.c.l.bf16 %v294
      %v423 = vunpack.c.l.bf16 %v295
      %v424 = vunpack.c.l.bf16 %v296
      %v425 = vunpack.c.l.bf16 %v297
      %v426 = vunpack.c.l.bf16 %v298
      %v427 = vunpack.c.l.bf16 %v299
      %v428 = vunpack.c.l.bf16 %v300
      %v429 = vunpack.c.l.bf16 %v301
      %v430 = vld [vmem:[%s1] sm:$0x1]
      %v432 = vlaneseq
      %v433 = vshrl.u32 %v432, 7
      %v434 = vsub.s32 0, %v433
      %v435 = vrot.slane %v430, %v434
      %v437 = vmul.f32 %v302, %v435
      %v438 = vmul.f32 %v303, %v435
      %v439 = vmul.f32 %v304, %v435
      %v440 = vmul.f32 %v305, %v435
      %v441 = vmul.f32 %v306, %v435
      %v442 = vmul.f32 %v307, %v435
      %v443 = vmul.f32 %v308, %v435
      %v444 = vmul.f32 %v309, %v435
      %v445 = vmul.f32 %v310, %v435
      %v446 = vmul.f32 %v311, %v435
      %v447 = vmul.f32 %v312, %v435
      %v448 = vmul.f32 %v313, %v435
      %v449 = vmul.f32 %v314, %v435
      %v450 = vmul.f32 %v315, %v435
      %v451 = vmul.f32 %v316, %v435
      %v452 = vmul.f32 %v317, %v435
      %v453 = vmul.f32 %v318, %v435
      %v454 = vmul.f32 %v319, %v435
      %v455 = vmul.f32 %v320, %v435
      %v456 = vmul.f32 %v321, %v435
      %v457 = vmul.f32 %v322, %v435
      %v458 = vmul.f32 %v323, %v435
      %v459 = vmul.f32 %v324, %v435
      %v460 = vmul.f32 %v325, %v435
      %v461 = vmul.f32 %v326, %v435
      %v462 = vmul.f32 %v327, %v435
      %v463 = vmul.f32 %v328, %v435
      %v464 = vmul.f32 %v329, %v435
      %v465 = vmul.f32 %v330, %v435
      %v466 = vmul.f32 %v331, %v435
      %v467 = vmul.f32 %v332, %v435
      %v468 = vmul.f32 %v333, %v435
      %v469 = vmul.f32 %v334, %v435
      %v470 = vmul.f32 %v335, %v435
      %v471 = vmul.f32 %v336, %v435
      %v472 = vmul.f32 %v337, %v435
      %v473 = vmul.f32 %v338, %v435
      %v474 = vmul.f32 %v339, %v435
      %v475 = vmul.f32 %v340, %v435
      %v476 = vmul.f32 %v341, %v435
      %v477 = vmul.f32 %v342, %v435
      %v478 = vmul.f32 %v343, %v435
      %v479 = vmul.f32 %v344, %v435
      %v480 = vmul.f32 %v345, %v435
      %v481 = vmul.f32 %v346, %v435
      %v482 = vmul.f32 %v347, %v435
      %v483 = vmul.f32 %v348, %v435
      %v484 = vmul.f32 %v349, %v435
      %v485 = vmul.f32 %v350, %v435
      %v486 = vmul.f32 %v351, %v435
      %v487 = vmul.f32 %v352, %v435
      %v488 = vmul.f32 %v353, %v435
      %v489 = vmul.f32 %v354, %v435
      %v490 = vmul.f32 %v355, %v435
      %v491 = vmul.f32 %v356, %v435
      %v492 = vmul.f32 %v357, %v435
      %v493 = vmul.f32 %v358, %v435
      %v494 = vmul.f32 %v359, %v435
      %v495 = vmul.f32 %v360, %v435
      %v496 = vmul.f32 %v361, %v435
      %v497 = vmul.f32 %v362, %v435
      %v498 = vmul.f32 %v363, %v435
      %v499 = vmul.f32 %v364, %v435
      %v500 = vmul.f32 %v365, %v435
      %v501 = vmul.f32 %v366, %v435
      %v502 = vmul.f32 %v367, %v435
      %v503 = vmul.f32 %v368, %v435
      %v504 = vmul.f32 %v369, %v435
      %v505 = vmul.f32 %v370, %v435
      %v506 = vmul.f32 %v371, %v435
      %v507 = vmul.f32 %v372, %v435
      %v508 = vmul.f32 %v373, %v435
      %v509 = vmul.f32 %v374, %v435
      %v510 = vmul.f32 %v375, %v435
      %v511 = vmul.f32 %v376, %v435
      %v512 = vmul.f32 %v377, %v435
      %v513 = vmul.f32 %v378, %v435
      %v514 = vmul.f32 %v379, %v435
      %v515 = vmul.f32 %v380, %v435
      %v516 = vmul.f32 %v381, %v435
      %v517 = vmul.f32 %v382, %v435
      %v518 = vmul.f32 %v383, %v435
      %v519 = vmul.f32 %v384, %v435
      %v520 = vmul.f32 %v385, %v435
      %v521 = vmul.f32 %v386, %v435
      %v522 = vmul.f32 %v387, %v435
      %v523 = vmul.f32 %v388, %v435
      %v524 = vmul.f32 %v389, %v435
      %v525 = vmul.f32 %v390, %v435
      %v526 = vmul.f32 %v391, %v435
      %v527 = vmul.f32 %v392, %v435
      %v528 = vmul.f32 %v393, %v435
      %v529 = vmul.f32 %v394, %v435
      %v530 = vmul.f32 %v395, %v435
      %v531 = vmul.f32 %v396, %v435
      %v532 = vmul.f32 %v397, %v435
      %v533 = vmul.f32 %v398, %v435
      %v534 = vmul.f32 %v399, %v435
      %v535 = vmul.f32 %v400, %v435
      %v536 = vmul.f32 %v401, %v435
      %v537 = vmul.f32 %v402, %v435
      %v538 = vmul.f32 %v403, %v435
      %v539 = vmul.f32 %v404, %v435
      %v540 = vmul.f32 %v405, %v435
      %v541 = vmul.f32 %v406, %v435
      %v542 = vmul.f32 %v407, %v435
      %v543 = vmul.f32 %v408, %v435
      %v544 = vmul.f32 %v409, %v435
      %v545 = vmul.f32 %v410, %v435
      %v546 = vmul.f32 %v411, %v435
      %v547 = vmul.f32 %v412, %v435
      %v548 = vmul.f32 %v413, %v435
      %v549 = vmul.f32 %v414, %v435
      %v550 = vmul.f32 %v415, %v435
      %v551 = vmul.f32 %v416, %v435
      %v552 = vmul.f32 %v417, %v435
      %v553 = vmul.f32 %v418, %v435
      %v554 = vmul.f32 %v419, %v435
      %v555 = vmul.f32 %v420, %v435
      %v556 = vmul.f32 %v421, %v435
      %v557 = vmul.f32 %v422, %v435
      %v558 = vmul.f32 %v423, %v435
      %v559 = vmul.f32 %v424, %v435
      %v560 = vmul.f32 %v425, %v435
      %v561 = vmul.f32 %v426, %v435
      %v562 = vmul.f32 %v427, %v435
      %v563 = vmul.f32 %v428, %v435
      %v564 = vmul.f32 %v429, %v435
      %v565 = vld [vmem:[%s2] sm:$0x1]
      %v567 = vlaneseq
      %v568 = vshrl.u32 %v567, 7
      %v569 = vsub.s32 0, %v568
      %v570 = vrot.slane %v565, %v569
      %v572 = vadd.f32 %v437, %v570
      %v573 = vadd.f32 %v438, %v570
      %v574 = vadd.f32 %v439, %v570
      %v575 = vadd.f32 %v440, %v570
      %v576 = vadd.f32 %v441, %v570
      %v577 = vadd.f32 %v442, %v570
      %v578 = vadd.f32 %v443, %v570
      %v579 = vadd.f32 %v444, %v570
      %v580 = vadd.f32 %v445, %v570
      %v581 = vadd.f32 %v446, %v570
      %v582 = vadd.f32 %v447, %v570
      %v583 = vadd.f32 %v448, %v570
      %v584 = vadd.f32 %v449, %v570
      %v585 = vadd.f32 %v450, %v570
      %v586 = vadd.f32 %v451, %v570
      %v587 = vadd.f32 %v452, %v570
      %v588 = vadd.f32 %v453, %v570
      %v589 = vadd.f32 %v454, %v570
      %v590 = vadd.f32 %v455, %v570
      %v591 = vadd.f32 %v456, %v570
      %v592 = vadd.f32 %v457, %v570
      %v593 = vadd.f32 %v458, %v570
      %v594 = vadd.f32 %v459, %v570
      %v595 = vadd.f32 %v460, %v570
      %v596 = vadd.f32 %v461, %v570
      %v597 = vadd.f32 %v462, %v570
      %v598 = vadd.f32 %v463, %v570
      %v599 = vadd.f32 %v464, %v570
      %v600 = vadd.f32 %v465, %v570
      %v601 = vadd.f32 %v466, %v570
      %v602 = vadd.f32 %v467, %v570
      %v603 = vadd.f32 %v468, %v570
      %v604 = vadd.f32 %v469, %v570
      %v605 = vadd.f32 %v470, %v570
      %v606 = vadd.f32 %v471, %v570
      %v607 = vadd.f32 %v472, %v570
      %v608 = vadd.f32 %v473, %v570
      %v609 = vadd.f32 %v474, %v570
      %v610 = vadd.f32 %v475, %v570
      %v611 = vadd.f32 %v476, %v570
      %v612 = vadd.f32 %v477, %v570
      %v613 = vadd.f32 %v478, %v570
      %v614 = vadd.f32 %v479, %v570
      %v615 = vadd.f32 %v480, %v570
      %v616 = vadd.f32 %v481, %v570
      %v617 = vadd.f32 %v482, %v570
      %v618 = vadd.f32 %v483, %v570
      %v619 = vadd.f32 %v484, %v570
      %v620 = vadd.f32 %v485, %v570
      %v621 = vadd.f32 %v486, %v570
      %v622 = vadd.f32 %v487, %v570
      %v623 = vadd.f32 %v488, %v570
      %v624 = vadd.f32 %v489, %v570
      %v625 = vadd.f32 %v490, %v570
      %v626 = vadd.f32 %v491, %v570
      %v627 = vadd.f32 %v492, %v570
      %v628 = vadd.f32 %v493, %v570
      %v629 = vadd.f32 %v494, %v570
      %v630 = vadd.f32 %v495, %v570
      %v631 = vadd.f32 %v496, %v570
      %v632 = vadd.f32 %v497, %v570
      %v633 = vadd.f32 %v498, %v570
      %v634 = vadd.f32 %v499, %v570
      %v635 = vadd.f32 %v500, %v570
      %v636 = vadd.f32 %v501, %v570
      %v637 = vadd.f32 %v502, %v570
      %v638 = vadd.f32 %v503, %v570
      %v639 = vadd.f32 %v504, %v570
      %v640 = vadd.f32 %v505, %v570
      %v641 = vadd.f32 %v506, %v570
      %v642 = vadd.f32 %v507, %v570
      %v643 = vadd.f32 %v508, %v570
      %v644 = vadd.f32 %v509, %v570
      %v645 = vadd.f32 %v510, %v570
      %v646 = vadd.f32 %v511, %v570
      %v647 = vadd.f32 %v512, %v570
      %v648 = vadd.f32 %v513, %v570
      %v649 = vadd.f32 %v514, %v570
      %v650 = vadd.f32 %v515, %v570
      %v651 = vadd.f32 %v516, %v570
      %v652 = vadd.f32 %v517, %v570
      %v653 = vadd.f32 %v518, %v570
      %v654 = vadd.f32 %v519, %v570
      %v655 = vadd.f32 %v520, %v570
      %v656 = vadd.f32 %v521, %v570
      %v657 = vadd.f32 %v522, %v570
      %v658 = vadd.f32 %v523, %v570
      %v659 = vadd.f32 %v524, %v570
      %v660 = vadd.f32 %v525, %v570
      %v661 = vadd.f32 %v526, %v570
      %v662 = vadd.f32 %v527, %v570
      %v663 = vadd.f32 %v528, %v570
      %v664 = vadd.f32 %v529, %v570
      %v665 = vadd.f32 %v530, %v570
      %v666 = vadd.f32 %v531, %v570
      %v667 = vadd.f32 %v532, %v570
      %v668 = vadd.f32 %v533, %v570
      %v669 = vadd.f32 %v534, %v570
      %v670 = vadd.f32 %v535, %v570
      %v671 = vadd.f32 %v536, %v570
      %v672 = vadd.f32 %v537, %v570
      %v673 = vadd.f32 %v538, %v570
      %v674 = vadd.f32 %v539, %v570
      %v675 = vadd.f32 %v540, %v570
      %v676 = vadd.f32 %v541, %v570
      %v677 = vadd.f32 %v542, %v570
      %v678 = vadd.f32 %v543, %v570
      %v679 = vadd.f32 %v544, %v570
      %v680 = vadd.f32 %v545, %v570
      %v681 = vadd.f32 %v546, %v570
      %v682 = vadd.f32 %v547, %v570
      %v683 = vadd.f32 %v548, %v570
      %v684 = vadd.f32 %v549, %v570
      %v685 = vadd.f32 %v550, %v570
      %v686 = vadd.f32 %v551, %v570
      %v687 = vadd.f32 %v552, %v570
      %v688 = vadd.f32 %v553, %v570
      %v689 = vadd.f32 %v554, %v570
      %v690 = vadd.f32 %v555, %v570
      %v691 = vadd.f32 %v556, %v570
      %v692 = vadd.f32 %v557, %v570
      %v693 = vadd.f32 %v558, %v570
      %v694 = vadd.f32 %v559, %v570
      %v695 = vadd.f32 %v560, %v570
      %v696 = vadd.f32 %v561, %v570
      %v697 = vadd.f32 %v562, %v570
      %v698 = vadd.f32 %v563, %v570
      %v699 = vadd.f32 %v564, %v570
      %v700 = vmax.f32 %v572, 0.0
      %v701 = vmax.f32 %v573, 0.0
      %v702 = vmax.f32 %v574, 0.0
      %v703 = vmax.f32 %v575, 0.0
      %v704 = vmax.f32 %v576, 0.0
      %v705 = vmax.f32 %v577, 0.0
      %v706 = vmax.f32 %v578, 0.0
      %v707 = vmax.f32 %v579, 0.0
      %v708 = vmax.f32 %v580, 0.0
      %v709 = vmax.f32 %v581, 0.0
      %v710 = vmax.f32 %v582, 0.0
      %v711 = vmax.f32 %v583, 0.0
      %v712 = vmax.f32 %v584, 0.0
      %v713 = vmax.f32 %v585, 0.0
      %v714 = vmax.f32 %v586, 0.0
      %v715 = vmax.f32 %v587, 0.0
      %v716 = vmax.f32 %v588, 0.0
      %v717 = vmax.f32 %v589, 0.0
      %v718 = vmax.f32 %v590, 0.0
      %v719 = vmax.f32 %v591, 0.0
      %v720 = vmax.f32 %v592, 0.0
      %v721 = vmax.f32 %v593, 0.0
      %v722 = vmax.f32 %v594, 0.0
      %v723 = vmax.f32 %v595, 0.0
      %v724 = vmax.f32 %v596, 0.0
      %v725 = vmax.f32 %v597, 0.0
      %v726 = vmax.f32 %v598, 0.0
      %v727 = vmax.f32 %v599, 0.0
      %v728 = vmax.f32 %v600, 0.0
      %v729 = vmax.f32 %v601, 0.0
      %v730 = vmax.f32 %v602, 0.0
      %v731 = vmax.f32 %v603, 0.0
      %v732 = vmax.f32 %v604, 0.0
      %v733 = vmax.f32 %v605, 0.0
      %v734 = vmax.f32 %v606, 0.0
      %v735 = vmax.f32 %v607, 0.0
      %v736 = vmax.f32 %v608, 0.0
      %v737 = vmax.f32 %v609, 0.0
      %v738 = vmax.f32 %v610, 0.0
      %v739 = vmax.f32 %v611, 0.0
      %v740 = vmax.f32 %v612, 0.0
      %v741 = vmax.f32 %v613, 0.0
      %v742 = vmax.f32 %v614, 0.0
      %v743 = vmax.f32 %v615, 0.0
      %v744 = vmax.f32 %v616, 0.0
      %v745 = vmax.f32 %v617, 0.0
      %v746 = vmax.f32 %v618, 0.0
      %v747 = vmax.f32 %v619, 0.0
      %v748 = vmax.f32 %v620, 0.0
      %v749 = vmax.f32 %v621, 0.0
      %v750 = vmax.f32 %v622, 0.0
      %v751 = vmax.f32 %v623, 0.0
      %v752 = vmax.f32 %v624, 0.0
      %v753 = vmax.f32 %v625, 0.0
      %v754 = vmax.f32 %v626, 0.0
      %v755 = vmax.f32 %v627, 0.0
      %v756 = vmax.f32 %v628, 0.0
      %v757 = vmax.f32 %v629, 0.0
      %v758 = vmax.f32 %v630, 0.0
      %v759 = vmax.f32 %v631, 0.0
      %v760 = vmax.f32 %v632, 0.0
      %v761 = vmax.f32 %v633, 0.0
      %v762 = vmax.f32 %v634, 0.0
      %v763 = vmax.f32 %v635, 0.0
      %v764 = vmax.f32 %v636, 0.0
      %v765 = vmax.f32 %v637, 0.0
      %v766 = vmax.f32 %v638, 0.0
      %v767 = vmax.f32 %v639, 0.0
      %v768 = vmax.f32 %v640, 0.0
      %v769 = vmax.f32 %v641, 0.0
      %v770 = vmax.f32 %v642, 0.0
      %v771 = vmax.f32 %v643, 0.0
      %v772 = vmax.f32 %v644, 0.0
      %v773 = vmax.f32 %v645, 0.0
      %v774 = vmax.f32 %v646, 0.0
      %v775 = vmax.f32 %v647, 0.0
      %v776 = vmax.f32 %v648, 0.0
      %v777 = vmax.f32 %v649, 0.0
      %v778 = vmax.f32 %v650, 0.0
      %v779 = vmax.f32 %v651, 0.0
      %v780 = vmax.f32 %v652, 0.0
      %v781 = vmax.f32 %v653, 0.0
      %v782 = vmax.f32 %v654, 0.0
      %v783 = vmax.f32 %v655, 0.0
      %v784 = vmax.f32 %v656, 0.0
      %v785 = vmax.f32 %v657, 0.0
      %v786 = vmax.f32 %v658, 0.0
      %v787 = vmax.f32 %v659, 0.0
      %v788 = vmax.f32 %v660, 0.0
      %v789 = vmax.f32 %v661, 0.0
      %v790 = vmax.f32 %v662, 0.0
      %v791 = vmax.f32 %v663, 0.0
      %v792 = vmax.f32 %v664, 0.0
      %v793 = vmax.f32 %v665, 0.0
      %v794 = vmax.f32 %v666, 0.0
      %v795 = vmax.f32 %v667, 0.0
      %v796 = vmax.f32 %v668, 0.0
      %v797 = vmax.f32 %v669, 0.0
      %v798 = vmax.f32 %v670, 0.0
      %v799 = vmax.f32 %v671, 0.0
      %v800 = vmax.f32 %v672, 0.0
      %v801 = vmax.f32 %v673, 0.0
      %v802 = vmax.f32 %v674, 0.0
      %v803 = vmax.f32 %v675, 0.0
      %v804 = vmax.f32 %v676, 0.0
      %v805 = vmax.f32 %v677, 0.0
      %v806 = vmax.f32 %v678, 0.0
      %v807 = vmax.f32 %v679, 0.0
      %v808 = vmax.f32 %v680, 0.0
      %v809 = vmax.f32 %v681, 0.0
      %v810 = vmax.f32 %v682, 0.0
      %v811 = vmax.f32 %v683, 0.0
      %v812 = vmax.f32 %v684, 0.0
      %v813 = vmax.f32 %v685, 0.0
      %v814 = vmax.f32 %v686, 0.0
      %v815 = vmax.f32 %v687, 0.0
      %v816 = vmax.f32 %v688, 0.0
      %v817 = vmax.f32 %v689, 0.0
      %v818 = vmax.f32 %v690, 0.0
      %v819 = vmax.f32 %v691, 0.0
      %v820 = vmax.f32 %v692, 0.0
      %v821 = vmax.f32 %v693, 0.0
      %v822 = vmax.f32 %v694, 0.0
      %v823 = vmax.f32 %v695, 0.0
      %v824 = vmax.f32 %v696, 0.0
      %v825 = vmax.f32 %v697, 0.0
      %v826 = vmax.f32 %v698, 0.0
      %v827 = vmax.f32 %v699, 0.0
      %v828 = vpack.c.bf16 %v701, %v700
      %v829 = vpack.c.bf16 %v703, %v702
      %v830 = vpack.c.bf16 %v705, %v704
      %v831 = vpack.c.bf16 %v707, %v706
      %v832 = vpack.c.bf16 %v709, %v708
      %v833 = vpack.c.bf16 %v711, %v710
      %v834 = vpack.c.bf16 %v713, %v712
      %v835 = vpack.c.bf16 %v715, %v714
      %v836 = vpack.c.bf16 %v717, %v716
      %v837 = vpack.c.bf16 %v719, %v718
      %v838 = vpack.c.bf16 %v721, %v720
      %v839 = vpack.c.bf16 %v723, %v722
      %v840 = vpack.c.bf16 %v725, %v724
      %v841 = vpack.c.bf16 %v727, %v726
      %v842 = vpack.c.bf16 %v729, %v728
      %v843 = vpack.c.bf16 %v731, %v730
      %v844 = vpack.c.bf16 %v733, %v732
      %v845 = vpack.c.bf16 %v735, %v734
      %v846 = vpack.c.bf16 %v737, %v736
      %v847 = vpack.c.bf16 %v739, %v738
      %v848 = vpack.c.bf16 %v741, %v740
      %v849 = vpack.c.bf16 %v743, %v742
      %v850 = vpack.c.bf16 %v745, %v744
      %v851 = vpack.c.bf16 %v747, %v746
      %v852 = vpack.c.bf16 %v749, %v748
      %v853 = vpack.c.bf16 %v751, %v750
      %v854 = vpack.c.bf16 %v753, %v752
      %v855 = vpack.c.bf16 %v755, %v754
      %v856 = vpack.c.bf16 %v757, %v756
      %v857 = vpack.c.bf16 %v759, %v758
      %v858 = vpack.c.bf16 %v761, %v760
      %v859 = vpack.c.bf16 %v763, %v762
      %v860 = vpack.c.bf16 %v765, %v764
      %v861 = vpack.c.bf16 %v767, %v766
      %v862 = vpack.c.bf16 %v769, %v768
      %v863 = vpack.c.bf16 %v771, %v770
      %v864 = vpack.c.bf16 %v773, %v772
      %v865 = vpack.c.bf16 %v775, %v774
      %v866 = vpack.c.bf16 %v777, %v776
      %v867 = vpack.c.bf16 %v779, %v778
      %v868 = vpack.c.bf16 %v781, %v780
      %v869 = vpack.c.bf16 %v783, %v782
      %v870 = vpack.c.bf16 %v785, %v784
      %v871 = vpack.c.bf16 %v787, %v786
      %v872 = vpack.c.bf16 %v789, %v788
      %v873 = vpack.c.bf16 %v791, %v790
      %v874 = vpack.c.bf16 %v793, %v792
      %v875 = vpack.c.bf16 %v795, %v794
      %v876 = vpack.c.bf16 %v797, %v796
      %v877 = vpack.c.bf16 %v799, %v798
      %v878 = vpack.c.bf16 %v801, %v800
      %v879 = vpack.c.bf16 %v803, %v802
      %v880 = vpack.c.bf16 %v805, %v804
      %v881 = vpack.c.bf16 %v807, %v806
      %v882 = vpack.c.bf16 %v809, %v808
      %v883 = vpack.c.bf16 %v811, %v810
      %v884 = vpack.c.bf16 %v813, %v812
      %v885 = vpack.c.bf16 %v815, %v814
      %v886 = vpack.c.bf16 %v817, %v816
      %v887 = vpack.c.bf16 %v819, %v818
      %v888 = vpack.c.bf16 %v821, %v820
      %v889 = vpack.c.bf16 %v823, %v822
      %v890 = vpack.c.bf16 %v825, %v824
      %v891 = vpack.c.bf16 %v827, %v826
      %v956 = vunpack.c.l.b16 %v828
      %v957 = vunpack.c.h.b16 %v828
      %v958 = vunpack.c.l.b16 %v829
      %v959 = vunpack.c.h.b16 %v829
      %v960 = vunpack.c.l.b16 %v830
      %v961 = vunpack.c.h.b16 %v830
      %v962 = vunpack.c.l.b16 %v831
      %v963 = vunpack.c.h.b16 %v831
      %v964 = vunpack.c.l.b16 %v832
      %v965 = vunpack.c.h.b16 %v832
      %v966 = vunpack.c.l.b16 %v833
      %v967 = vunpack.c.h.b16 %v833
      %v968 = vunpack.c.l.b16 %v834
      %v969 = vunpack.c.h.b16 %v834
      %v970 = vunpack.c.l.b16 %v835
      %v971 = vunpack.c.h.b16 %v835
      %v972 = vunpack.c.l.b16 %v836
      %v973 = vunpack.c.h.b16 %v836
      %v974 = vunpack.c.l.b16 %v837
      %v975 = vunpack.c.h.b16 %v837
      %v976 = vunpack.c.l.b16 %v838
      %v977 = vunpack.c.h.b16 %v838
      %v978 = vunpack.c.l.b16 %v839
      %v979 = vunpack.c.h.b16 %v839
      %v980 = vunpack.c.l.b16 %v840
      %v981 = vunpack.c.h.b16 %v840
      %v982 = vunpack.c.l.b16 %v841
      %v983 = vunpack.c.h.b16 %v841
      %v984 = vunpack.c.l.b16 %v842
      %v985 = vunpack.c.h.b16 %v842
      %v986 = vunpack.c.l.b16 %v843
      %v987 = vunpack.c.h.b16 %v843
      %v988 = vunpack.c.l.b16 %v844
      %v989 = vunpack.c.h.b16 %v844
      %v990 = vunpack.c.l.b16 %v845
      %v991 = vunpack.c.h.b16 %v845
      %v992 = vunpack.c.l.b16 %v846
      %v993 = vunpack.c.h.b16 %v846
      %v994 = vunpack.c.l.b16 %v847
      %v995 = vunpack.c.h.b16 %v847
      %v996 = vunpack.c.l.b16 %v848
      %v997 = vunpack.c.h.b16 %v848
      %v998 = vunpack.c.l.b16 %v849
      %v999 = vunpack.c.h.b16 %v849
      %v1000 = vunpack.c.l.b16 %v850
      %v1001 = vunpack.c.h.b16 %v850
      %v1002 = vunpack.c.l.b16 %v851
      %v1003 = vunpack.c.h.b16 %v851
      %v1004 = vunpack.c.l.b16 %v852
      %v1005 = vunpack.c.h.b16 %v852
      %v1006 = vunpack.c.l.b16 %v853
      %v1007 = vunpack.c.h.b16 %v853
      %v1008 = vunpack.c.l.b16 %v854
      %v1009 = vunpack.c.h.b16 %v854
      %v1010 = vunpack.c.l.b16 %v855
      %v1011 = vunpack.c.h.b16 %v855
      %v1012 = vunpack.c.l.b16 %v856
      %v1013 = vunpack.c.h.b16 %v856
      %v1014 = vunpack.c.l.b16 %v857
      %v1015 = vunpack.c.h.b16 %v857
      %v1016 = vunpack.c.l.b16 %v858
      %v1017 = vunpack.c.h.b16 %v858
      %v1018 = vunpack.c.l.b16 %v859
      %v1019 = vunpack.c.h.b16 %v859
      %v1020 = vunpack.c.l.b16 %v860
      %v1021 = vunpack.c.h.b16 %v860
      %v1022 = vunpack.c.l.b16 %v861
      %v1023 = vunpack.c.h.b16 %v861
      %v1024 = vunpack.c.l.b16 %v862
      %v1025 = vunpack.c.h.b16 %v862
      %v1026 = vunpack.c.l.b16 %v863
      %v1027 = vunpack.c.h.b16 %v863
      %v1028 = vunpack.c.l.b16 %v864
      %v1029 = vunpack.c.h.b16 %v864
      %v1030 = vunpack.c.l.b16 %v865
      %v1031 = vunpack.c.h.b16 %v865
      %v1032 = vunpack.c.l.b16 %v866
      %v1033 = vunpack.c.h.b16 %v866
      %v1034 = vunpack.c.l.b16 %v867
      %v1035 = vunpack.c.h.b16 %v867
      %v1036 = vunpack.c.l.b16 %v868
      %v1037 = vunpack.c.h.b16 %v868
      %v1038 = vunpack.c.l.b16 %v869
      %v1039 = vunpack.c.h.b16 %v869
      %v1040 = vunpack.c.l.b16 %v870
      %v1041 = vunpack.c.h.b16 %v870
      %v1042 = vunpack.c.l.b16 %v871
      %v1043 = vunpack.c.h.b16 %v871
      %v1044 = vunpack.c.l.b16 %v872
      %v1045 = vunpack.c.h.b16 %v872
      %v1046 = vunpack.c.l.b16 %v873
      %v1047 = vunpack.c.h.b16 %v873
      %v1048 = vunpack.c.l.b16 %v874
      %v1049 = vunpack.c.h.b16 %v874
      %v1050 = vunpack.c.l.b16 %v875
      %v1051 = vunpack.c.h.b16 %v875
      %v1052 = vunpack.c.l.b16 %v876
      %v1053 = vunpack.c.h.b16 %v876
      %v1054 = vunpack.c.l.b16 %v877
      %v1055 = vunpack.c.h.b16 %v877
      %v1056 = vunpack.c.l.b16 %v878
      %v1057 = vunpack.c.h.b16 %v878
      %v1058 = vunpack.c.l.b16 %v879
      %v1059 = vunpack.c.h.b16 %v879
      %v1060 = vunpack.c.l.b16 %v880
      %v1061 = vunpack.c.h.b16 %v880
      %v1062 = vunpack.c.l.b16 %v881
      %v1063 = vunpack.c.h.b16 %v881
      %v1064 = vunpack.c.l.b16 %v882
      %v1065 = vunpack.c.h.b16 %v882
      %v1066 = vunpack.c.l.b16 %v883
      %v1067 = vunpack.c.h.b16 %v883
      %v1068 = vunpack.c.l.b16 %v884
      %v1069 = vunpack.c.h.b16 %v884
      %v1070 = vunpack.c.l.b16 %v885
      %v1071 = vunpack.c.h.b16 %v885
      %v1072 = vunpack.c.l.b16 %v886
      %v1073 = vunpack.c.h.b16 %v886
      %v1074 = vunpack.c.l.b16 %v887
      %v1075 = vunpack.c.h.b16 %v887
      %v1076 = vunpack.c.l.b16 %v888
      %v1077 = vunpack.c.h.b16 %v888
      %v1078 = vunpack.c.l.b16 %v889
      %v1079 = vunpack.c.h.b16 %v889
      %v1080 = vunpack.c.l.b16 %v890
      %v1081 = vunpack.c.h.b16 %v890
      %v1082 = vunpack.c.l.b16 %v891
      %v1083 = vunpack.c.h.b16 %v891
      %v1084 = vpack.c.b16 %v956, %v956
      %v1085 = vpack.c.b16 %v957, %v957
      %v1086 = vpack.c.b16 %v958, %v958
      %v1087 = vpack.c.b16 %v959, %v959
      %v1088 = vpack.c.b16 %v960, %v960
      %v1089 = vpack.c.b16 %v961, %v961
      %v1090 = vpack.c.b16 %v962, %v962
      %v1091 = vpack.c.b16 %v963, %v963
      %v1092 = vpack.c.b16 %v964, %v964
      %v1093 = vpack.c.b16 %v965, %v965
      %v1094 = vpack.c.b16 %v966, %v966
      %v1095 = vpack.c.b16 %v967, %v967
      %v1096 = vpack.c.b16 %v968, %v968
      %v1097 = vpack.c.b16 %v969, %v969
      %v1098 = vpack.c.b16 %v970, %v970
      %v1099 = vpack.c.b16 %v971, %v971
      %v1100 = vpack.c.b16 %v972, %v972
      %v1101 = vpack.c.b16 %v973, %v973
      %v1102 = vpack.c.b16 %v974, %v974
      %v1103 = vpack.c.b16 %v975, %v975
      %v1104 = vpack.c.b16 %v976, %v976
      %v1105 = vpack.c.b16 %v977, %v977
      %v1106 = vpack.c.b16 %v978, %v978
      %v1107 = vpack.c.b16 %v979, %v979
      %v1108 = vpack.c.b16 %v980, %v980
      %v1109 = vpack.c.b16 %v981, %v981
      %v1110 = vpack.c.b16 %v982, %v982
      %v1111 = vpack.c.b16 %v983, %v983
      %v1112 = vpack.c.b16 %v984, %v984
      %v1113 = vpack.c.b16 %v985, %v985
      %v1114 = vpack.c.b16 %v986, %v986
      %v1115 = vpack.c.b16 %v987, %v987
      %v1116 = vpack.c.b16 %v988, %v988
      %v1117 = vpack.c.b16 %v989, %v989
      %v1118 = vpack.c.b16 %v990, %v990
      %v1119 = vpack.c.b16 %v991, %v991
      %v1120 = vpack.c.b16 %v992, %v992
      %v1121 = vpack.c.b16 %v993, %v993
      %v1122 = vpack.c.b16 %v994, %v994
      %v1123 = vpack.c.b16 %v995, %v995
      %v1124 = vpack.c.b16 %v996, %v996
      %v1125 = vpack.c.b16 %v997, %v997
      %v1126 = vpack.c.b16 %v998, %v998
      %v1127 = vpack.c.b16 %v999, %v999
      %v1128 = vpack.c.b16 %v1000, %v1000
      %v1129 = vpack.c.b16 %v1001, %v1001
      %v1130 = vpack.c.b16 %v1002, %v1002
      %v1131 = vpack.c.b16 %v1003, %v1003
      %v1132 = vpack.c.b16 %v1004, %v1004
      %v1133 = vpack.c.b16 %v1005, %v1005
      %v1134 = vpack.c.b16 %v1006, %v1006
      %v1135 = vpack.c.b16 %v1007, %v1007
      %v1136 = vpack.c.b16 %v1008, %v1008
      %v1137 = vpack.c.b16 %v1009, %v1009
      %v1138 = vpack.c.b16 %v1010, %v1010
      %v1139 = vpack.c.b16 %v1011, %v1011
      %v1140 = vpack.c.b16 %v1012, %v1012
      %v1141 = vpack.c.b16 %v1013, %v1013
      %v1142 = vpack.c.b16 %v1014, %v1014
      %v1143 = vpack.c.b16 %v1015, %v1015
      %v1144 = vpack.c.b16 %v1016, %v1016
      %v1145 = vpack.c.b16 %v1017, %v1017
      %v1146 = vpack.c.b16 %v1018, %v1018
      %v1147 = vpack.c.b16 %v1019, %v1019
      %v1148 = vpack.c.b16 %v1020, %v1020
      %v1149 = vpack.c.b16 %v1021, %v1021
      %v1150 = vpack.c.b16 %v1022, %v1022
      %v1151 = vpack.c.b16 %v1023, %v1023
      %v1152 = vpack.c.b16 %v1024, %v1024
      %v1153 = vpack.c.b16 %v1025, %v1025
      %v1154 = vpack.c.b16 %v1026, %v1026
      %v1155 = vpack.c.b16 %v1027, %v1027
      %v1156 = vpack.c.b16 %v1028, %v1028
      %v1157 = vpack.c.b16 %v1029, %v1029
      %v1158 = vpack.c.b16 %v1030, %v1030
      %v1159 = vpack.c.b16 %v1031, %v1031
      %v1160 = vpack.c.b16 %v1032, %v1032
      %v1161 = vpack.c.b16 %v1033, %v1033
      %v1162 = vpack.c.b16 %v1034, %v1034
      %v1163 = vpack.c.b16 %v1035, %v1035
      %v1164 = vpack.c.b16 %v1036, %v1036
      %v1165 = vpack.c.b16 %v1037, %v1037
      %v1166 = vpack.c.b16 %v1038, %v1038
      %v1167 = vpack.c.b16 %v1039, %v1039
      %v1168 = vpack.c.b16 %v1040, %v1040
      %v1169 = vpack.c.b16 %v1041, %v1041
      %v1170 = vpack.c.b16 %v1042, %v1042
      %v1171 = vpack.c.b16 %v1043, %v1043
      %v1172 = vpack.c.b16 %v1044, %v1044
      %v1173 = vpack.c.b16 %v1045, %v1045
      %v1174 = vpack.c.b16 %v1046, %v1046
      %v1175 = vpack.c.b16 %v1047, %v1047
      %v1176 = vpack.c.b16 %v1048, %v1048
      %v1177 = vpack.c.b16 %v1049, %v1049
      %v1178 = vpack.c.b16 %v1050, %v1050
      %v1179 = vpack.c.b16 %v1051, %v1051
      %v1180 = vpack.c.b16 %v1052, %v1052
      %v1181 = vpack.c.b16 %v1053, %v1053
      %v1182 = vpack.c.b16 %v1054, %v1054
      %v1183 = vpack.c.b16 %v1055, %v1055
      %v1184 = vpack.c.b16 %v1056, %v1056
      %v1185 = vpack.c.b16 %v1057, %v1057
      %v1186 = vpack.c.b16 %v1058, %v1058
      %v1187 = vpack.c.b16 %v1059, %v1059
      %v1188 = vpack.c.b16 %v1060, %v1060
      %v1189 = vpack.c.b16 %v1061, %v1061
      %v1190 = vpack.c.b16 %v1062, %v1062
      %v1191 = vpack.c.b16 %v1063, %v1063
      %v1192 = vpack.c.b16 %v1064, %v1064
      %v1193 = vpack.c.b16 %v1065, %v1065
      %v1194 = vpack.c.b16 %v1066, %v1066
      %v1195 = vpack.c.b16 %v1067, %v1067
      %v1196 = vpack.c.b16 %v1068, %v1068
      %v1197 = vpack.c.b16 %v1069, %v1069
      %v1198 = vpack.c.b16 %v1070, %v1070
      %v1199 = vpack.c.b16 %v1071, %v1071
      %v1200 = vpack.c.b16 %v1072, %v1072
      %v1201 = vpack.c.b16 %v1073, %v1073
      %v1202 = vpack.c.b16 %v1074, %v1074
      %v1203 = vpack.c.b16 %v1075, %v1075
      %v1204 = vpack.c.b16 %v1076, %v1076
      %v1205 = vpack.c.b16 %v1077, %v1077
      %v1206 = vpack.c.b16 %v1078, %v1078
      %v1207 = vpack.c.b16 %v1079, %v1079
      %v1208 = vpack.c.b16 %v1080, %v1080
      %v1209 = vpack.c.b16 %v1081, %v1081
      %v1210 = vpack.c.b16 %v1082, %v1082
      %v1211 = vpack.c.b16 %v1083, %v1083
      %1340 = vst [vmem:[%s172] sm:$0xf] %v1084
      %1341 = vst [vmem:[%s172 + $0x4] sm:$0xf] %v1085
      %1342 = vst [vmem:[%s172 + $0x8] sm:$0xf] %v1086
      %1343 = vst [vmem:[%s172 + $0xc] sm:$0xf] %v1087
      %1344 = vst [vmem:[%s172 + $0x10] sm:$0xf] %v1088
      %1345 = vst [vmem:[%s172 + $0x14] sm:$0xf] %v1089
      %1346 = vst [vmem:[%s172 + $0x18] sm:$0xf] %v1090
      %1347 = vst [vmem:[%s172 + $0x1c] sm:$0xf] %v1091
      %1348 = vst [vmem:[%s172 + $0x20] sm:$0xf] %v1092
      %1349 = vst [vmem:[%s172 + $0x24] sm:$0xf] %v1093
      %1350 = vst [vmem:[%s172 + $0x28] sm:$0xf] %v1094
      %1351 = vst [vmem:[%s172 + $0x2c] sm:$0xf] %v1095
      %1352 = vst [vmem:[%s172 + $0x30] sm:$0xf] %v1096
      %1353 = vst [vmem:[%s172 + $0x34] sm:$0xf] %v1097
      %1354 = vst [vmem:[%s172 + $0x38] sm:$0xf] %v1098
      %1355 = vst [vmem:[%s172 + $0x3c] sm:$0xf] %v1099
      %1356 = vst [vmem:[%s172 + $0x40] sm:$0xf] %v1100
      %1357 = vst [vmem:[%s172 + $0x44] sm:$0xf] %v1101
      %1358 = vst [vmem:[%s172 + $0x48] sm:$0xf] %v1102
      %1359 = vst [vmem:[%s172 + $0x4c] sm:$0xf] %v1103
      %1360 = vst [vmem:[%s172 + $0x50] sm:$0xf] %v1104
      %1361 = vst [vmem:[%s172 + $0x54] sm:$0xf] %v1105
      %1362 = vst [vmem:[%s172 + $0x58] sm:$0xf] %v1106
      %1363 = vst [vmem:[%s172 + $0x5c] sm:$0xf] %v1107
      %1364 = vst [vmem:[%s172 + $0x60] sm:$0xf] %v1108
      %1365 = vst [vmem:[%s172 + $0x64] sm:$0xf] %v1109
      %1366 = vst [vmem:[%s172 + $0x68] sm:$0xf] %v1110
      %1367 = vst [vmem:[%s172 + $0x6c] sm:$0xf] %v1111
      %1368 = vst [vmem:[%s172 + $0x70] sm:$0xf] %v1112
      %1369 = vst [vmem:[%s172 + $0x74] sm:$0xf] %v1113
      %1370 = vst [vmem:[%s172 + $0x78] sm:$0xf] %v1114
      %1371 = vst [vmem:[%s172 + $0x7c] sm:$0xf] %v1115
      %1372 = vst [vmem:[%s172 + $0x80] sm:$0xf] %v1116
      %1373 = vst [vmem:[%s172 + $0x84] sm:$0xf] %v1117
      %1374 = vst [vmem:[%s172 + $0x88] sm:$0xf] %v1118
      %1375 = vst [vmem:[%s172 + $0x8c] sm:$0xf] %v1119
      %1376 = vst [vmem:[%s172 + $0x90] sm:$0xf] %v1120
      %1377 = vst [vmem:[%s172 + $0x94] sm:$0xf] %v1121
      %1378 = vst [vmem:[%s172 + $0x98] sm:$0xf] %v1122
      %1379 = vst [vmem:[%s172 + $0x9c] sm:$0xf] %v1123
      %1380 = vst [vmem:[%s172 + $0xa0] sm:$0xf] %v1124
      %1381 = vst [vmem:[%s172 + $0xa4] sm:$0xf] %v1125
      %1382 = vst [vmem:[%s172 + $0xa8] sm:$0xf] %v1126
      %1383 = vst [vmem:[%s172 + $0xac] sm:$0xf] %v1127
      %1384 = vst [vmem:[%s172 + $0xb0] sm:$0xf] %v1128
      %1385 = vst [vmem:[%s172 + $0xb4] sm:$0xf] %v1129
      %1386 = vst [vmem:[%s172 + $0xb8] sm:$0xf] %v1130
      %1387 = vst [vmem:[%s172 + $0xbc] sm:$0xf] %v1131
      %1388 = vst [vmem:[%s172 + $0xc0] sm:$0xf] %v1132
      %1389 = vst [vmem:[%s172 + $0xc4] sm:$0xf] %v1133
      %1390 = vst [vmem:[%s172 + $0xc8] sm:$0xf] %v1134
      %1391 = vst [vmem:[%s172 + $0xcc] sm:$0xf] %v1135
      %1392 = vst [vmem:[%s172 + $0xd0] sm:$0xf] %v1136
      %1393 = vst [vmem:[%s172 + $0xd4] sm:$0xf] %v1137
      %1394 = vst [vmem:[%s172 + $0xd8] sm:$0xf] %v1138
      %1395 = vst [vmem:[%s172 + $0xdc] sm:$0xf] %v1139
      %1396 = vst [vmem:[%s172 + $0xe0] sm:$0xf] %v1140
      %1397 = vst [vmem:[%s172 + $0xe4] sm:$0xf] %v1141
      %1398 = vst [vmem:[%s172 + $0xe8] sm:$0xf] %v1142
      %1399 = vst [vmem:[%s172 + $0xec] sm:$0xf] %v1143
      %1400 = vst [vmem:[%s172 + $0xf0] sm:$0xf] %v1144
      %1401 = vst [vmem:[%s172 + $0xf4] sm:$0xf] %v1145
      %1402 = vst [vmem:[%s172 + $0xf8] sm:$0xf] %v1146
      %1403 = vst [vmem:[%s172 + $0xfc] sm:$0xf] %v1147
      %1404 = vst [vmem:[%s172 + $0x100] sm:$0xf] %v1148
      %1405 = vst [vmem:[%s172 + $0x104] sm:$0xf] %v1149
      %1406 = vst [vmem:[%s172 + $0x108] sm:$0xf] %v1150
      %1407 = vst [vmem:[%s172 + $0x10c] sm:$0xf] %v1151
      %1408 = vst [vmem:[%s172 + $0x110] sm:$0xf] %v1152
      %1409 = vst [vmem:[%s172 + $0x114] sm:$0xf] %v1153
      %1410 = vst [vmem:[%s172 + $0x118] sm:$0xf] %v1154
      %1411 = vst [vmem:[%s172 + $0x11c] sm:$0xf] %v1155
      %1412 = vst [vmem:[%s172 + $0x120] sm:$0xf] %v1156
      %1413 = vst [vmem:[%s172 + $0x124] sm:$0xf] %v1157
      %1414 = vst [vmem:[%s172 + $0x128] sm:$0xf] %v1158
      %1415 = vst [vmem:[%s172 + $0x12c] sm:$0xf] %v1159
      %1416 = vst [vmem:[%s172 + $0x130] sm:$0xf] %v1160
      %1417 = vst [vmem:[%s172 + $0x134] sm:$0xf] %v1161
      %1418 = vst [vmem:[%s172 + $0x138] sm:$0xf] %v1162
      %1419 = vst [vmem:[%s172 + $0x13c] sm:$0xf] %v1163
      %1420 = vst [vmem:[%s172 + $0x140] sm:$0xf] %v1164
      %1421 = vst [vmem:[%s172 + $0x144] sm:$0xf] %v1165
      %1422 = vst [vmem:[%s172 + $0x148] sm:$0xf] %v1166
      %1423 = vst [vmem:[%s172 + $0x14c] sm:$0xf] %v1167
      %1424 = vst [vmem:[%s172 + $0x150] sm:$0xf] %v1168
      %1425 = vst [vmem:[%s172 + $0x154] sm:$0xf] %v1169
      %1426 = vst [vmem:[%s172 + $0x158] sm:$0xf] %v1170
      %1427 = vst [vmem:[%s172 + $0x15c] sm:$0xf] %v1171
      %1428 = vst [vmem:[%s172 + $0x160] sm:$0xf] %v1172
      %1429 = vst [vmem:[%s172 + $0x164] sm:$0xf] %v1173
      %1430 = vst [vmem:[%s172 + $0x168] sm:$0xf] %v1174
      %1431 = vst [vmem:[%s172 + $0x16c] sm:$0xf] %v1175
      %1432 = vst [vmem:[%s172 + $0x170] sm:$0xf] %v1176
      %1433 = vst [vmem:[%s172 + $0x174] sm:$0xf] %v1177
      %1434 = vst [vmem:[%s172 + $0x178] sm:$0xf] %v1178
      %1435 = vst [vmem:[%s172 + $0x17c] sm:$0xf] %v1179
      %1436 = vst [vmem:[%s172 + $0x180] sm:$0xf] %v1180
      %1437 = vst [vmem:[%s172 + $0x184] sm:$0xf] %v1181
      %1438 = vst [vmem:[%s172 + $0x188] sm:$0xf] %v1182
      %1439 = vst [vmem:[%s172 + $0x18c] sm:$0xf] %v1183
      %1440 = vst [vmem:[%s172 + $0x190] sm:$0xf] %v1184
      %1441 = vst [vmem:[%s172 + $0x194] sm:$0xf] %v1185
      %1442 = vst [vmem:[%s172 + $0x198] sm:$0xf] %v1186
      %1443 = vst [vmem:[%s172 + $0x19c] sm:$0xf] %v1187
      %1444 = vst [vmem:[%s172 + $0x1a0] sm:$0xf] %v1188
      %1445 = vst [vmem:[%s172 + $0x1a4] sm:$0xf] %v1189
      %1446 = vst [vmem:[%s172 + $0x1a8] sm:$0xf] %v1190
      %1447 = vst [vmem:[%s172 + $0x1ac] sm:$0xf] %v1191
      %1448 = vst [vmem:[%s172 + $0x1b0] sm:$0xf] %v1192
      %1449 = vst [vmem:[%s172 + $0x1b4] sm:$0xf] %v1193
      %1450 = vst [vmem:[%s172 + $0x1b8] sm:$0xf] %v1194
      %1451 = vst [vmem:[%s172 + $0x1bc] sm:$0xf] %v1195
      %1452 = vst [vmem:[%s172 + $0x1c0] sm:$0xf] %v1196
      %1453 = vst [vmem:[%s172 + $0x1c4] sm:$0xf] %v1197
      %1454 = vst [vmem:[%s172 + $0x1c8] sm:$0xf] %v1198
      %1455 = vst [vmem:[%s172 + $0x1cc] sm:$0xf] %v1199
      %1456 = vst [vmem:[%s172 + $0x1d0] sm:$0xf] %v1200
      %1457 = vst [vmem:[%s172 + $0x1d4] sm:$0xf] %v1201
      %1458 = vst [vmem:[%s172 + $0x1d8] sm:$0xf] %v1202
      %1459 = vst [vmem:[%s172 + $0x1dc] sm:$0xf] %v1203
      %1460 = vst [vmem:[%s172 + $0x1e0] sm:$0xf] %v1204
      %1461 = vst [vmem:[%s172 + $0x1e4] sm:$0xf] %v1205
      %1462 = vst [vmem:[%s172 + $0x1e8] sm:$0xf] %v1206
      %1463 = vst [vmem:[%s172 + $0x1ec] sm:$0xf] %v1207
      %1464 = vst [vmem:[%s172 + $0x1f0] sm:$0xf] %v1208
      %1465 = vst [vmem:[%s172 + $0x1f4] sm:$0xf] %v1209
      %1466 = vst [vmem:[%s172 + $0x1f8] sm:$0xf] %v1210
      %1467 = vst [vmem:[%s172 + $0x1fc] sm:$0xf] %v1211
      %s1468 = smul.u32 128, %s14
      %p1469 = scmp.lt.s32.totalorder %s1468, 255
      %s1470 = scalar_select %p1469, %s1468, 255
      %s1471 = smul.addr %s1470, 4
      %s1472 = scalar_lea.vmem %s3, %s1471
      // Predicated region
      $region33: #{generator_forward.8} parent=31 // pred_check
        %p1473 = pneg %p100
      $region34: #{generator_forward.8} parent=31 // pred_check_branch
        %1475 = sbr.rel (%p1473) target = $region36
      $region35: #{generator_forward.8} parent=31 // pred_region
        %s1476 = smul.u32 128, %s14
      $region36: #{generator_forward.8} parent=31 // pred_fallthru
        _
    $region32: #{generator_forward.8} parent=5 // pred_fallthru
      _
    %p1477 = scmp.le.s32.totalorder 2, %s9
    // Predicated region
    $region37: #{generator_forward.8} parent=5 // pred_check
      %p1478 = pneg %p1477
    $region38: #{generator_forward.8} parent=5 // pred_check_branch
      %1480 = sbr.rel (%p1478) target = $region40
    $region39: #{generator_forward.8} parent=5 // pred_region
      %s1481 = ssub.s32 %s9, 2
      // Predicated region
      $region41: #{generator_forward.8} parent=39 // pred_check
        %p1482 = pneg %p106
      $region42: #{generator_forward.8} parent=39 // pred_check_branch
        %1484 = sbr.rel (%p1482) target = $region44
      $region43: #{generator_forward.8} parent=39 // pred_region
        %s1485 = smul.u32 128, %s15
        %p1486 = scmp.lt.s32.totalorder %s1485, 255
        %s1487 = scalar_select %p1486, %s1485, 255
        %s1488 = smul.addr %s1487, 4
        %s1489 = scalar_lea.vmem %s3, %s1488
      $region44: #{generator_forward.8} parent=39 // pred_fallthru
        _
    $region40: #{generator_forward.8} parent=5 // pred_fallthru
      _
  $region6: #{generator_forward.8} parent=0 // loop_footer
    %s13 = sadd.s32 1, %s9
  $region7: #{generator_forward.8} parent=0 // loop_footer_branch
    %8 = sbr.rel target = $region3
  $region8: #{generator_forward.8} parent=0 // loop_exit
    _

// kernel: generator_forward.7
$region0: #{generator_forward.7}
  #allocation0 [shape = 'u32[]', space=smem, size = 0x4, offset = 0x4, fixed_abs, tag = 'smem constant byte address 0x4 - core index']
  #allocation1 [shape = 'u32[144,128]{1,0:T(1,128)}', space=vmem, size = 0x12000, scoped, tag = 'internal scratch']
  %s0 = inlined_call_operand.vmem [shape: bf16[2048,256], index: 0, kind: input, shape index: {}]
  %s1 = inlined_call_operand.vmem [shape: bf16[256,128], index: 1, kind: input, shape index: {}]
  %s2 = inlined_call_operand.vmem [shape: bf16[2048,128], index: 2, kind: output, shape index: {0}]
  %s3 = inlined_call_operand.vmem [shape: f32[32,128], index: 3, kind: output, shape index: {1}]
  %s4 = inlined_call_operand.vmem [shape: f32[32,128], index: 4, kind: output, shape index: {2}]
  %5 = xla_tuple %s2, %s3, %s4
  %s6 = sld [smem:[#allocation0]]
  $region57: #{generator_forward.7} parent=0
    _
  %s8 = ssub.s32 1, %s6
  %s9 = scalar_select 0, %s8, %s6
  loop: start=0, step=1, limit=6
  $region2: #{generator_forward.7} parent=0 // loop_pre_header
    _
  $region3: #{generator_forward.7} parent=0 // loop_header
    %s11 = sphi 0, %s15
    %p12 = scmp.ge.s32.totalorder %s11, 6
    %s21 = sphi 0, %s23
    %s24 = sphi 0, %s21
    %s25 = sphi 0, %s24
    %s41 = sphi 0, %s25
    %s45 = sphi 0, %s45
    %s47 = sphi 0, %s45
    %s48 = sphi 0, %s47
    %s62 = sphi 0, %s48
    %s68 = sphi 0, %s70
    %s71 = sphi 0, %s68
    %s72 = sphi 0, %s71
    %s88 = sphi 0, %s72
    %s94 = sphi 0, %s96
    %s97 = sphi 0, %s94
    %s98 = sphi 0, %s97
    %s114 = sphi 0, %s98
    %s120 = sphi 0, %s122
    %s123 = sphi 0, %s120
    %s124 = sphi 0, %s123
    %s140 = sphi 0, %s124
  $region4: #{generator_forward.7} parent=0 // loop_header_branch
    %14 = sbr.rel (%p12) target = $region8
  $region5: #{generator_forward.7} parent=0 // loop_body
    %s16 = ssub.s32 %s11, 1
    %s17 = ssub.s32 %s11, 2
    %s18 = sadd.s32 %s11, 1
    %s19 = ssub.s32 %s11, %s18
    %p20 = scmp.eq.s32.totalorder %s19, 0
    %s22 = sadd.s32 %s21, 1
    %s23 = scalar_select %p20, %s21, %s22
    %p26 = pneg %p20
    %p27 = scmp.eq.s32.totalorder %s11, 3
    %p28 = por %p26, %p27
    %p29 = scmp.ne.s32.totalorder %s21, %s24
    %p30 = scmp.eq.s32.totalorder %s11, 0
    %p31 = por %p29, %p30
    %p32 = scmp.ne.s32.totalorder %s21, %s24
    %p33 = scmp.eq.s32.totalorder %s16, 3
    %p34 = por %p32, %p33
    %p35 = scmp.ne.s32.totalorder %s24, %s25
    %p36 = scmp.eq.s32.totalorder %s16, 0
    %p37 = por %p35, %p36
    %p38 = scmp.ne.s32.totalorder %s24, %s25
    %p39 = scmp.eq.s32.totalorder %s17, 3
    %p40 = por %p38, %p39
    %p42 = scmp.ne.s32.totalorder %s25, %s41
    %p43 = scmp.eq.s32.totalorder %s17, 0
    %p44 = por %p42, %p43
    %s46 = sadd.s32 %s45, 1
    %p49 = scmp.eq.s32.totalorder %s11, 3
    %p50 = scmp.ne.s32.totalorder %s45, %s47
    %p51 = scmp.eq.s32.totalorder %s11, 0
    %p52 = por %p50, %p51
    %p53 = scmp.ne.s32.totalorder %s45, %s47
    %p54 = scmp.eq.s32.totalorder %s16, 3
    %p55 = por %p53, %p54
    %p56 = scmp.ne.s32.totalorder %s47, %s48
    %p57 = scmp.eq.s32.totalorder %s16, 0
    %p58 = por %p56, %p57
    %p59 = scmp.ne.s32.totalorder %s47, %s48
    %p60 = scmp.eq.s32.totalorder %s17, 3
    %p61 = por %p59, %p60
    %p63 = scmp.ne.s32.totalorder %s48, %s62
    %p64 = scmp.eq.s32.totalorder %s17, 0
    %p65 = por %p63, %p64
    %s66 = ssub.s32 %s11, %s18
    %p67 = scmp.eq.s32.totalorder %s66, 0
    %s69 = sadd.s32 %s68, 1
    %s70 = scalar_select %p67, %s68, %s69
    %p73 = pneg %p67
    %p74 = scmp.eq.s32.totalorder %s11, 3
    %p75 = por %p73, %p74
    %p76 = scmp.ne.s32.totalorder %s68, %s71
    %p77 = scmp.eq.s32.totalorder %s11, 0
    %p78 = por %p76, %p77
    %p79 = scmp.ne.s32.totalorder %s68, %s71
    %p80 = scmp.eq.s32.totalorder %s16, 3
    %p81 = por %p79, %p80
    %p82 = scmp.ne.s32.totalorder %s71, %s72
    %p83 = scmp.eq.s32.totalorder %s16, 0
    %p84 = por %p82, %p83
    %p85 = scmp.ne.s32.totalorder %s71, %s72
    %p86 = scmp.eq.s32.totalorder %s17, 3
    %p87 = por %p85, %p86
    %p89 = scmp.ne.s32.totalorder %s72, %s88
    %p90 = scmp.eq.s32.totalorder %s17, 0
    %p91 = por %p89, %p90
    %s92 = ssub.s32 %s11, %s18
    %p93 = scmp.eq.s32.totalorder %s92, 0
    %s95 = sadd.s32 %s94, 1
    %s96 = scalar_select %p93, %s94, %s95
    %p99 = pneg %p93
    %p100 = scmp.eq.s32.totalorder %s11, 3
    %p101 = por %p99, %p100
    %p102 = scmp.ne.s32.totalorder %s94, %s97
    %p103 = scmp.eq.s32.totalorder %s11, 0
    %p104 = por %p102, %p103
    %p105 = scmp.ne.s32.totalorder %s94, %s97
    %p106 = scmp.eq.s32.totalorder %s16, 3
    %p107 = por %p105, %p106
    %p108 = scmp.ne.s32.totalorder %s97, %s98
    %p109 = scmp.eq.s32.totalorder %s16, 0
    %p110 = por %p108, %p109
    %p111 = scmp.ne.s32.totalorder %s97, %s98
    %p112 = scmp.eq.s32.totalorder %s17, 3
    %p113 = por %p111, %p112
    %p115 = scmp.ne.s32.totalorder %s98, %s114
    %p116 = scmp.eq.s32.totalorder %s17, 0
    %p117 = por %p115, %p116
    %s118 = ssub.s32 %s11, %s18
    %p119 = scmp.eq.s32.totalorder %s118, 0
    %s121 = sadd.s32 %s120, 1
    %s122 = scalar_select %p119, %s120, %s121
    %p125 = pneg %p119
    %p126 = scmp.eq.s32.totalorder %s11, 3
    %p127 = por %p125, %p126
    %p128 = scmp.ne.s32.totalorder %s120, %s123
    %p129 = scmp.eq.s32.totalorder %s11, 0
    %p130 = por %p128, %p129
    %p131 = scmp.ne.s32.totalorder %s120, %s123
    %p132 = scmp.eq.s32.totalorder %s16, 3
    %p133 = por %p131, %p132
    %p134 = scmp.ne.s32.totalorder %s123, %s124
    %p135 = scmp.eq.s32.totalorder %s16, 0
    %p136 = por %p134, %p135
    %p137 = scmp.ne.s32.totalorder %s123, %s124
    %p138 = scmp.eq.s32.totalorder %s17, 3
    %p139 = por %p137, %p138
    %p141 = scmp.ne.s32.totalorder %s124, %s140
    %p142 = scmp.eq.s32.totalorder %s17, 0
    %p143 = por %p141, %p142
    %p144 = scmp.le.s32.totalorder 1, %s11
    %p145 = scmp.lt.s32.totalorder %s11, 5
    %p146 = pnand %p144, %p145
    %p147 = pneg %p146
    // Predicated region
    $region9: #{generator_forward.7} parent=5 // pred_check
      _
    $region10: #{generator_forward.7} parent=5 // pred_check_branch
      %149 = sbr.rel (%p146) target = $region12
    $region11: #{generator_forward.7} parent=5 // pred_region
      %s150 = ssub.s32 %s11, 1
      // Predicated region
      $region13: #{generator_forward.7} parent=11 // pred_check
        %p151 = pneg %p58
      $region14: #{generator_forward.7} parent=11 // pred_check_branch
        %153 = sbr.rel (%p151) target = $region16
      $region15: #{generator_forward.7} parent=11 // pred_region
        _
      $region16: #{generator_forward.7} parent=11 // pred_fallthru
        _
    $region12: #{generator_forward.7} parent=5 // pred_fallthru
      _
    %p154 = scmp.lt.s32.totalorder %s11, 4
    // Predicated region
    $region17: #{generator_forward.7} parent=5 // pred_check
      %p155 = pneg %p154
    $region18: #{generator_forward.7} parent=5 // pred_check_branch
      %157 = sbr.rel (%p155) target = $region20
    $region19: #{generator_forward.7} parent=5 // pred_region
      // Predicated region
      $region21: #{generator_forward.7} parent=19 // pred_check
        %p158 = pneg %p31
      $region22: #{generator_forward.7} parent=19 // pred_check_branch
        %160 = sbr.rel (%p158) target = $region24
      $region23: #{generator_forward.7} parent=19 // pred_region
        %s161 = smul.u32 64, %s11
        %p162 = scmp.lt.s32.totalorder %s161, 255
        %s163 = scalar_select %p162, %s161, 255
        %s164 = smul.addr %s163, 2
        %s165 = smul.addr %s164, 4
        %s166 = scalar_lea.vmem %s0, %s165
        %s167 = smul.u32 64, %s11
      $region24: #{generator_forward.7} parent=19 // pred_fallthru
        _
    $region20: #{generator_forward.7} parent=5 // pred_fallthru
      _
    %p168 = scmp.le.s32.totalorder 1, %s11
    %p169 = scmp.lt.s32.totalorder %s11, 5
    %p170 = pnand %p168, %p169
    %p171 = pneg %p170
    // Predicated region
    $region25: #{generator_forward.7} parent=5 // pred_check
      _
    $region26: #{generator_forward.7} parent=5 // pred_check_branch
      %173 = sbr.rel (%p170) target = $region28
    $region27: #{generator_forward.7} parent=5 // pred_region
      %s174 = ssub.s32 %s11, 1
      %s175 = smul.u32 64, %s16
      %p176 = scmp.lt.s32.totalorder %s175, 255
      %s177 = scalar_select %p176, %s175, 255
      %s178 = smul.addr %s177, 2
      %s179 = smul.addr %s178, 4
      %s180 = scalar_lea.vmem %s0, %s179
      %p181 = pneg %p37
      %p182 = pneg %p34
      %p183 = pneg %p58
      %p184 = pneg %p55
      %p185 = pneg %p84
      %p186 = pneg %p81
      %s187 = smul.u32 64, %s16
      %p188 = scmp.lt.s32.totalorder %s187, 255
      %s189 = scalar_select %p188, %s187, 255
      %s190 = smul.addr %s189, 4
      %s191 = scalar_lea.vmem %s2, %s190
      %p192 = pneg %p110
      %p193 = pneg %p107
      %p194 = scmp.lt.s32.totalorder %s16, 3
      %s195 = scalar_select %p194, %s16, 3
      %s196 = smul.addr %s195, 8
      %s197 = scalar_lea.vmem %s3, %s196
      %p198 = pneg %p136
      %p199 = pneg %p133
      %p200 = scmp.lt.s32.totalorder %s16, 3
      %s201 = scalar_select %p200, %s16, 3
      %s202 = smul.addr %s201, 8
      %s203 = scalar_lea.vmem %s4, %s202
      %s204 = smul.u32 64, %s16
      %p205 = scmp.lt.s32.totalorder %s204, 255
      %s206 = scalar_select %p205, %s204, 255
      %s207 = smul.addr %s206, 2
      %s208 = smul.addr %s207, 4
      %s209 = scalar_lea.vmem %s0, %s208
      %s210 = smul.u32 64, %s16
      %s211 = smul.u32 64, %s16
      %p212 = scmp.lt.s32.totalorder %s211, 255
      %s213 = scalar_select %p212, %s211, 255
      %s214 = smul.addr %s213, 4
      %s215 = scalar_lea.vmem %s2, %s214
      %s216 = smul.u32 64, %s16
      %p217 = scmp.lt.s32.totalorder %s16, 3
      %s218 = scalar_select %p217, %s16, 3
      %s219 = smul.addr %s218, 8
      %s220 = scalar_lea.vmem %s3, %s219
      %p221 = scmp.lt.s32.totalorder %s16, 3
      %s222 = scalar_select %p221, %s16, 3
      %s223 = smul.addr %s222, 8
      %s224 = scalar_lea.vmem %s4, %s223
      %v226 = vld [vmem:[%s209] sm:$0xff]
      %v227 = vld [vmem:[%s209 + $0x8] sm:$0xff]
      %v228 = vld [vmem:[%s209 + $0x10] sm:$0xff]
      %v229 = vld [vmem:[%s209 + $0x18] sm:$0xff]
      %v230 = vld [vmem:[%s209 + $0x20] sm:$0xff]
      %v231 = vld [vmem:[%s209 + $0x28] sm:$0xff]
      %v232 = vld [vmem:[%s209 + $0x30] sm:$0xff]
      %v233 = vld [vmem:[%s209 + $0x38] sm:$0xff]
      %v234 = vld [vmem:[%s209 + $0x40] sm:$0xff]
      %v235 = vld [vmem:[%s209 + $0x48] sm:$0xff]
      %v236 = vld [vmem:[%s209 + $0x50] sm:$0xff]
      %v237 = vld [vmem:[%s209 + $0x58] sm:$0xff]
      %v238 = vld [vmem:[%s209 + $0x60] sm:$0xff]
      %v239 = vld [vmem:[%s209 + $0x68] sm:$0xff]
      %v240 = vld [vmem:[%s209 + $0x70] sm:$0xff]
      %v241 = vld [vmem:[%s209 + $0x78] sm:$0xff]
      %v242 = vld [vmem:[%s209 + $0x80] sm:$0xff]
      %v243 = vld [vmem:[%s209 + $0x88] sm:$0xff]
      %v244 = vld [vmem:[%s209 + $0x90] sm:$0xff]
      %v245 = vld [vmem:[%s209 + $0x98] sm:$0xff]
      %v246 = vld [vmem:[%s209 + $0xa0] sm:$0xff]
      %v247 = vld [vmem:[%s209 + $0xa8] sm:$0xff]
      %v248 = vld [vmem:[%s209 + $0xb0] sm:$0xff]
      %v249 = vld [vmem:[%s209 + $0xb8] sm:$0xff]
      %v250 = vld [vmem:[%s209 + $0xc0] sm:$0xff]
      %v251 = vld [vmem:[%s209 + $0xc8] sm:$0xff]
      %v252 = vld [vmem:[%s209 + $0xd0] sm:$0xff]
      %v253 = vld [vmem:[%s209 + $0xd8] sm:$0xff]
      %v254 = vld [vmem:[%s209 + $0xe0] sm:$0xff]
      %v255 = vld [vmem:[%s209 + $0xe8] sm:$0xff]
      %v256 = vld [vmem:[%s209 + $0xf0] sm:$0xff]
      %v257 = vld [vmem:[%s209 + $0xf8] sm:$0xff]
      %v258 = vld [vmem:[%s209 + $0x100] sm:$0xff]
      %v259 = vld [vmem:[%s209 + $0x108] sm:$0xff]
      %v260 = vld [vmem:[%s209 + $0x110] sm:$0xff]
      %v261 = vld [vmem:[%s209 + $0x118] sm:$0xff]
      %v262 = vld [vmem:[%s209 + $0x120] sm:$0xff]
      %v263 = vld [vmem:[%s209 + $0x128] sm:$0xff]
      %v264 = vld [vmem:[%s209 + $0x130] sm:$0xff]
      %v265 = vld [vmem:[%s209 + $0x138] sm:$0xff]
      %v266 = vld [vmem:[%s209 + $0x140] sm:$0xff]
      %v267 = vld [vmem:[%s209 + $0x148] sm:$0xff]
      %v268 = vld [vmem:[%s209 + $0x150] sm:$0xff]
      %v269 = vld [vmem:[%s209 + $0x158] sm:$0xff]
      %v270 = vld [vmem:[%s209 + $0x160] sm:$0xff]
      %v271 = vld [vmem:[%s209 + $0x168] sm:$0xff]
      %v272 = vld [vmem:[%s209 + $0x170] sm:$0xff]
      %v273 = vld [vmem:[%s209 + $0x178] sm:$0xff]
      %v274 = vld [vmem:[%s209 + $0x180] sm:$0xff]
      %v275 = vld [vmem:[%s209 + $0x188] sm:$0xff]
      %v276 = vld [vmem:[%s209 + $0x190] sm:$0xff]
      %v277 = vld [vmem:[%s209 + $0x198] sm:$0xff]
      %v278 = vld [vmem:[%s209 + $0x1a0] sm:$0xff]
      %v279 = vld [vmem:[%s209 + $0x1a8] sm:$0xff]
      %v280 = vld [vmem:[%s209 + $0x1b0] sm:$0xff]
      %v281 = vld [vmem:[%s209 + $0x1b8] sm:$0xff]
      %v282 = vld [vmem:[%s209 + $0x1c0] sm:$0xff]
      %v283 = vld [vmem:[%s209 + $0x1c8] sm:$0xff]
      %v284 = vld [vmem:[%s209 + $0x1d0] sm:$0xff]
      %v285 = vld [vmem:[%s209 + $0x1d8] sm:$0xff]
      %v286 = vld [vmem:[%s209 + $0x1e0] sm:$0xff]
      %v287 = vld [vmem:[%s209 + $0x1e8] sm:$0xff]
      %v288 = vld [vmem:[%s209 + $0x1f0] sm:$0xff]
      %v289 = vld [vmem:[%s209 + $0x1f8] sm:$0xff]
      %v290 = vld [vmem:[%s1] sm:$0xf]
      %v291 = vld [vmem:[%s1 + $0x4] sm:$0xf]
      %v292 = vld [vmem:[%s1 + $0x8] sm:$0xf]
      %v293 = vld [vmem:[%s1 + $0xc] sm:$0xf]
      %v294 = vld [vmem:[%s1 + $0x10] sm:$0xf]
      %v295 = vld [vmem:[%s1 + $0x14] sm:$0xf]
      %v296 = vld [vmem:[%s1 + $0x18] sm:$0xf]
      %v297 = vld [vmem:[%s1 + $0x1c] sm:$0xf]
      %v298 = vld [vmem:[%s1 + $0x20] sm:$0xf]
      %v299 = vld [vmem:[%s1 + $0x24] sm:$0xf]
      %v300 = vld [vmem:[%s1 + $0x28] sm:$0xf]
      %v301 = vld [vmem:[%s1 + $0x2c] sm:$0xf]
      %v302 = vld [vmem:[%s1 + $0x30] sm:$0xf]
      %v303 = vld [vmem:[%s1 + $0x34] sm:$0xf]
      %v304 = vld [vmem:[%s1 + $0x38] sm:$0xf]
      %v305 = vld [vmem:[%s1 + $0x3c] sm:$0xf]
      %v306 = vld [vmem:[%s1 + $0x40] sm:$0xf]
      %v307 = vld [vmem:[%s1 + $0x44] sm:$0xf]
      %v308 = vld [vmem:[%s1 + $0x48] sm:$0xf]
      %v309 = vld [vmem:[%s1 + $0x4c] sm:$0xf]
      %v310 = vld [vmem:[%s1 + $0x50] sm:$0xf]
      %v311 = vld [vmem:[%s1 + $0x54] sm:$0xf]
      %v312 = vld [vmem:[%s1 + $0x58] sm:$0xf]
      %v313 = vld [vmem:[%s1 + $0x5c] sm:$0xf]
      %v314 = vld [vmem:[%s1 + $0x60] sm:$0xf]
      %v315 = vld [vmem:[%s1 + $0x64] sm:$0xf]
      %v316 = vld [vmem:[%s1 + $0x68] sm:$0xf]
      %v317 = vld [vmem:[%s1 + $0x6c] sm:$0xf]
      %v318 = vld [vmem:[%s1 + $0x70] sm:$0xf]
      %v319 = vld [vmem:[%s1 + $0x74] sm:$0xf]
      %v320 = vld [vmem:[%s1 + $0x78] sm:$0xf]
      %v321 = vld [vmem:[%s1 + $0x7c] sm:$0xf]
      %v386 = vunpack.c.l.b16 %v226
      %v387 = vunpack.c.h.b16 %v226
      %v388 = vunpack.c.l.b16 %v227
      %v389 = vunpack.c.h.b16 %v227
      %v390 = vunpack.c.l.b16 %v228
      %v391 = vunpack.c.h.b16 %v228
      %v392 = vunpack.c.l.b16 %v229
      %v393 = vunpack.c.h.b16 %v229
      %v394 = vunpack.c.l.b16 %v230
      %v395 = vunpack.c.h.b16 %v230
      %v396 = vunpack.c.l.b16 %v231
      %v397 = vunpack.c.h.b16 %v231
      %v398 = vunpack.c.l.b16 %v232
      %v399 = vunpack.c.h.b16 %v232
      %v400 = vunpack.c.l.b16 %v233
      %v401 = vunpack.c.h.b16 %v233
      %v402 = vunpack.c.l.b16 %v234
      %v403 = vunpack.c.h.b16 %v234
      %v404 = vunpack.c.l.b16 %v235
      %v405 = vunpack.c.h.b16 %v235
      %v406 = vunpack.c.l.b16 %v236
      %v407 = vunpack.c.h.b16 %v236
      %v408 = vunpack.c.l.b16 %v237
      %v409 = vunpack.c.h.b16 %v237
      %v410 = vunpack.c.l.b16 %v238
      %v411 = vunpack.c.h.b16 %v238
      %v412 = vunpack.c.l.b16 %v239
      %v413 = vunpack.c.h.b16 %v239
      %v414 = vunpack.c.l.b16 %v240
      %v415 = vunpack.c.h.b16 %v240
      %v416 = vunpack.c.l.b16 %v241
      %v417 = vunpack.c.h.b16 %v241
      %v418 = vunpack.c.l.b16 %v242
      %v419 = vunpack.c.h.b16 %v242
      %v420 = vunpack.c.l.b16 %v243
      %v421 = vunpack.c.h.b16 %v243
      %v422 = vunpack.c.l.b16 %v244
      %v423 = vunpack.c.h.b16 %v244
      %v424 = vunpack.c.l.b16 %v245
      %v425 = vunpack.c.h.b16 %v245
      %v426 = vunpack.c.l.b16 %v246
      %v427 = vunpack.c.h.b16 %v246
      %v428 = vunpack.c.l.b16 %v247
      %v429 = vunpack.c.h.b16 %v247
      %v430 = vunpack.c.l.b16 %v248
      %v431 = vunpack.c.h.b16 %v248
      %v432 = vunpack.c.l.b16 %v249
      %v433 = vunpack.c.h.b16 %v249
      %v434 = vunpack.c.l.b16 %v250
      %v435 = vunpack.c.h.b16 %v250
      %v436 = vunpack.c.l.b16 %v251
      %v437 = vunpack.c.h.b16 %v251
      %v438 = vunpack.c.l.b16 %v252
      %v439 = vunpack.c.h.b16 %v252
      %v440 = vunpack.c.l.b16 %v253
      %v441 = vunpack.c.h.b16 %v253
      %v442 = vunpack.c.l.b16 %v254
      %v443 = vunpack.c.h.b16 %v254
      %v444 = vunpack.c.l.b16 %v255
      %v445 = vunpack.c.h.b16 %v255
      %v446 = vunpack.c.l.b16 %v256
      %v447 = vunpack.c.h.b16 %v256
      %v448 = vunpack.c.l.b16 %v257
      %v449 = vunpack.c.h.b16 %v257
      %v450 = vunpack.c.l.b16 %v258
      %v451 = vunpack.c.h.b16 %v258
      %v452 = vunpack.c.l.b16 %v259
      %v453 = vunpack.c.h.b16 %v259
      %v454 = vunpack.c.l.b16 %v260
      %v455 = vunpack.c.h.b16 %v260
      %v456 = vunpack.c.l.b16 %v261
      %v457 = vunpack.c.h.b16 %v261
      %v458 = vunpack.c.l.b16 %v262
      %v459 = vunpack.c.h.b16 %v262
      %v460 = vunpack.c.l.b16 %v263
      %v461 = vunpack.c.h.b16 %v263
      %v462 = vunpack.c.l.b16 %v264
      %v463 = vunpack.c.h.b16 %v264
      %v464 = vunpack.c.l.b16 %v265
      %v465 = vunpack.c.h.b16 %v265
      %v466 = vunpack.c.l.b16 %v266
      %v467 = vunpack.c.h.b16 %v266
      %v468 = vunpack.c.l.b16 %v267
      %v469 = vunpack.c.h.b16 %v267
      %v470 = vunpack.c.l.b16 %v268
      %v471 = vunpack.c.h.b16 %v268
      %v472 = vunpack.c.l.b16 %v269
      %v473 = vunpack.c.h.b16 %v269
      %v474 = vunpack.c.l.b16 %v270
      %v475 = vunpack.c.h.b16 %v270
      %v476 = vunpack.c.l.b16 %v271
      %v477 = vunpack.c.h.b16 %v271
      %v478 = vunpack.c.l.b16 %v272
      %v479 = vunpack.c.h.b16 %v272
      %v480 = vunpack.c.l.b16 %v273
      %v481 = vunpack.c.h.b16 %v273
      %v482 = vunpack.c.l.b16 %v274
      %v483 = vunpack.c.h.b16 %v274
      %v484 = vunpack.c.l.b16 %v275
      %v485 = vunpack.c.h.b16 %v275
      %v486 = vunpack.c.l.b16 %v276
      %v487 = vunpack.c.h.b16 %v276
      %v488 = vunpack.c.l.b16 %v277
      %v489 = vunpack.c.h.b16 %v277
      %v490 = vunpack.c.l.b16 %v278
      %v491 = vunpack.c.h.b16 %v278
      %v492 = vunpack.c.l.b16 %v279
      %v493 = vunpack.c.h.b16 %v279
      %v494 = vunpack.c.l.b16 %v280
      %v495 = vunpack.c.h.b16 %v280
      %v496 = vunpack.c.l.b16 %v281
      %v497 = vunpack.c.h.b16 %v281
      %v498 = vunpack.c.l.b16 %v282
      %v499 = vunpack.c.h.b16 %v282
      %v500 = vunpack.c.l.b16 %v283
      %v501 = vunpack.c.h.b16 %v283
      %v502 = vunpack.c.l.b16 %v284
      %v503 = vunpack.c.h.b16 %v284
      %v504 = vunpack.c.l.b16 %v285
      %v505 = vunpack.c.h.b16 %v285
      %v506 = vunpack.c.l.b16 %v286
      %v507 = vunpack.c.h.b16 %v286
      %v508 = vunpack.c.l.b16 %v287
      %v509 = vunpack.c.h.b16 %v287
      %v510 = vunpack.c.l.b16 %v288
      %v511 = vunpack.c.h.b16 %v288
      %v512 = vunpack.c.l.b16 %v289
      %v513 = vunpack.c.h.b16 %v289
      %v514 = vpack.c.b16 %v388, %v386
      %v515 = vpack.c.b16 %v389, %v387
      %v516 = vpack.c.b16 %v392, %v390
      %v517 = vpack.c.b16 %v393, %v391
      %v518 = vpack.c.b16 %v396, %v394
      %v519 = vpack.c.b16 %v397, %v395
      %v520 = vpack.c.b16 %v400, %v398
      %v521 = vpack.c.b16 %v401, %v399
      %v522 = vpack.c.b16 %v404, %v402
      %v523 = vpack.c.b16 %v405, %v403
      %v524 = vpack.c.b16 %v408, %v406
      %v525 = vpack.c.b16 %v409, %v407
      %v526 = vpack.c.b16 %v412, %v410
      %v527 = vpack.c.b16 %v413, %v411
      %v528 = vpack.c.b16 %v416, %v414
      %v529 = vpack.c.b16 %v417, %v415
      %v530 = vpack.c.b16 %v420, %v418
      %v531 = vpack.c.b16 %v421, %v419
      %v532 = vpack.c.b16 %v424, %v422
      %v533 = vpack.c.b16 %v425, %v423
      %v534 = vpack.c.b16 %v428, %v426
      %v535 = vpack.c.b16 %v429, %v427
      %v536 = vpack.c.b16 %v432, %v430
      %v537 = vpack.c.b16 %v433, %v431
      %v538 = vpack.c.b16 %v436, %v434
      %v539 = vpack.c.b16 %v437, %v435
      %v540 = vpack.c.b16 %v440, %v438
      %v541 = vpack.c.b16 %v441, %v439
      %v542 = vpack.c.b16 %v444, %v442
      %v543 = vpack.c.b16 %v445, %v443
      %v544 = vpack.c.b16 %v448, %v446
      %v545 = vpack.c.b16 %v449, %v447
      %v546 = vpack.c.b16 %v452, %v450
      %v547 = vpack.c.b16 %v453, %v451
      %v548 = vpack.c.b16 %v456, %v454
      %v549 = vpack.c.b16 %v457, %v455
      %v550 = vpack.c.b16 %v460, %v458
      %v551 = vpack.c.b16 %v461, %v459
      %v552 = vpack.c.b16 %v464, %v462
      %v553 = vpack.c.b16 %v465, %v463
      %v554 = vpack.c.b16 %v468, %v466
      %v555 = vpack.c.b16 %v469, %v467
      %v556 = vpack.c.b16 %v472, %v470
      %v557 = vpack.c.b16 %v473, %v471
      %v558 = vpack.c.b16 %v476, %v474
      %v559 = vpack.c.b16 %v477, %v475
      %v560 = vpack.c.b16 %v480, %v478
      %v561 = vpack.c.b16 %v481, %v479
      %v562 = vpack.c.b16 %v484, %v482
      %v563 = vpack.c.b16 %v485, %v483
      %v564 = vpack.c.b16 %v488, %v486
      %v565 = vpack.c.b16 %v489, %v487
      %v566 = vpack.c.b16 %v492, %v490
      %v567 = vpack.c.b16 %v493, %v491
      %v568 = vpack.c.b16 %v496, %v494
      %v569 = vpack.c.b16 %v497, %v495
      %v570 = vpack.c.b16 %v500, %v498
      %v571 = vpack.c.b16 %v501, %v499
      %v572 = vpack.c.b16 %v504, %v502
      %v573 = vpack.c.b16 %v505, %v503
      %v574 = vpack.c.b16 %v508, %v506
      %v575 = vpack.c.b16 %v509, %v507
      %v576 = vpack.c.b16 %v512, %v510
      %v577 = vpack.c.b16 %v513, %v511
      %v674 = vunpack.c.l.b16 %v290
      %v675 = vunpack.c.l.b16 %v291
      %v676 = vunpack.c.l.b16 %v292
      %v677 = vunpack.c.l.b16 %v293
      %v678 = vunpack.c.l.b16 %v294
      %v679 = vunpack.c.l.b16 %v295
      %v680 = vunpack.c.l.b16 %v296
      %v681 = vunpack.c.l.b16 %v297
      %v682 = vunpack.c.l.b16 %v298
      %v683 = vunpack.c.l.b16 %v299
      %v684 = vunpack.c.l.b16 %v300
      %v685 = vunpack.c.l.b16 %v301
      %v686 = vunpack.c.l.b16 %v302
      %v687 = vunpack.c.l.b16 %v303
      %v688 = vunpack.c.l.b16 %v304
      %v689 = vunpack.c.l.b16 %v305
      %v690 = vunpack.c.l.b16 %v306
      %v691 = vunpack.c.l.b16 %v307
      %v692 = vunpack.c.l.b16 %v308
      %v693 = vunpack.c.l.b16 %v309
      %v694 = vunpack.c.l.b16 %v310
      %v695 = vunpack.c.l.b16 %v311
      %v696 = vunpack.c.l.b16 %v312
      %v697 = vunpack.c.l.b16 %v313
      %v698 = vunpack.c.l.b16 %v314
      %v699 = vunpack.c.l.b16 %v315
      %v700 = vunpack.c.l.b16 %v316
      %v701 = vunpack.c.l.b16 %v317
      %v702 = vunpack.c.l.b16 %v318
      %v703 = vunpack.c.l.b16 %v319
      %v704 = vunpack.c.l.b16 %v320
      %v705 = vunpack.c.l.b16 %v321
      %v706 = vpack.c.b16 %v675, %v674
      %v707 = vpack.c.b16 %v677, %v676
      %v708 = vpack.c.b16 %v679, %v678
      %v709 = vpack.c.b16 %v681, %v680
      %v710 = vpack.c.b16 %v683, %v682
      %v711 = vpack.c.b16 %v685, %v684
      %v712 = vpack.c.b16 %v687, %v686
      %v713 = vpack.c.b16 %v689, %v688
      %v714 = vpack.c.b16 %v691, %v690
      %v715 = vpack.c.b16 %v693, %v692
      %v716 = vpack.c.b16 %v695, %v694
      %v717 = vpack.c.b16 %v697, %v696
      %v718 = vpack.c.b16 %v699, %v698
      %v719 = vpack.c.b16 %v701, %v700
      %v720 = vpack.c.b16 %v703, %v702
      %v721 = vpack.c.b16 %v705, %v704
      %738 = vmatprep.subr.bf16.mxu0 0
      %739 = vmatpush1.bf16.msra.mxu0 %v713
      %740 = vmatprep.subr.bf16.mxu0 0
      %741 = vmatpush1.bf16.msra.mxu0 %v712
      %742 = vmatprep.subr.bf16.mxu0 0
      %743 = vmatpush1.bf16.msra.mxu0 %v711
      %744 = vmatprep.subr.bf16.mxu0 0
      %745 = vmatpush1.bf16.msra.mxu0 %v710
      %746 = vmatprep.subr.bf16.mxu0 0
      %747 = vmatpush1.bf16.msra.mxu0 %v709
      %748 = vmatprep.subr.bf16.mxu0 0
      %749 = vmatpush1.bf16.msra.mxu0 %v708
      %750 = vmatprep.subr.bf16.mxu0 0
      %751 = vmatpush1.bf16.msra.mxu0 %v707
      %752 = vmatprep.subr.bf16.mxu0 0
      %753 = vmatpush1.bf16.msra.mxu0 %v706
      %754 = vmatprep.subr.bf16.mxu0 0
      %755 = vmatpush2.bf16.msra.mxu0 %v721
      %756 = vmatprep.subr.bf16.mxu0 0
      %757 = vmatpush2.bf16.msra.mxu0 %v720
      %758 = vmatprep.subr.bf16.mxu0 0
      %759 = vmatpush2.bf16.msra.mxu0 %v719
      %760 = vmatprep.subr.bf16.mxu0 0
      %761 = vmatpush2.bf16.msra.mxu0 %v718
      %762 = vmatprep.subr.bf16.mxu0 0
      %763 = vmatpush2.bf16.msra.mxu0 %v717
      %764 = vmatprep.subr.bf16.mxu0 0
      %765 = vmatpush2.bf16.msra.mxu0 %v716
      %766 = vmatprep.subr.bf16.mxu0 0
      %767 = vmatpush2.bf16.msra.mxu0 %v715
      %768 = vmatprep.subr.bf16.mxu0 0
      %769 = vmatpush2.bf16.msra.mxu0 %v714
      %770 = vmatprep.mubr.bf16.mxu0 %v515
      %771 = vmatmul.mubr.bf16.gmra.mxu0 %v514
      %v772 = vpop.f32.mrf.mxu0
      %v773 = vadd.f32 0.0, %v772
      %v774 = vpop.f32.mrf.mxu0
      %v775 = vpop.f32.mrf.mxu0
      %v776 = vadd.f32 0.0, %v775
      %v777 = vpop.f32.mrf.mxu0
      %778 = vmatprep.mubr.bf16.mxu0 %v517
      %779 = vmatmul.mubr.bf16.gmra.mxu0 %v516
      %v780 = vpop.f32.mrf.mxu0
      %v781 = vadd.f32 0.0, %v780
      %v782 = vpop.f32.mrf.mxu0
      %v783 = vpop.f32.mrf.mxu0
      %v784 = vadd.f32 0.0, %v783
      %v785 = vpop.f32.mrf.mxu0
      %786 = vmatprep.mubr.bf16.mxu0 %v519
      %787 = vmatmul.mubr.bf16.gmra.mxu0 %v518
      %v788 = vpop.f32.mrf.mxu0
      %v789 = vadd.f32 0.0, %v788
      %v790 = vpop.f32.mrf.mxu0
      %v791 = vpop.f32.mrf.mxu0
      %v792 = vadd.f32 0.0, %v791
      %v793 = vpop.f32.mrf.mxu0
      %794 = vmatprep.mubr.bf16.mxu0 %v521
      %795 = vmatmul.mubr.bf16.gmra.mxu0 %v520
      %v796 = vpop.f32.mrf.mxu0
      %v797 = vadd.f32 0.0, %v796
      %v798 = vpop.f32.mrf.mxu0
      %v799 = vpop.f32.mrf.mxu0
      %v800 = vadd.f32 0.0, %v799
      %v801 = vpop.f32.mrf.mxu0
      %802 = vmatprep.mubr.bf16.mxu0 %v523
      %803 = vmatmul.mubr.bf16.gmra.mxu0 %v522
      %v804 = vpop.f32.mrf.mxu0
      %v805 = vadd.f32 0.0, %v804
      %v806 = vpop.f32.mrf.mxu0
      %v807 = vpop.f32.mrf.mxu0
      %v808 = vadd.f32 0.0, %v807
      %v809 = vpop.f32.mrf.mxu0
      %810 = vmatprep.mubr.bf16.mxu0 %v525
      %811 = vmatmul.mubr.bf16.gmra.mxu0 %v524
      %v812 = vpop.f32.mrf.mxu0
      %v813 = vadd.f32 0.0, %v812
      %v814 = vpop.f32.mrf.mxu0
      %v815 = vpop.f32.mrf.mxu0
      %v816 = vadd.f32 0.0, %v815
      %v817 = vpop.f32.mrf.mxu0
      %818 = vmatprep.mubr.bf16.mxu0 %v527
      %819 = vmatmul.mubr.bf16.gmra.mxu0 %v526
      %v820 = vpop.f32.mrf.mxu0
      %v821 = vadd.f32 0.0, %v820
      %v822 = vpop.f32.mrf.mxu0
      %v823 = vpop.f32.mrf.mxu0
      %v824 = vadd.f32 0.0, %v823
      %v825 = vpop.f32.mrf.mxu0
      %826 = vmatprep.mubr.bf16.mxu0 %v529
      %827 = vmatmul.mubr.bf16.gmra.mxu0 %v528
      %v828 = vpop.f32.mrf.mxu0
      %v829 = vadd.f32 0.0, %v828
      %v830 = vpop.f32.mrf.mxu0
      %v831 = vpop.f32.mrf.mxu0
      %v832 = vadd.f32 0.0, %v831
      %v833 = vpop.f32.mrf.mxu0
      %834 = vmatprep.mubr.bf16.mxu0 %v531
      %835 = vmatmul.mubr.bf16.gmra.mxu0 %v530
      %v836 = vpop.f32.mrf.mxu0
      %v837 = vadd.f32 0.0, %v836
      %v838 = vpop.f32.mrf.mxu0
      %v839 = vpop.f32.mrf.mxu0
      %v840 = vadd.f32 0.0, %v839
      %v841 = vpop.f32.mrf.mxu0
      %842 = vmatprep.mubr.bf16.mxu0 %v533
      %843 = vmatmul.mubr.bf16.gmra.mxu0 %v532
      %v844 = vpop.f32.mrf.mxu0
      %v845 = vadd.f32 0.0, %v844
      %v846 = vpop.f32.mrf.mxu0
      %v847 = vpop.f32.mrf.mxu0
      %v848 = vadd.f32 0.0, %v847
      %v849 = vpop.f32.mrf.mxu0
      %850 = vmatprep.mubr.bf16.mxu0 %v535
      %851 = vmatmul.mubr.bf16.gmra.mxu0 %v534
      %v852 = vpop.f32.mrf.mxu0
      %v853 = vadd.f32 0.0, %v852
      %v854 = vpop.f32.mrf.mxu0
      %v855 = vpop.f32.mrf.mxu0
      %v856 = vadd.f32 0.0, %v855
      %v857 = vpop.f32.mrf.mxu0
      %858 = vmatprep.mubr.bf16.mxu0 %v537
      %859 = vmatmul.mubr.bf16.gmra.mxu0 %v536
      %v860 = vpop.f32.mrf.mxu0
      %v861 = vadd.f32 0.0, %v860
      %v862 = vpop.f32.mrf.mxu0
      %v863 = vpop.f32.mrf.mxu0
      %v864 = vadd.f32 0.0, %v863
      %v865 = vpop.f32.mrf.mxu0
      %866 = vmatprep.mubr.bf16.mxu0 %v539
      %867 = vmatmul.mubr.bf16.gmra.mxu0 %v538
      %v868 = vpop.f32.mrf.mxu0
      %v869 = vadd.f32 0.0, %v868
      %v870 = vpop.f32.mrf.mxu0
      %v871 = vpop.f32.mrf.mxu0
      %v872 = vadd.f32 0.0, %v871
      %v873 = vpop.f32.mrf.mxu0
      %874 = vmatprep.mubr.bf16.mxu0 %v541
      %875 = vmatmul.mubr.bf16.gmra.mxu0 %v540
      %v876 = vpop.f32.mrf.mxu0
      %v877 = vadd.f32 0.0, %v876
      %v878 = vpop.f32.mrf.mxu0
      %v879 = vpop.f32.mrf.mxu0
      %v880 = vadd.f32 0.0, %v879
      %v881 = vpop.f32.mrf.mxu0
      %882 = vmatprep.mubr.bf16.mxu0 %v543
      %883 = vmatmul.mubr.bf16.gmra.mxu0 %v542
      %v884 = vpop.f32.mrf.mxu0
      %v885 = vadd.f32 0.0, %v884
      %v886 = vpop.f32.mrf.mxu0
      %v887 = vpop.f32.mrf.mxu0
      %v888 = vadd.f32 0.0, %v887
      %v889 = vpop.f32.mrf.mxu0
      %890 = vmatprep.mubr.bf16.mxu0 %v545
      %891 = vmatmul.mubr.bf16.gmra.mxu0 %v544
      %v892 = vpop.f32.mrf.mxu0
      %v893 = vadd.f32 0.0, %v892
      %v894 = vpop.f32.mrf.mxu0
      %v895 = vpop.f32.mrf.mxu0
      %v896 = vadd.f32 0.0, %v895
      %v897 = vpop.f32.mrf.mxu0
      %898 = vmatprep.mubr.bf16.mxu0 %v547
      %899 = vmatmul.mubr.bf16.gmra.mxu0 %v546
      %v900 = vpop.f32.mrf.mxu0
      %v901 = vadd.f32 0.0, %v900
      %v902 = vpop.f32.mrf.mxu0
      %v903 = vpop.f32.mrf.mxu0
      %v904 = vadd.f32 0.0, %v903
      %v905 = vpop.f32.mrf.mxu0
      %906 = vmatprep.mubr.bf16.mxu0 %v549
      %907 = vmatmul.mubr.bf16.gmra.mxu0 %v548
      %v908 = vpop.f32.mrf.mxu0
      %v909 = vadd.f32 0.0, %v908
      %v910 = vpop.f32.mrf.mxu0
      %v911 = vpop.f32.mrf.mxu0
      %v912 = vadd.f32 0.0, %v911
      %v913 = vpop.f32.mrf.mxu0
      %914 = vmatprep.mubr.bf16.mxu0 %v551
      %915 = vmatmul.mubr.bf16.gmra.mxu0 %v550
      %v916 = vpop.f32.mrf.mxu0
      %v917 = vadd.f32 0.0, %v916
      %v918 = vpop.f32.mrf.mxu0
      %v919 = vpop.f32.mrf.mxu0
      %v920 = vadd.f32 0.0, %v919
      %v921 = vpop.f32.mrf.mxu0
      %922 = vmatprep.mubr.bf16.mxu0 %v553
      %923 = vmatmul.mubr.bf16.gmra.mxu0 %v552
      %v924 = vpop.f32.mrf.mxu0
      %v925 = vadd.f32 0.0, %v924
      %v926 = vpop.f32.mrf.mxu0
      %v927 = vpop.f32.mrf.mxu0
      %v928 = vadd.f32 0.0, %v927
      %v929 = vpop.f32.mrf.mxu0
      %930 = vmatprep.mubr.bf16.mxu0 %v555
      %931 = vmatmul.mubr.bf16.gmra.mxu0 %v554
      %v932 = vpop.f32.mrf.mxu0
      %v933 = vadd.f32 0.0, %v932
      %v934 = vpop.f32.mrf.mxu0
      %v935 = vpop.f32.mrf.mxu0
      %v936 = vadd.f32 0.0, %v935
      %v937 = vpop.f32.mrf.mxu0
      %938 = vmatprep.mubr.bf16.mxu0 %v557
      %939 = vmatmul.mubr.bf16.gmra.mxu0 %v556
      %v940 = vpop.f32.mrf.mxu0
      %v941 = vadd.f32 0.0, %v940
      %v942 = vpop.f32.mrf.mxu0
      %v943 = vpop.f32.mrf.mxu0
      %v944 = vadd.f32 0.0, %v943
      %v945 = vpop.f32.mrf.mxu0
      %946 = vmatprep.mubr.bf16.mxu0 %v559
      %947 = vmatmul.mubr.bf16.gmra.mxu0 %v558
      %v948 = vpop.f32.mrf.mxu0
      %v949 = vadd.f32 0.0, %v948
      %v950 = vpop.f32.mrf.mxu0
      %v951 = vpop.f32.mrf.mxu0
      %v952 = vadd.f32 0.0, %v951
      %v953 = vpop.f32.mrf.mxu0
      %954 = vmatprep.mubr.bf16.mxu0 %v561
      %955 = vmatmul.mubr.bf16.gmra.mxu0 %v560
      %v956 = vpop.f32.mrf.mxu0
      %v957 = vadd.f32 0.0, %v956
      %v958 = vpop.f32.mrf.mxu0
      %v959 = vpop.f32.mrf.mxu0
      %v960 = vadd.f32 0.0, %v959
      %v961 = vpop.f32.mrf.mxu0
      %962 = vmatprep.mubr.bf16.mxu0 %v563
      %963 = vmatmul.mubr.bf16.gmra.mxu0 %v562
      %v964 = vpop.f32.mrf.mxu0
      %v965 = vadd.f32 0.0, %v964
      %v966 = vpop.f32.mrf.mxu0
      %v967 = vpop.f32.mrf.mxu0
      %v968 = vadd.f32 0.0, %v967
      %v969 = vpop.f32.mrf.mxu0
      %970 = vmatprep.mubr.bf16.mxu0 %v565
      %971 = vmatmul.mubr.bf16.gmra.mxu0 %v564
      %v972 = vpop.f32.mrf.mxu0
      %v973 = vadd.f32 0.0, %v972
      %v974 = vpop.f32.mrf.mxu0
      %v975 = vpop.f32.mrf.mxu0
      %v976 = vadd.f32 0.0, %v975
      %v977 = vpop.f32.mrf.mxu0
      %978 = vmatprep.mubr.bf16.mxu0 %v567
      %979 = vmatmul.mubr.bf16.gmra.mxu0 %v566
      %v980 = vpop.f32.mrf.mxu0
      %v981 = vadd.f32 0.0, %v980
      %v982 = vpop.f32.mrf.mxu0
      %v983 = vpop.f32.mrf.mxu0
      %v984 = vadd.f32 0.0, %v983
      %v985 = vpop.f32.mrf.mxu0
      %986 = vmatprep.mubr.bf16.mxu0 %v569
      %987 = vmatmul.mubr.bf16.gmra.mxu0 %v568
      %v988 = vpop.f32.mrf.mxu0
      %v989 = vadd.f32 0.0, %v988
      %v990 = vpop.f32.mrf.mxu0
      %v991 = vpop.f32.mrf.mxu0
      %v992 = vadd.f32 0.0, %v991
      %v993 = vpop.f32.mrf.mxu0
      %994 = vmatprep.mubr.bf16.mxu0 %v571
      %995 = vmatmul.mubr.bf16.gmra.mxu0 %v570
      %v996 = vpop.f32.mrf.mxu0
      %v997 = vadd.f32 0.0, %v996
      %v998 = vpop.f32.mrf.mxu0
      %v999 = vpop.f32.mrf.mxu0
      %v1000 = vadd.f32 0.0, %v999
      %v1001 = vpop.f32.mrf.mxu0
      %1002 = vmatprep.mubr.bf16.mxu0 %v573
      %1003 = vmatmul.mubr.bf16.gmra.mxu0 %v572
      %v1004 = vpop.f32.mrf.mxu0
      %v1005 = vadd.f32 0.0, %v1004
      %v1006 = vpop.f32.mrf.mxu0
      %v1007 = vpop.f32.mrf.mxu0
      %v1008 = vadd.f32 0.0, %v1007
      %v1009 = vpop.f32.mrf.mxu0
      %1010 = vmatprep.mubr.bf16.mxu0 %v575
      %1011 = vmatmul.mubr.bf16.gmra.mxu0 %v574
      %v1012 = vpop.f32.mrf.mxu0
      %v1013 = vadd.f32 0.0, %v1012
      %v1014 = vpop.f32.mrf.mxu0
      %v1015 = vpop.f32.mrf.mxu0
      %v1016 = vadd.f32 0.0, %v1015
      %v1017 = vpop.f32.mrf.mxu0
      %1018 = vmatprep.mubr.bf16.mxu0 %v577
      %1019 = vmatmul.mubr.bf16.gmra.mxu0 %v576
      %v1020 = vpop.f32.mrf.mxu0
      %v1021 = vadd.f32 0.0, %v1020
      %v1022 = vpop.f32.mrf.mxu0
      %v1023 = vpop.f32.mrf.mxu0
      %v1024 = vadd.f32 0.0, %v1023
      %v1025 = vpop.f32.mrf.mxu0
      %1026 = vdwg.mxu0
      %v1027 = vpack.c.bf16 %v776, %v773
      %v1028 = vpack.c.bf16 %v784, %v781
      %v1029 = vpack.c.bf16 %v792, %v789
      %v1030 = vpack.c.bf16 %v800, %v797
      %v1031 = vpack.c.bf16 %v808, %v805
      %v1032 = vpack.c.bf16 %v816, %v813
      %v1033 = vpack.c.bf16 %v824, %v821
      %v1034 = vpack.c.bf16 %v832, %v829
      %v1035 = vpack.c.bf16 %v840, %v837
      %v1036 = vpack.c.bf16 %v848, %v845
      %v1037 = vpack.c.bf16 %v856, %v853
      %v1038 = vpack.c.bf16 %v864, %v861
      %v1039 = vpack.c.bf16 %v872, %v869
      %v1040 = vpack.c.bf16 %v880, %v877
      %v1041 = vpack.c.bf16 %v888, %v885
      %v1042 = vpack.c.bf16 %v896, %v893
      %v1043 = vpack.c.bf16 %v904, %v901
      %v1044 = vpack.c.bf16 %v912, %v909
      %v1045 = vpack.c.bf16 %v920, %v917
      %v1046 = vpack.c.bf16 %v928, %v925
      %v1047 = vpack.c.bf16 %v936, %v933
      %v1048 = vpack.c.bf16 %v944, %v941
      %v1049 = vpack.c.bf16 %v952, %v949
      %v1050 = vpack.c.bf16 %v960, %v957
      %v1051 = vpack.c.bf16 %v968, %v965
      %v1052 = vpack.c.bf16 %v976, %v973
      %v1053 = vpack.c.bf16 %v984, %v981
      %v1054 = vpack.c.bf16 %v992, %v989
      %v1055 = vpack.c.bf16 %v1000, %v997
      %v1056 = vpack.c.bf16 %v1008, %v1005
      %v1057 = vpack.c.bf16 %v1016, %v1013
      %v1058 = vpack.c.bf16 %v1024, %v1021
      %v1091 = vunpack.c.l.b16 %v1027
      %v1092 = vunpack.c.h.b16 %v1027
      %v1093 = vunpack.c.l.b16 %v1028
      %v1094 = vunpack.c.h.b16 %v1028
      %v1095 = vunpack.c.l.b16 %v1029
      %v1096 = vunpack.c.h.b16 %v1029
      %v1097 = vunpack.c.l.b16 %v1030
      %v1098 = vunpack.c.h.b16 %v1030
      %v1099 = vunpack.c.l.b16 %v1031
      %v1100 = vunpack.c.h.b16 %v1031
      %v1101 = vunpack.c.l.b16 %v1032
      %v1102 = vunpack.c.h.b16 %v1032
      %v1103 = vunpack.c.l.b16 %v1033
      %v1104 = vunpack.c.h.b16 %v1033
      %v1105 = vunpack.c.l.b16 %v1034
      %v1106 = vunpack.c.h.b16 %v1034
      %v1107 = vunpack.c.l.b16 %v1035
      %v1108 = vunpack.c.h.b16 %v1035
      %v1109 = vunpack.c.l.b16 %v1036
      %v1110 = vunpack.c.h.b16 %v1036
      %v1111 = vunpack.c.l.b16 %v1037
      %v1112 = vunpack.c.h.b16 %v1037
      %v1113 = vunpack.c.l.b16 %v1038
      %v1114 = vunpack.c.h.b16 %v1038
      %v1115 = vunpack.c.l.b16 %v1039
      %v1116 = vunpack.c.h.b16 %v1039
      %v1117 = vunpack.c.l.b16 %v1040
      %v1118 = vunpack.c.h.b16 %v1040
      %v1119 = vunpack.c.l.b16 %v1041
      %v1120 = vunpack.c.h.b16 %v1041
      %v1121 = vunpack.c.l.b16 %v1042
      %v1122 = vunpack.c.h.b16 %v1042
      %v1123 = vunpack.c.l.b16 %v1043
      %v1124 = vunpack.c.h.b16 %v1043
      %v1125 = vunpack.c.l.b16 %v1044
      %v1126 = vunpack.c.h.b16 %v1044
      %v1127 = vunpack.c.l.b16 %v1045
      %v1128 = vunpack.c.h.b16 %v1045
      %v1129 = vunpack.c.l.b16 %v1046
      %v1130 = vunpack.c.h.b16 %v1046
      %v1131 = vunpack.c.l.b16 %v1047
      %v1132 = vunpack.c.h.b16 %v1047
      %v1133 = vunpack.c.l.b16 %v1048
      %v1134 = vunpack.c.h.b16 %v1048
      %v1135 = vunpack.c.l.b16 %v1049
      %v1136 = vunpack.c.h.b16 %v1049
      %v1137 = vunpack.c.l.b16 %v1050
      %v1138 = vunpack.c.h.b16 %v1050
      %v1139 = vunpack.c.l.b16 %v1051
      %v1140 = vunpack.c.h.b16 %v1051
      %v1141 = vunpack.c.l.b16 %v1052
      %v1142 = vunpack.c.h.b16 %v1052
      %v1143 = vunpack.c.l.b16 %v1053
      %v1144 = vunpack.c.h.b16 %v1053
      %v1145 = vunpack.c.l.b16 %v1054
      %v1146 = vunpack.c.h.b16 %v1054
      %v1147 = vunpack.c.l.b16 %v1055
      %v1148 = vunpack.c.h.b16 %v1055
      %v1149 = vunpack.c.l.b16 %v1056
      %v1150 = vunpack.c.h.b16 %v1056
      %v1151 = vunpack.c.l.b16 %v1057
      %v1152 = vunpack.c.h.b16 %v1057
      %v1153 = vunpack.c.l.b16 %v1058
      %v1154 = vunpack.c.h.b16 %v1058
      %v1155 = vpack.c.b16 %v1091, %v1091
      %v1156 = vpack.c.b16 %v1092, %v1092
      %v1157 = vpack.c.b16 %v1093, %v1093
      %v1158 = vpack.c.b16 %v1094, %v1094
      %v1159 = vpack.c.b16 %v1095, %v1095
      %v1160 = vpack.c.b16 %v1096, %v1096
      %v1161 = vpack.c.b16 %v1097, %v1097
      %v1162 = vpack.c.b16 %v1098, %v1098
      %v1163 = vpack.c.b16 %v1099, %v1099
      %v1164 = vpack.c.b16 %v1100, %v1100
      %v1165 = vpack.c.b16 %v1101, %v1101
      %v1166 = vpack.c.b16 %v1102, %v1102
      %v1167 = vpack.c.b16 %v1103, %v1103
      %v1168 = vpack.c.b16 %v1104, %v1104
      %v1169 = vpack.c.b16 %v1105, %v1105
      %v1170 = vpack.c.b16 %v1106, %v1106
      %v1171 = vpack.c.b16 %v1107, %v1107
      %v1172 = vpack.c.b16 %v1108, %v1108
      %v1173 = vpack.c.b16 %v1109, %v1109
      %v1174 = vpack.c.b16 %v1110, %v1110
      %v1175 = vpack.c.b16 %v1111, %v1111
      %v1176 = vpack.c.b16 %v1112, %v1112
      %v1177 = vpack.c.b16 %v1113, %v1113
      %v1178 = vpack.c.b16 %v1114, %v1114
      %v1179 = vpack.c.b16 %v1115, %v1115
      %v1180 = vpack.c.b16 %v1116, %v1116
      %v1181 = vpack.c.b16 %v1117, %v1117
      %v1182 = vpack.c.b16 %v1118, %v1118
      %v1183 = vpack.c.b16 %v1119, %v1119
      %v1184 = vpack.c.b16 %v1120, %v1120
      %v1185 = vpack.c.b16 %v1121, %v1121
      %v1186 = vpack.c.b16 %v1122, %v1122
      %v1187 = vpack.c.b16 %v1123, %v1123
      %v1188 = vpack.c.b16 %v1124, %v1124
      %v1189 = vpack.c.b16 %v1125, %v1125
      %v1190 = vpack.c.b16 %v1126, %v1126
      %v1191 = vpack.c.b16 %v1127, %v1127
      %v1192 = vpack.c.b16 %v1128, %v1128
      %v1193 = vpack.c.b16 %v1129, %v1129
      %v1194 = vpack.c.b16 %v1130, %v1130
      %v1195 = vpack.c.b16 %v1131, %v1131
      %v1196 = vpack.c.b16 %v1132, %v1132
      %v1197 = vpack.c.b16 %v1133, %v1133
      %v1198 = vpack.c.b16 %v1134, %v1134
      %v1199 = vpack.c.b16 %v1135, %v1135
      %v1200 = vpack.c.b16 %v1136, %v1136
      %v1201 = vpack.c.b16 %v1137, %v1137
      %v1202 = vpack.c.b16 %v1138, %v1138
      %v1203 = vpack.c.b16 %v1139, %v1139
      %v1204 = vpack.c.b16 %v1140, %v1140
      %v1205 = vpack.c.b16 %v1141, %v1141
      %v1206 = vpack.c.b16 %v1142, %v1142
      %v1207 = vpack.c.b16 %v1143, %v1143
      %v1208 = vpack.c.b16 %v1144, %v1144
      %v1209 = vpack.c.b16 %v1145, %v1145
      %v1210 = vpack.c.b16 %v1146, %v1146
      %v1211 = vpack.c.b16 %v1147, %v1147
      %v1212 = vpack.c.b16 %v1148, %v1148
      %v1213 = vpack.c.b16 %v1149, %v1149
      %v1214 = vpack.c.b16 %v1150, %v1150
      %v1215 = vpack.c.b16 %v1151, %v1151
      %v1216 = vpack.c.b16 %v1152, %v1152
      %v1217 = vpack.c.b16 %v1153, %v1153
      %v1218 = vpack.c.b16 %v1154, %v1154
      %1283 = vst [vmem:[%s215] sm:$0xf] %v1155
      %1284 = vst [vmem:[%s215 + $0x4] sm:$0xf] %v1156
      %1285 = vst [vmem:[%s215 + $0x8] sm:$0xf] %v1157
      %1286 = vst [vmem:[%s215 + $0xc] sm:$0xf] %v1158
      %1287 = vst [vmem:[%s215 + $0x10] sm:$0xf] %v1159
      %1288 = vst [vmem:[%s215 + $0x14] sm:$0xf] %v1160
      %1289 = vst [vmem:[%s215 + $0x18] sm:$0xf] %v1161
      %1290 = vst [vmem:[%s215 + $0x1c] sm:$0xf] %v1162
      %1291 = vst [vmem:[%s215 + $0x20] sm:$0xf] %v1163
      %1292 = vst [vmem:[%s215 + $0x24] sm:$0xf] %v1164
      %1293 = vst [vmem:[%s215 + $0x28] sm:$0xf] %v1165
      %1294 = vst [vmem:[%s215 + $0x2c] sm:$0xf] %v1166
      %1295 = vst [vmem:[%s215 + $0x30] sm:$0xf] %v1167
      %1296 = vst [vmem:[%s215 + $0x34] sm:$0xf] %v1168
      %1297 = vst [vmem:[%s215 + $0x38] sm:$0xf] %v1169
      %1298 = vst [vmem:[%s215 + $0x3c] sm:$0xf] %v1170
      %1299 = vst [vmem:[%s215 + $0x40] sm:$0xf] %v1171
      %1300 = vst [vmem:[%s215 + $0x44] sm:$0xf] %v1172
      %1301 = vst [vmem:[%s215 + $0x48] sm:$0xf] %v1173
      %1302 = vst [vmem:[%s215 + $0x4c] sm:$0xf] %v1174
      %1303 = vst [vmem:[%s215 + $0x50] sm:$0xf] %v1175
      %1304 = vst [vmem:[%s215 + $0x54] sm:$0xf] %v1176
      %1305 = vst [vmem:[%s215 + $0x58] sm:$0xf] %v1177
      %1306 = vst [vmem:[%s215 + $0x5c] sm:$0xf] %v1178
      %1307 = vst [vmem:[%s215 + $0x60] sm:$0xf] %v1179
      %1308 = vst [vmem:[%s215 + $0x64] sm:$0xf] %v1180
      %1309 = vst [vmem:[%s215 + $0x68] sm:$0xf] %v1181
      %1310 = vst [vmem:[%s215 + $0x6c] sm:$0xf] %v1182
      %1311 = vst [vmem:[%s215 + $0x70] sm:$0xf] %v1183
      %1312 = vst [vmem:[%s215 + $0x74] sm:$0xf] %v1184
      %1313 = vst [vmem:[%s215 + $0x78] sm:$0xf] %v1185
      %1314 = vst [vmem:[%s215 + $0x7c] sm:$0xf] %v1186
      %1315 = vst [vmem:[%s215 + $0x80] sm:$0xf] %v1187
      %1316 = vst [vmem:[%s215 + $0x84] sm:$0xf] %v1188
      %1317 = vst [vmem:[%s215 + $0x88] sm:$0xf] %v1189
      %1318 = vst [vmem:[%s215 + $0x8c] sm:$0xf] %v1190
      %1319 = vst [vmem:[%s215 + $0x90] sm:$0xf] %v1191
      %1320 = vst [vmem:[%s215 + $0x94] sm:$0xf] %v1192
      %1321 = vst [vmem:[%s215 + $0x98] sm:$0xf] %v1193
      %1322 = vst [vmem:[%s215 + $0x9c] sm:$0xf] %v1194
      %1323 = vst [vmem:[%s215 + $0xa0] sm:$0xf] %v1195
      %1324 = vst [vmem:[%s215 + $0xa4] sm:$0xf] %v1196
      %1325 = vst [vmem:[%s215 + $0xa8] sm:$0xf] %v1197
      %1326 = vst [vmem:[%s215 + $0xac] sm:$0xf] %v1198
      %1327 = vst [vmem:[%s215 + $0xb0] sm:$0xf] %v1199
      %1328 = vst [vmem:[%s215 + $0xb4] sm:$0xf] %v1200
      %1329 = vst [vmem:[%s215 + $0xb8] sm:$0xf] %v1201
      %1330 = vst [vmem:[%s215 + $0xbc] sm:$0xf] %v1202
      %1331 = vst [vmem:[%s215 + $0xc0] sm:$0xf] %v1203
      %1332 = vst [vmem:[%s215 + $0xc4] sm:$0xf] %v1204
      %1333 = vst [vmem:[%s215 + $0xc8] sm:$0xf] %v1205
      %1334 = vst [vmem:[%s215 + $0xcc] sm:$0xf] %v1206
      %1335 = vst [vmem:[%s215 + $0xd0] sm:$0xf] %v1207
      %1336 = vst [vmem:[%s215 + $0xd4] sm:$0xf] %v1208
      %1337 = vst [vmem:[%s215 + $0xd8] sm:$0xf] %v1209
      %1338 = vst [vmem:[%s215 + $0xdc] sm:$0xf] %v1210
      %1339 = vst [vmem:[%s215 + $0xe0] sm:$0xf] %v1211
      %1340 = vst [vmem:[%s215 + $0xe4] sm:$0xf] %v1212
      %1341 = vst [vmem:[%s215 + $0xe8] sm:$0xf] %v1213
      %1342 = vst [vmem:[%s215 + $0xec] sm:$0xf] %v1214
      %1343 = vst [vmem:[%s215 + $0xf0] sm:$0xf] %v1215
      %1344 = vst [vmem:[%s215 + $0xf4] sm:$0xf] %v1216
      %1345 = vst [vmem:[%s215 + $0xf8] sm:$0xf] %v1217
      %1346 = vst [vmem:[%s215 + $0xfc] sm:$0xf] %v1218
      %v1347 = vadd.f32 %v773, %v776
      %v1348 = vadd.f32 %v1347, %v781
      %v1349 = vadd.f32 %v1348, %v784
      %v1350 = vadd.f32 %v1349, %v789
      %v1351 = vadd.f32 %v1350, %v792
      %v1352 = vadd.f32 %v1351, %v797
      %v1353 = vadd.f32 %v1352, %v800
      %v1354 = vadd.f32 %v1353, %v805
      %v1355 = vadd.f32 %v1354, %v808
      %v1356 = vadd.f32 %v1355, %v813
      %v1357 = vadd.f32 %v1356, %v816
      %v1358 = vadd.f32 %v1357, %v821
      %v1359 = vadd.f32 %v1358, %v824
      %v1360 = vadd.f32 %v1359, %v829
      %v1361 = vadd.f32 %v1360, %v832
      %v1362 = vadd.f32 %v1361, %v837
      %v1363 = vadd.f32 %v1362, %v840
      %v1364 = vadd.f32 %v1363, %v845
      %v1365 = vadd.f32 %v1364, %v848
      %v1366 = vadd.f32 %v1365, %v853
      %v1367 = vadd.f32 %v1366, %v856
      %v1368 = vadd.f32 %v1367, %v861
      %v1369 = vadd.f32 %v1368, %v864
      %v1370 = vadd.f32 %v1369, %v869
      %v1371 = vadd.f32 %v1370, %v872
      %v1372 = vadd.f32 %v1371, %v877
      %v1373 = vadd.f32 %v1372, %v880
      %v1374 = vadd.f32 %v1373, %v885
      %v1375 = vadd.f32 %v1374, %v888
      %v1376 = vadd.f32 %v1375, %v893
      %v1377 = vadd.f32 %v1376, %v896
      %v1378 = vadd.f32 %v1377, %v901
      %v1379 = vadd.f32 %v1378, %v904
      %v1380 = vadd.f32 %v1379, %v909
      %v1381 = vadd.f32 %v1380, %v912
      %v1382 = vadd.f32 %v1381, %v917
      %v1383 = vadd.f32 %v1382, %v920
      %v1384 = vadd.f32 %v1383, %v925
      %v1385 = vadd.f32 %v1384, %v928
      %v1386 = vadd.f32 %v1385, %v933
      %v1387 = vadd.f32 %v1386, %v936
      %v1388 = vadd.f32 %v1387, %v941
      %v1389 = vadd.f32 %v1388, %v944
      %v1390 = vadd.f32 %v1389, %v949
      %v1391 = vadd.f32 %v1390, %v952
      %v1392 = vadd.f32 %v1391, %v957
      %v1393 = vadd.f32 %v1392, %v960
      %v1394 = vadd.f32 %v1393, %v965
      %v1395 = vadd.f32 %v1394, %v968
      %v1396 = vadd.f32 %v1395, %v973
      %v1397 = vadd.f32 %v1396, %v976
      %v1398 = vadd.f32 %v1397, %v981
      %v1399 = vadd.f32 %v1398, %v984
      %v1400 = vadd.f32 %v1399, %v989
      %v1401 = vadd.f32 %v1400, %v992
      %v1402 = vadd.f32 %v1401, %v997
      %v1403 = vadd.f32 %v1402, %v1000
      %v1404 = vadd.f32 %v1403, %v1005
      %v1405 = vadd.f32 %v1404, %v1008
      %v1406 = vadd.f32 %v1405, %v1013
      %v1407 = vadd.f32 %v1406, %v1016
      %v1408 = vadd.f32 %v1407, %v1021
      %v1409 = vadd.f32 %v1408, %v1024
      %v1410 = vrot.slane %v1409, 4
      %v1411 = vadd.f32 %v1409, %v1410
      %v1412 = vrot.slane %v1411, 2
      %v1413 = vadd.f32 %v1411, %v1412
      %v1414 = vrot.slane %v1413, 1
      %v1415 = vadd.f32 %v1413, %v1414
      %v1416 = vmul.f32 %v773, %v773
      %v1417 = vmul.f32 %v776, %v776
      %v1418 = vmul.f32 %v781, %v781
      %v1419 = vmul.f32 %v784, %v784
      %v1420 = vmul.f32 %v789, %v789
      %v1421 = vmul.f32 %v792, %v792
      %v1422 = vmul.f32 %v797, %v797
      %v1423 = vmul.f32 %v800, %v800
      %v1424 = vmul.f32 %v805, %v805
      %v1425 = vmul.f32 %v808, %v808
      %v1426 = vmul.f32 %v813, %v813
      %v1427 = vmul.f32 %v816, %v816
      %v1428 = vmul.f32 %v821, %v821
      %v1429 = vmul.f32 %v824, %v824
      %v1430 = vmul.f32 %v829, %v829
      %v1431 = vmul.f32 %v832, %v832
      %v1432 = vmul.f32 %v837, %v837
      %v1433 = vmul.f32 %v840, %v840
      %v1434 = vmul.f32 %v845, %v845
      %v1435 = vmul.f32 %v848, %v848
      %v1436 = vmul.f32 %v853, %v853
      %v1437 = vmul.f32 %v856, %v856
      %v1438 = vmul.f32 %v861, %v861
      %v1439 = vmul.f32 %v864, %v864
      %v1440 = vmul.f32 %v869, %v869
      %v1441 = vmul.f32 %v872, %v872
      %v1442 = vmul.f32 %v877, %v877
      %v1443 = vmul.f32 %v880, %v880
      %v1444 = vmul.f32 %v885, %v885
      %v1445 = vmul.f32 %v888, %v888
      %v1446 = vmul.f32 %v893, %v893
      %v1447 = vmul.f32 %v896, %v896
      %v1448 = vmul.f32 %v901, %v901
      %v1449 = vmul.f32 %v904, %v904
      %v1450 = vmul.f32 %v909, %v909
      %v1451 = vmul.f32 %v912, %v912
      %v1452 = vmul.f32 %v917, %v917
      %v1453 = vmul.f32 %v920, %v920
      %v1454 = vmul.f32 %v925, %v925
      %v1455 = vmul.f32 %v928, %v928
      %v1456 = vmul.f32 %v933, %v933
      %v1457 = vmul.f32 %v936, %v936
      %v1458 = vmul.f32 %v941, %v941
      %v1459 = vmul.f32 %v944, %v944
      %v1460 = vmul.f32 %v949, %v949
      %v1461 = vmul.f32 %v952, %v952
      %v1462 = vmul.f32 %v957, %v957
      %v1463 = vmul.f32 %v960, %v960
      %v1464 = vmul.f32 %v965, %v965
      %v1465 = vmul.f32 %v968, %v968
      %v1466 = vmul.f32 %v973, %v973
      %v1467 = vmul.f32 %v976, %v976
      %v1468 = vmul.f32 %v981, %v981
      %v1469 = vmul.f32 %v984, %v984
      %v1470 = vmul.f32 %v989, %v989
      %v1471 = vmul.f32 %v992, %v992
      %v1472 = vmul.f32 %v997, %v997
      %v1473 = vmul.f32 %v1000, %v1000
      %v1474 = vmul.f32 %v1005, %v1005
      %v1475 = vmul.f32 %v1008, %v1008
      %v1476 = vmul.f32 %v1013, %v1013
      %v1477 = vmul.f32 %v1016, %v1016
      %v1478 = vmul.f32 %v1021, %v1021
      %v1479 = vmul.f32 %v1024, %v1024
      %v1480 = vadd.f32 %v1416, %v1417
      %v1481 = vadd.f32 %v1480, %v1418
      %v1482 = vadd.f32 %v1481, %v1419
      %v1483 = vadd.f32 %v1482, %v1420
      %v1484 = vadd.f32 %v1483, %v1421
      %v1485 = vadd.f32 %v1484, %v1422
      %v1486 = vadd.f32 %v1485, %v1423
      %v1487 = vadd.f32 %v1486, %v1424
      %v1488 = vadd.f32 %v1487, %v1425
      %v1489 = vadd.f32 %v1488, %v1426
      %v1490 = vadd.f32 %v1489, %v1427
      %v1491 = vadd.f32 %v1490, %v1428
      %v1492 = vadd.f32 %v1491, %v1429
      %v1493 = vadd.f32 %v1492, %v1430
      %v1494 = vadd.f32 %v1493, %v1431
      %v1495 = vadd.f32 %v1494, %v1432
      %v1496 = vadd.f32 %v1495, %v1433
      %v1497 = vadd.f32 %v1496, %v1434
      %v1498 = vadd.f32 %v1497, %v1435
      %v1499 = vadd.f32 %v1498, %v1436
      %v1500 = vadd.f32 %v1499, %v1437
      %v1501 = vadd.f32 %v1500, %v1438
      %v1502 = vadd.f32 %v1501, %v1439
      %v1503 = vadd.f32 %v1502, %v1440
      %v1504 = vadd.f32 %v1503, %v1441
      %v1505 = vadd.f32 %v1504, %v1442
      %v1506 = vadd.f32 %v1505, %v1443
      %v1507 = vadd.f32 %v1506, %v1444
      %v1508 = vadd.f32 %v1507, %v1445
      %v1509 = vadd.f32 %v1508, %v1446
      %v1510 = vadd.f32 %v1509, %v1447
      %v1511 = vadd.f32 %v1510, %v1448
      %v1512 = vadd.f32 %v1511, %v1449
      %v1513 = vadd.f32 %v1512, %v1450
      %v1514 = vadd.f32 %v1513, %v1451
      %v1515 = vadd.f32 %v1514, %v1452
      %v1516 = vadd.f32 %v1515, %v1453
      %v1517 = vadd.f32 %v1516, %v1454
      %v1518 = vadd.f32 %v1517, %v1455
      %v1519 = vadd.f32 %v1518, %v1456
      %v1520 = vadd.f32 %v1519, %v1457
      %v1521 = vadd.f32 %v1520, %v1458
      %v1522 = vadd.f32 %v1521, %v1459
      %v1523 = vadd.f32 %v1522, %v1460
      %v1524 = vadd.f32 %v1523, %v1461
      %v1525 = vadd.f32 %v1524, %v1462
      %v1526 = vadd.f32 %v1525, %v1463
      %v1527 = vadd.f32 %v1526, %v1464
      %v1528 = vadd.f32 %v1527, %v1465
      %v1529 = vadd.f32 %v1528, %v1466
      %v1530 = vadd.f32 %v1529, %v1467
      %v1531 = vadd.f32 %v1530, %v1468
      %v1532 = vadd.f32 %v1531, %v1469
      %v1533 = vadd.f32 %v1532, %v1470
      %v1534 = vadd.f32 %v1533, %v1471
      %v1535 = vadd.f32 %v1534, %v1472
      %v1536 = vadd.f32 %v1535, %v1473
      %v1537 = vadd.f32 %v1536, %v1474
      %v1538 = vadd.f32 %v1537, %v1475
      %v1539 = vadd.f32 %v1538, %v1476
      %v1540 = vadd.f32 %v1539, %v1477
      %v1541 = vadd.f32 %v1540, %v1478
      %v1542 = vadd.f32 %v1541, %v1479
      %v1543 = vrot.slane %v1542, 4
      %v1544 = vadd.f32 %v1542, %v1543
      %v1545 = vrot.slane %v1544, 2
      %v1546 = vadd.f32 %v1544, %v1545
      %v1547 = vrot.slane %v1546, 1
      %v1548 = vadd.f32 %v1546, %v1547
      %1549 = vst [vmem:[%s220] sm:$0xff] %v1415
      %1550 = vst [vmem:[%s224] sm:$0xff] %v1548
      %s1551 = smul.u32 64, %s16
      %p1552 = scmp.lt.s32.totalorder %s1551, 255
      %s1553 = scalar_select %p1552, %s1551, 255
      %s1554 = smul.addr %s1553, 4
      %s1555 = scalar_lea.vmem %s2, %s1554
      %p1556 = scmp.lt.s32.totalorder %s16, 3
      %s1557 = scalar_select %p1556, %s16, 3
      %s1558 = smul.addr %s1557, 8
      %s1559 = scalar_lea.vmem %s3, %s1558
      %p1560 = scmp.lt.s32.totalorder %s16, 3
      %s1561 = scalar_select %p1560, %s16, 3
      %s1562 = smul.addr %s1561, 8
      %s1563 = scalar_lea.vmem %s4, %s1562
      // Predicated region
      $region29: #{generator_forward.7} parent=27 // pred_check
        %p1564 = pneg %p81
      $region30: #{generator_forward.7} parent=27 // pred_check_branch
        %1566 = sbr.rel (%p1564) target = $region32
      $region31: #{generator_forward.7} parent=27 // pred_region
        %s1567 = smul.u32 64, %s16
      $region32: #{generator_forward.7} parent=27 // pred_fallthru
        _
      // Predicated region
      $region33: #{generator_forward.7} parent=27 // pred_check
        %p1568 = pneg %p107
      $region34: #{generator_forward.7} parent=27 // pred_check_branch
        %1570 = sbr.rel (%p1568) target = $region36
      $region35: #{generator_forward.7} parent=27 // pred_region
        _
      $region36: #{generator_forward.7} parent=27 // pred_fallthru
        _
      // Predicated region
      $region37: #{generator_forward.7} parent=27 // pred_check
        %p1571 = pneg %p133
      $region38: #{generator_forward.7} parent=27 // pred_check_branch
        %1573 = sbr.rel (%p1571) target = $region40
      $region39: #{generator_forward.7} parent=27 // pred_region
        _
      $region40: #{generator_forward.7} parent=27 // pred_fallthru
        _
    $region28: #{generator_forward.7} parent=5 // pred_fallthru
      _
    %p1574 = scmp.le.s32.totalorder 2, %s11
    // Predicated region
    $region41: #{generator_forward.7} parent=5 // pred_check
      %p1575 = pneg %p1574
    $region42: #{generator_forward.7} parent=5 // pred_check_branch
      %1577 = sbr.rel (%p1575) target = $region44
    $region43: #{generator_forward.7} parent=5 // pred_region
      %s1578 = ssub.s32 %s11, 2
      // Predicated region
      $region45: #{generator_forward.7} parent=43 // pred_check
        %p1579 = pneg %p87
      $region46: #{generator_forward.7} parent=43 // pred_check_branch
        %1581 = sbr.rel (%p1579) target = $region48
      $region47: #{generator_forward.7} parent=43 // pred_region
        %s1582 = smul.u32 64, %s17
        %p1583 = scmp.lt.s32.totalorder %s1582, 255
        %s1584 = scalar_select %p1583, %s1582, 255
        %s1585 = smul.addr %s1584, 4
        %s1586 = scalar_lea.vmem %s2, %s1585
      $region48: #{generator_forward.7} parent=43 // pred_fallthru
        _
      // Predicated region
      $region49: #{generator_forward.7} parent=43 // pred_check
        %p1587 = pneg %p113
      $region50: #{generator_forward.7} parent=43 // pred_check_branch
        %1589 = sbr.rel (%p1587) target = $region52
      $region51: #{generator_forward.7} parent=43 // pred_region
        %p1590 = scmp.lt.s32.totalorder %s17, 3
        %s1591 = scalar_select %p1590, %s17, 3
        %s1592 = smul.addr %s1591, 8
        %s1593 = scalar_lea.vmem %s3, %s1592
      $region52: #{generator_forward.7} parent=43 // pred_fallthru
        _
      // Predicated region
      $region53: #{generator_forward.7} parent=43 // pred_check
        %p1594 = pneg %p139
      $region54: #{generator_forward.7} parent=43 // pred_check_branch
        %1596 = sbr.rel (%p1594) target = $region56
      $region55: #{generator_forward.7} parent=43 // pred_region
        %p1597 = scmp.lt.s32.totalorder %s17, 3
        %s1598 = scalar_select %p1597, %s17, 3
        %s1599 = smul.addr %s1598, 8
        %s1600 = scalar_lea.vmem %s4, %s1599
      $region56: #{generator_forward.7} parent=43 // pred_fallthru
        _
    $region44: #{generator_forward.7} parent=5 // pred_fallthru
      _
  $region6: #{generator_forward.7} parent=0 // loop_footer
    %s15 = sadd.s32 1, %s11
  $region7: #{generator_forward.7} parent=0 // loop_footer_branch
    %10 = sbr.rel target = $region3
  $region8: #{generator_forward.7} parent=0 // loop_exit
    _

// kernel: tile.46
$region0: #{tile.46}
  #allocation0 [shape = 's32[1]{0}', space=sflag, size = 0x4, scoped, tag = 'scoped memory for tile.46']
  %s0 = inlined_call_operand.vmem [shape: f32[3], index: 0, kind: input, shape index: {}]
  %s1 = inlined_call_operand.vmem [shape: f32[4,3], index: 1, kind: output, shape index: {}]
  // Predicated region
  $region2: #{tile.46} parent=0 // pred_check
    _
  $region3: #{tile.46} parent=0 // pred_check_branch
    %3 = sbr.rel (0) target = $region5
  $region4: #{tile.46} parent=0 // pred_region
    _
  $region5: #{tile.46} parent=0 // pred_fallthru
    _
  %v4 = vld [vmem:[%s0] ss:$0 sm:$0xff]
  %5 = vst [vmem:[%s1] sm:$0xf] %v4

// kernel: tile.47
$region0: #{tile.47}
  %s0 = inlined_call_operand.vmem [shape: f32[4,3], index: 0, kind: input, shape index: {}]
  %s1 = inlined_call_operand.vmem [shape: f32[12], index: 1, kind: output, shape index: {}]
  $region1: #{tile.47} parent=0
    #allocation0 [shape = 'u8[4096]{0}', space=vmem, size = 0x1000, scoped, tag = 'scoped mem for output reshape']
    #allocation1 [shape = 'u8[4096]{0}', space=vmem, size = 0x1000, scoped, tag = 'scoped mem for input reshape']
    %s3 = sshll.u32 1, 4
    %s4 = ssub.s32 %s3, 1
    %v5 = vld [vmem:[%s0] sm:%s4]
    %6 = vst [vmem:[#allocation1] sm:%s4] %v5
    %v7 = vld [vmem:[#allocation1] sm:$0x1]
    %vm8 = vcmask 23552
    %9 = vst.msk [vmem:[#allocation0] sm:$0x1] %vm8, %v7
    %s10 = scalar_lea.vmem [#allocation1], 3
    %v11 = vld [vmem:[%s10] sm:$0x1]
    %12 = vrot.lane.b32.xlu0 %v11, 9
    %v13 = vpop.permute.xlu0 %12
    %vm14 = vcmask 97352
    %15 = vst.msk [vmem:[#allocation0] sm:$0x1] %vm14, %v13
    %s16 = scalar_lea.vmem [#allocation1], 2
    %v17 = vld [vmem:[%s16] sm:$0x1]
    %18 = vrot.lane.b32.xlu0 %v17, 6
    %v19 = vpop.permute.xlu0 %18
    %vm20 = vcmask 72752
    %21 = vst.msk [vmem:[#allocation0] sm:$0x1] %vm20, %v19
    %s22 = scalar_lea.vmem [#allocation1], 1
    %v23 = vld [vmem:[%s22] sm:$0x1]
    %24 = vrot.lane.b32.xlu0 %v23, 3
    %v25 = vpop.permute.xlu0 %24
    %vm26 = vcmask 48152
    %27 = vst.msk [vmem:[#allocation0] sm:$0x1] %vm26, %v25
    %s29 = sshll.u32 1, 1
    %s30 = ssub.s32 %s29, 1
    %v32 = vld [vmem:[#allocation0] sm:%s30]
    %s33 = sshll.u32 1, 1
    %s34 = ssub.s32 %s33, 1
    %35 = vst [vmem:[%s1] sm:%s34] %v32

// kernel: generator_forward.9
$region0: #{generator_forward.9}
  #allocation0 [shape = 'u32[]', space=smem, size = 0x4, offset = 0x4, fixed_abs, tag = 'smem constant byte address 0x4 - core index']
  #allocation1 [shape = 'u32[144,128]{1,0:T(1,128)}', space=vmem, size = 0x12000, scoped, tag = 'internal scratch']
  %s0 = inlined_call_operand.vmem [shape: bf16[8192,256], index: 0, kind: input, shape index: {}]
  %s1 = inlined_call_operand.vmem [shape: bf16[256,128], index: 1, kind: input, shape index: {}]
  %s2 = inlined_call_operand.vmem [shape: f32[1,128], index: 2, kind: input, shape index: {}]
  %s3 = inlined_call_operand.vmem [shape: f32[8192,128], index: 3, kind: output, shape index: {}]
  %s4 = sld [smem:[#allocation0]]
  $region45: #{generator_forward.9} parent=0
    _
  %s6 = ssub.s32 1, %s4
  %s7 = scalar_select 0, %s6, %s4
  loop: start=0, step=1, limit=18
  $region2: #{generator_forward.9} parent=0 // loop_pre_header
    _
  $region3: #{generator_forward.9} parent=0 // loop_header
    %s9 = sphi 0, %s13
    %p10 = scmp.ge.s32.totalorder %s9, 18
    %s19 = sphi 0, %s21
    %s22 = sphi 0, %s19
    %s23 = sphi 0, %s22
    %s39 = sphi 0, %s23
    %s43 = sphi 0, %s43
    %s45 = sphi 0, %s43
    %s46 = sphi 0, %s45
    %s60 = sphi 0, %s46
    %s64 = sphi 0, %s64
    %s66 = sphi 0, %s64
    %s67 = sphi 0, %s66
    %s81 = sphi 0, %s67
    %s87 = sphi 0, %s89
    %s90 = sphi 0, %s87
    %s91 = sphi 0, %s90
    %s107 = sphi 0, %s91
  $region4: #{generator_forward.9} parent=0 // loop_header_branch
    %12 = sbr.rel (%p10) target = $region8
  $region5: #{generator_forward.9} parent=0 // loop_body
    %s14 = ssub.s32 %s9, 1
    %s15 = ssub.s32 %s9, 2
    %s16 = sadd.s32 %s9, 1
    %s17 = ssub.s32 %s9, %s16
    %p18 = scmp.eq.s32.totalorder %s17, 0
    %s20 = sadd.s32 %s19, 1
    %s21 = scalar_select %p18, %s19, %s20
    %p24 = pneg %p18
    %p25 = scmp.eq.s32.totalorder %s9, 15
    %p26 = por %p24, %p25
    %p27 = scmp.ne.s32.totalorder %s19, %s22
    %p28 = scmp.eq.s32.totalorder %s9, 0
    %p29 = por %p27, %p28
    %p30 = scmp.ne.s32.totalorder %s19, %s22
    %p31 = scmp.eq.s32.totalorder %s14, 15
    %p32 = por %p30, %p31
    %p33 = scmp.ne.s32.totalorder %s22, %s23
    %p34 = scmp.eq.s32.totalorder %s14, 0
    %p35 = por %p33, %p34
    %p36 = scmp.ne.s32.totalorder %s22, %s23
    %p37 = scmp.eq.s32.totalorder %s15, 15
    %p38 = por %p36, %p37
    %p40 = scmp.ne.s32.totalorder %s23, %s39
    %p41 = scmp.eq.s32.totalorder %s15, 0
    %p42 = por %p40, %p41
    %s44 = sadd.s32 %s43, 1
    %p47 = scmp.eq.s32.totalorder %s9, 15
    %p48 = scmp.ne.s32.totalorder %s43, %s45
    %p49 = scmp.eq.s32.totalorder %s9, 0
    %p50 = por %p48, %p49
    %p51 = scmp.ne.s32.totalorder %s43, %s45
    %p52 = scmp.eq.s32.totalorder %s14, 15
    %p53 = por %p51, %p52
    %p54 = scmp.ne.s32.totalorder %s45, %s46
    %p55 = scmp.eq.s32.totalorder %s14, 0
    %p56 = por %p54, %p55
    %p57 = scmp.ne.s32.totalorder %s45, %s46
    %p58 = scmp.eq.s32.totalorder %s15, 15
    %p59 = por %p57, %p58
    %p61 = scmp.ne.s32.totalorder %s46, %s60
    %p62 = scmp.eq.s32.totalorder %s15, 0
    %p63 = por %p61, %p62
    %s65 = sadd.s32 %s64, 1
    %p68 = scmp.eq.s32.totalorder %s9, 15
    %p69 = scmp.ne.s32.totalorder %s64, %s66
    %p70 = scmp.eq.s32.totalorder %s9, 0
    %p71 = por %p69, %p70
    %p72 = scmp.ne.s32.totalorder %s64, %s66
    %p73 = scmp.eq.s32.totalorder %s14, 15
    %p74 = por %p72, %p73
    %p75 = scmp.ne.s32.totalorder %s66, %s67
    %p76 = scmp.eq.s32.totalorder %s14, 0
    %p77 = por %p75, %p76
    %p78 = scmp.ne.s32.totalorder %s66, %s67
    %p79 = scmp.eq.s32.totalorder %s15, 15
    %p80 = por %p78, %p79
    %p82 = scmp.ne.s32.totalorder %s67, %s81
    %p83 = scmp.eq.s32.totalorder %s15, 0
    %p84 = por %p82, %p83
    %s85 = ssub.s32 %s9, %s16
    %p86 = scmp.eq.s32.totalorder %s85, 0
    %s88 = sadd.s32 %s87, 1
    %s89 = scalar_select %p86, %s87, %s88
    %p92 = pneg %p86
    %p93 = scmp.eq.s32.totalorder %s9, 15
    %p94 = por %p92, %p93
    %p95 = scmp.ne.s32.totalorder %s87, %s90
    %p96 = scmp.eq.s32.totalorder %s9, 0
    %p97 = por %p95, %p96
    %p98 = scmp.ne.s32.totalorder %s87, %s90
    %p99 = scmp.eq.s32.totalorder %s14, 15
    %p100 = por %p98, %p99
    %p101 = scmp.ne.s32.totalorder %s90, %s91
    %p102 = scmp.eq.s32.totalorder %s14, 0
    %p103 = por %p101, %p102
    %p104 = scmp.ne.s32.totalorder %s90, %s91
    %p105 = scmp.eq.s32.totalorder %s15, 15
    %p106 = por %p104, %p105
    %p108 = scmp.ne.s32.totalorder %s91, %s107
    %p109 = scmp.eq.s32.totalorder %s15, 0
    %p110 = por %p108, %p109
    %p111 = scmp.le.s32.totalorder 1, %s9
    %p112 = scmp.lt.s32.totalorder %s9, 17
    %p113 = pnand %p111, %p112
    %p114 = pneg %p113
    // Predicated region
    $region9: #{generator_forward.9} parent=5 // pred_check
      _
    $region10: #{generator_forward.9} parent=5 // pred_check_branch
      %116 = sbr.rel (%p113) target = $region12
    $region11: #{generator_forward.9} parent=5 // pred_region
      %s117 = ssub.s32 %s9, 1
      // Predicated region
      $region13: #{generator_forward.9} parent=11 // pred_check
        %p118 = pneg %p56
      $region14: #{generator_forward.9} parent=11 // pred_check_branch
        %120 = sbr.rel (%p118) target = $region16
      $region15: #{generator_forward.9} parent=11 // pred_region
        _
      $region16: #{generator_forward.9} parent=11 // pred_fallthru
        _
      // Predicated region
      $region17: #{generator_forward.9} parent=11 // pred_check
        %p121 = pneg %p77
      $region18: #{generator_forward.9} parent=11 // pred_check_branch
        %123 = sbr.rel (%p121) target = $region20
      $region19: #{generator_forward.9} parent=11 // pred_region
        _
      $region20: #{generator_forward.9} parent=11 // pred_fallthru
        _
    $region12: #{generator_forward.9} parent=5 // pred_fallthru
      _
    %p124 = scmp.lt.s32.totalorder %s9, 16
    // Predicated region
    $region21: #{generator_forward.9} parent=5 // pred_check
      %p125 = pneg %p124
    $region22: #{generator_forward.9} parent=5 // pred_check_branch
      %127 = sbr.rel (%p125) target = $region24
    $region23: #{generator_forward.9} parent=5 // pred_region
      // Predicated region
      $region25: #{generator_forward.9} parent=23 // pred_check
        %p128 = pneg %p29
      $region26: #{generator_forward.9} parent=23 // pred_check_branch
        %130 = sbr.rel (%p128) target = $region28
      $region27: #{generator_forward.9} parent=23 // pred_region
        %s131 = smul.u32 64, %s9
        %p132 = scmp.lt.s32.totalorder %s131, 1023
        %s133 = scalar_select %p132, %s131, 1023
        %s134 = smul.addr %s133, 2
        %s135 = smul.addr %s134, 4
        %s136 = scalar_lea.vmem %s0, %s135
        %s137 = smul.u32 64, %s9
      $region28: #{generator_forward.9} parent=23 // pred_fallthru
        _
    $region24: #{generator_forward.9} parent=5 // pred_fallthru
      _
    %p138 = scmp.le.s32.totalorder 1, %s9
    %p139 = scmp.lt.s32.totalorder %s9, 17
    %p140 = pnand %p138, %p139
    %p141 = pneg %p140
    // Predicated region
    $region29: #{generator_forward.9} parent=5 // pred_check
      _
    $region30: #{generator_forward.9} parent=5 // pred_check_branch
      %143 = sbr.rel (%p140) target = $region32
    $region31: #{generator_forward.9} parent=5 // pred_region
      %s144 = ssub.s32 %s9, 1
      %s145 = smul.u32 64, %s14
      %p146 = scmp.lt.s32.totalorder %s145, 1023
      %s147 = scalar_select %p146, %s145, 1023
      %s148 = smul.addr %s147, 2
      %s149 = smul.addr %s148, 4
      %s150 = scalar_lea.vmem %s0, %s149
      %p151 = pneg %p35
      %p152 = pneg %p32
      %p153 = pneg %p56
      %p154 = pneg %p53
      %p155 = pneg %p77
      %p156 = pneg %p74
      %p157 = pneg %p103
      %p158 = pneg %p100
      %s159 = smul.u32 64, %s14
      %p160 = scmp.lt.s32.totalorder %s159, 1023
      %s161 = scalar_select %p160, %s159, 1023
      %s162 = smul.addr %s161, 8
      %s163 = scalar_lea.vmem %s3, %s162
      %s164 = smul.u32 64, %s14
      %p165 = scmp.lt.s32.totalorder %s164, 1023
      %s166 = scalar_select %p165, %s164, 1023
      %s167 = smul.addr %s166, 2
      %s168 = smul.addr %s167, 4
      %s169 = scalar_lea.vmem %s0, %s168
      %s170 = smul.u32 64, %s14
      %s171 = smul.u32 64, %s14
      %p172 = scmp.lt.s32.totalorder %s171, 1023
      %s173 = scalar_select %p172, %s171, 1023
      %s174 = smul.addr %s173, 8
      %s175 = scalar_lea.vmem %s3, %s174
      %s176 = smul.u32 64, %s14
      %v178 = vld [vmem:[%s169] sm:$0xff]
      %v179 = vld [vmem:[%s169 + $0x8] sm:$0xff]
      %v180 = vld [vmem:[%s169 + $0x10] sm:$0xff]
      %v181 = vld [vmem:[%s169 + $0x18] sm:$0xff]
      %v182 = vld [vmem:[%s169 + $0x20] sm:$0xff]
      %v183 = vld [vmem:[%s169 + $0x28] sm:$0xff]
      %v184 = vld [vmem:[%s169 + $0x30] sm:$0xff]
      %v185 = vld [vmem:[%s169 + $0x38] sm:$0xff]
      %v186 = vld [vmem:[%s169 + $0x40] sm:$0xff]
      %v187 = vld [vmem:[%s169 + $0x48] sm:$0xff]
      %v188 = vld [vmem:[%s169 + $0x50] sm:$0xff]
      %v189 = vld [vmem:[%s169 + $0x58] sm:$0xff]
      %v190 = vld [vmem:[%s169 + $0x60] sm:$0xff]
      %v191 = vld [vmem:[%s169 + $0x68] sm:$0xff]
      %v192 = vld [vmem:[%s169 + $0x70] sm:$0xff]
      %v193 = vld [vmem:[%s169 + $0x78] sm:$0xff]
      %v194 = vld [vmem:[%s169 + $0x80] sm:$0xff]
      %v195 = vld [vmem:[%s169 + $0x88] sm:$0xff]
      %v196 = vld [vmem:[%s169 + $0x90] sm:$0xff]
      %v197 = vld [vmem:[%s169 + $0x98] sm:$0xff]
      %v198 = vld [vmem:[%s169 + $0xa0] sm:$0xff]
      %v199 = vld [vmem:[%s169 + $0xa8] sm:$0xff]
      %v200 = vld [vmem:[%s169 + $0xb0] sm:$0xff]
      %v201 = vld [vmem:[%s169 + $0xb8] sm:$0xff]
      %v202 = vld [vmem:[%s169 + $0xc0] sm:$0xff]
      %v203 = vld [vmem:[%s169 + $0xc8] sm:$0xff]
      %v204 = vld [vmem:[%s169 + $0xd0] sm:$0xff]
      %v205 = vld [vmem:[%s169 + $0xd8] sm:$0xff]
      %v206 = vld [vmem:[%s169 + $0xe0] sm:$0xff]
      %v207 = vld [vmem:[%s169 + $0xe8] sm:$0xff]
      %v208 = vld [vmem:[%s169 + $0xf0] sm:$0xff]
      %v209 = vld [vmem:[%s169 + $0xf8] sm:$0xff]
      %v210 = vld [vmem:[%s169 + $0x100] sm:$0xff]
      %v211 = vld [vmem:[%s169 + $0x108] sm:$0xff]
      %v212 = vld [vmem:[%s169 + $0x110] sm:$0xff]
      %v213 = vld [vmem:[%s169 + $0x118] sm:$0xff]
      %v214 = vld [vmem:[%s169 + $0x120] sm:$0xff]
      %v215 = vld [vmem:[%s169 + $0x128] sm:$0xff]
      %v216 = vld [vmem:[%s169 + $0x130] sm:$0xff]
      %v217 = vld [vmem:[%s169 + $0x138] sm:$0xff]
      %v218 = vld [vmem:[%s169 + $0x140] sm:$0xff]
      %v219 = vld [vmem:[%s169 + $0x148] sm:$0xff]
      %v220 = vld [vmem:[%s169 + $0x150] sm:$0xff]
      %v221 = vld [vmem:[%s169 + $0x158] sm:$0xff]
      %v222 = vld [vmem:[%s169 + $0x160] sm:$0xff]
      %v223 = vld [vmem:[%s169 + $0x168] sm:$0xff]
      %v224 = vld [vmem:[%s169 + $0x170] sm:$0xff]
      %v225 = vld [vmem:[%s169 + $0x178] sm:$0xff]
      %v226 = vld [vmem:[%s169 + $0x180] sm:$0xff]
      %v227 = vld [vmem:[%s169 + $0x188] sm:$0xff]
      %v228 = vld [vmem:[%s169 + $0x190] sm:$0xff]
      %v229 = vld [vmem:[%s169 + $0x198] sm:$0xff]
      %v230 = vld [vmem:[%s169 + $0x1a0] sm:$0xff]
      %v231 = vld [vmem:[%s169 + $0x1a8] sm:$0xff]
      %v232 = vld [vmem:[%s169 + $0x1b0] sm:$0xff]
      %v233 = vld [vmem:[%s169 + $0x1b8] sm:$0xff]
      %v234 = vld [vmem:[%s169 + $0x1c0] sm:$0xff]
      %v235 = vld [vmem:[%s169 + $0x1c8] sm:$0xff]
      %v236 = vld [vmem:[%s169 + $0x1d0] sm:$0xff]
      %v237 = vld [vmem:[%s169 + $0x1d8] sm:$0xff]
      %v238 = vld [vmem:[%s169 + $0x1e0] sm:$0xff]
      %v239 = vld [vmem:[%s169 + $0x1e8] sm:$0xff]
      %v240 = vld [vmem:[%s169 + $0x1f0] sm:$0xff]
      %v241 = vld [vmem:[%s169 + $0x1f8] sm:$0xff]
      %v242 = vld [vmem:[%s1] sm:$0xf]
      %v243 = vld [vmem:[%s1 + $0x4] sm:$0xf]
      %v244 = vld [vmem:[%s1 + $0x8] sm:$0xf]
      %v245 = vld [vmem:[%s1 + $0xc] sm:$0xf]
      %v246 = vld [vmem:[%s1 + $0x10] sm:$0xf]
      %v247 = vld [vmem:[%s1 + $0x14] sm:$0xf]
      %v248 = vld [vmem:[%s1 + $0x18] sm:$0xf]
      %v249 = vld [vmem:[%s1 + $0x1c] sm:$0xf]
      %v250 = vld [vmem:[%s1 + $0x20] sm:$0xf]
      %v251 = vld [vmem:[%s1 + $0x24] sm:$0xf]
      %v252 = vld [vmem:[%s1 + $0x28] sm:$0xf]
      %v253 = vld [vmem:[%s1 + $0x2c] sm:$0xf]
      %v254 = vld [vmem:[%s1 + $0x30] sm:$0xf]
      %v255 = vld [vmem:[%s1 + $0x34] sm:$0xf]
      %v256 = vld [vmem:[%s1 + $0x38] sm:$0xf]
      %v257 = vld [vmem:[%s1 + $0x3c] sm:$0xf]
      %v258 = vld [vmem:[%s1 + $0x40] sm:$0xf]
      %v259 = vld [vmem:[%s1 + $0x44] sm:$0xf]
      %v260 = vld [vmem:[%s1 + $0x48] sm:$0xf]
      %v261 = vld [vmem:[%s1 + $0x4c] sm:$0xf]
      %v262 = vld [vmem:[%s1 + $0x50] sm:$0xf]
      %v263 = vld [vmem:[%s1 + $0x54] sm:$0xf]
      %v264 = vld [vmem:[%s1 + $0x58] sm:$0xf]
      %v265 = vld [vmem:[%s1 + $0x5c] sm:$0xf]
      %v266 = vld [vmem:[%s1 + $0x60] sm:$0xf]
      %v267 = vld [vmem:[%s1 + $0x64] sm:$0xf]
      %v268 = vld [vmem:[%s1 + $0x68] sm:$0xf]
      %v269 = vld [vmem:[%s1 + $0x6c] sm:$0xf]
      %v270 = vld [vmem:[%s1 + $0x70] sm:$0xf]
      %v271 = vld [vmem:[%s1 + $0x74] sm:$0xf]
      %v272 = vld [vmem:[%s1 + $0x78] sm:$0xf]
      %v273 = vld [vmem:[%s1 + $0x7c] sm:$0xf]
      %v274 = vld [vmem:[%s2] sm:$0x1]
      %v276 = vlaneseq
      %v277 = vshrl.u32 %v276, 7
      %v278 = vsub.s32 0, %v277
      %v279 = vrot.slane %v274, %v278
      %v345 = vunpack.c.l.b16 %v178
      %v346 = vunpack.c.h.b16 %v178
      %v347 = vunpack.c.l.b16 %v179
      %v348 = vunpack.c.h.b16 %v179
      %v349 = vunpack.c.l.b16 %v180
      %v350 = vunpack.c.h.b16 %v180
      %v351 = vunpack.c.l.b16 %v181
      %v352 = vunpack.c.h.b16 %v181
      %v353 = vunpack.c.l.b16 %v182
      %v354 = vunpack.c.h.b16 %v182
      %v355 = vunpack.c.l.b16 %v183
      %v356 = vunpack.c.h.b16 %v183
      %v357 = vunpack.c.l.b16 %v184
      %v358 = vunpack.c.h.b16 %v184
      %v359 = vunpack.c.l.b16 %v185
      %v360 = vunpack.c.h.b16 %v185
      %v361 = vunpack.c.l.b16 %v186
      %v362 = vunpack.c.h.b16 %v186
      %v363 = vunpack.c.l.b16 %v187
      %v364 = vunpack.c.h.b16 %v187
      %v365 = vunpack.c.l.b16 %v188
      %v366 = vunpack.c.h.b16 %v188
      %v367 = vunpack.c.l.b16 %v189
      %v368 = vunpack.c.h.b16 %v189
      %v369 = vunpack.c.l.b16 %v190
      %v370 = vunpack.c.h.b16 %v190
      %v371 = vunpack.c.l.b16 %v191
      %v372 = vunpack.c.h.b16 %v191
      %v373 = vunpack.c.l.b16 %v192
      %v374 = vunpack.c.h.b16 %v192
      %v375 = vunpack.c.l.b16 %v193
      %v376 = vunpack.c.h.b16 %v193
      %v377 = vunpack.c.l.b16 %v194
      %v378 = vunpack.c.h.b16 %v194
      %v379 = vunpack.c.l.b16 %v195
      %v380 = vunpack.c.h.b16 %v195
      %v381 = vunpack.c.l.b16 %v196
      %v382 = vunpack.c.h.b16 %v196
      %v383 = vunpack.c.l.b16 %v197
      %v384 = vunpack.c.h.b16 %v197
      %v385 = vunpack.c.l.b16 %v198
      %v386 = vunpack.c.h.b16 %v198
      %v387 = vunpack.c.l.b16 %v199
      %v388 = vunpack.c.h.b16 %v199
      %v389 = vunpack.c.l.b16 %v200
      %v390 = vunpack.c.h.b16 %v200
      %v391 = vunpack.c.l.b16 %v201
      %v392 = vunpack.c.h.b16 %v201
      %v393 = vunpack.c.l.b16 %v202
      %v394 = vunpack.c.h.b16 %v202
      %v395 = vunpack.c.l.b16 %v203
      %v396 = vunpack.c.h.b16 %v203
      %v397 = vunpack.c.l.b16 %v204
      %v398 = vunpack.c.h.b16 %v204
      %v399 = vunpack.c.l.b16 %v205
      %v400 = vunpack.c.h.b16 %v205
      %v401 = vunpack.c.l.b16 %v206
      %v402 = vunpack.c.h.b16 %v206
      %v403 = vunpack.c.l.b16 %v207
      %v404 = vunpack.c.h.b16 %v207
      %v405 = vunpack.c.l.b16 %v208
      %v406 = vunpack.c.h.b16 %v208
      %v407 = vunpack.c.l.b16 %v209
      %v408 = vunpack.c.h.b16 %v209
      %v409 = vunpack.c.l.b16 %v210
      %v410 = vunpack.c.h.b16 %v210
      %v411 = vunpack.c.l.b16 %v211
      %v412 = vunpack.c.h.b16 %v211
      %v413 = vunpack.c.l.b16 %v212
      %v414 = vunpack.c.h.b16 %v212
      %v415 = vunpack.c.l.b16 %v213
      %v416 = vunpack.c.h.b16 %v213
      %v417 = vunpack.c.l.b16 %v214
      %v418 = vunpack.c.h.b16 %v214
      %v419 = vunpack.c.l.b16 %v215
      %v420 = vunpack.c.h.b16 %v215
      %v421 = vunpack.c.l.b16 %v216
      %v422 = vunpack.c.h.b16 %v216
      %v423 = vunpack.c.l.b16 %v217
      %v424 = vunpack.c.h.b16 %v217
      %v425 = vunpack.c.l.b16 %v218
      %v426 = vunpack.c.h.b16 %v218
      %v427 = vunpack.c.l.b16 %v219
      %v428 = vunpack.c.h.b16 %v219
      %v429 = vunpack.c.l.b16 %v220
      %v430 = vunpack.c.h.b16 %v220
      %v431 = vunpack.c.l.b16 %v221
      %v432 = vunpack.c.h.b16 %v221
      %v433 = vunpack.c.l.b16 %v222
      %v434 = vunpack.c.h.b16 %v222
      %v435 = vunpack.c.l.b16 %v223
      %v436 = vunpack.c.h.b16 %v223
      %v437 = vunpack.c.l.b16 %v224
      %v438 = vunpack.c.h.b16 %v224
      %v439 = vunpack.c.l.b16 %v225
      %v440 = vunpack.c.h.b16 %v225
      %v441 = vunpack.c.l.b16 %v226
      %v442 = vunpack.c.h.b16 %v226
      %v443 = vunpack.c.l.b16 %v227
      %v444 = vunpack.c.h.b16 %v227
      %v445 = vunpack.c.l.b16 %v228
      %v446 = vunpack.c.h.b16 %v228
      %v447 = vunpack.c.l.b16 %v229
      %v448 = vunpack.c.h.b16 %v229
      %v449 = vunpack.c.l.b16 %v230
      %v450 = vunpack.c.h.b16 %v230
      %v451 = vunpack.c.l.b16 %v231
      %v452 = vunpack.c.h.b16 %v231
      %v453 = vunpack.c.l.b16 %v232
      %v454 = vunpack.c.h.b16 %v232
      %v455 = vunpack.c.l.b16 %v233
      %v456 = vunpack.c.h.b16 %v233
      %v457 = vunpack.c.l.b16 %v234
      %v458 = vunpack.c.h.b16 %v234
      %v459 = vunpack.c.l.b16 %v235
      %v460 = vunpack.c.h.b16 %v235
      %v461 = vunpack.c.l.b16 %v236
      %v462 = vunpack.c.h.b16 %v236
      %v463 = vunpack.c.l.b16 %v237
      %v464 = vunpack.c.h.b16 %v237
      %v465 = vunpack.c.l.b16 %v238
      %v466 = vunpack.c.h.b16 %v238
      %v467 = vunpack.c.l.b16 %v239
      %v468 = vunpack.c.h.b16 %v239
      %v469 = vunpack.c.l.b16 %v240
      %v470 = vunpack.c.h.b16 %v240
      %v471 = vunpack.c.l.b16 %v241
      %v472 = vunpack.c.h.b16 %v241
      %v473 = vpack.c.b16 %v347, %v345
      %v474 = vpack.c.b16 %v348, %v346
      %v475 = vpack.c.b16 %v351, %v349
      %v476 = vpack.c.b16 %v352, %v350
      %v477 = vpack.c.b16 %v355, %v353
      %v478 = vpack.c.b16 %v356, %v354
      %v479 = vpack.c.b16 %v359, %v357
      %v480 = vpack.c.b16 %v360, %v358
      %v481 = vpack.c.b16 %v363, %v361
      %v482 = vpack.c.b16 %v364, %v362
      %v483 = vpack.c.b16 %v367, %v365
      %v484 = vpack.c.b16 %v368, %v366
      %v485 = vpack.c.b16 %v371, %v369
      %v486 = vpack.c.b16 %v372, %v370
      %v487 = vpack.c.b16 %v375, %v373
      %v488 = vpack.c.b16 %v376, %v374
      %v489 = vpack.c.b16 %v379, %v377
      %v490 = vpack.c.b16 %v380, %v378
      %v491 = vpack.c.b16 %v383, %v381
      %v492 = vpack.c.b16 %v384, %v382
      %v493 = vpack.c.b16 %v387, %v385
      %v494 = vpack.c.b16 %v388, %v386
      %v495 = vpack.c.b16 %v391, %v389
      %v496 = vpack.c.b16 %v392, %v390
      %v497 = vpack.c.b16 %v395, %v393
      %v498 = vpack.c.b16 %v396, %v394
      %v499 = vpack.c.b16 %v399, %v397
      %v500 = vpack.c.b16 %v400, %v398
      %v501 = vpack.c.b16 %v403, %v401
      %v502 = vpack.c.b16 %v404, %v402
      %v503 = vpack.c.b16 %v407, %v405
      %v504 = vpack.c.b16 %v408, %v406
      %v505 = vpack.c.b16 %v411, %v409
      %v506 = vpack.c.b16 %v412, %v410
      %v507 = vpack.c.b16 %v415, %v413
      %v508 = vpack.c.b16 %v416, %v414
      %v509 = vpack.c.b16 %v419, %v417
      %v510 = vpack.c.b16 %v420, %v418
      %v511 = vpack.c.b16 %v423, %v421
      %v512 = vpack.c.b16 %v424, %v422
      %v513 = vpack.c.b16 %v427, %v425
      %v514 = vpack.c.b16 %v428, %v426
      %v515 = vpack.c.b16 %v431, %v429
      %v516 = vpack.c.b16 %v432, %v430
      %v517 = vpack.c.b16 %v435, %v433
      %v518 = vpack.c.b16 %v436, %v434
      %v519 = vpack.c.b16 %v439, %v437
      %v520 = vpack.c.b16 %v440, %v438
      %v521 = vpack.c.b16 %v443, %v441
      %v522 = vpack.c.b16 %v444, %v442
      %v523 = vpack.c.b16 %v447, %v445
      %v524 = vpack.c.b16 %v448, %v446
      %v525 = vpack.c.b16 %v451, %v449
      %v526 = vpack.c.b16 %v452, %v450
      %v527 = vpack.c.b16 %v455, %v453
      %v528 = vpack.c.b16 %v456, %v454
      %v529 = vpack.c.b16 %v459, %v457
      %v530 = vpack.c.b16 %v460, %v458
      %v531 = vpack.c.b16 %v463, %v461
      %v532 = vpack.c.b16 %v464, %v462
      %v533 = vpack.c.b16 %v467, %v465
      %v534 = vpack.c.b16 %v468, %v466
      %v535 = vpack.c.b16 %v471, %v469
      %v536 = vpack.c.b16 %v472, %v470
      %v633 = vunpack.c.l.b16 %v242
      %v634 = vunpack.c.l.b16 %v243
      %v635 = vunpack.c.l.b16 %v244
      %v636 = vunpack.c.l.b16 %v245
      %v637 = vunpack.c.l.b16 %v246
      %v638 = vunpack.c.l.b16 %v247
      %v639 = vunpack.c.l.b16 %v248
      %v640 = vunpack.c.l.b16 %v249
      %v641 = vunpack.c.l.b16 %v250
      %v642 = vunpack.c.l.b16 %v251
      %v643 = vunpack.c.l.b16 %v252
      %v644 = vunpack.c.l.b16 %v253
      %v645 = vunpack.c.l.b16 %v254
      %v646 = vunpack.c.l.b16 %v255
      %v647 = vunpack.c.l.b16 %v256
      %v648 = vunpack.c.l.b16 %v257
      %v649 = vunpack.c.l.b16 %v258
      %v650 = vunpack.c.l.b16 %v259
      %v651 = vunpack.c.l.b16 %v260
      %v652 = vunpack.c.l.b16 %v261
      %v653 = vunpack.c.l.b16 %v262
      %v654 = vunpack.c.l.b16 %v263
      %v655 = vunpack.c.l.b16 %v264
      %v656 = vunpack.c.l.b16 %v265
      %v657 = vunpack.c.l.b16 %v266
      %v658 = vunpack.c.l.b16 %v267
      %v659 = vunpack.c.l.b16 %v268
      %v660 = vunpack.c.l.b16 %v269
      %v661 = vunpack.c.l.b16 %v270
      %v662 = vunpack.c.l.b16 %v271
      %v663 = vunpack.c.l.b16 %v272
      %v664 = vunpack.c.l.b16 %v273
      %v665 = vpack.c.b16 %v634, %v633
      %v666 = vpack.c.b16 %v636, %v635
      %v667 = vpack.c.b16 %v638, %v637
      %v668 = vpack.c.b16 %v640, %v639
      %v669 = vpack.c.b16 %v642, %v641
      %v670 = vpack.c.b16 %v644, %v643
      %v671 = vpack.c.b16 %v646, %v645
      %v672 = vpack.c.b16 %v648, %v647
      %v673 = vpack.c.b16 %v650, %v649
      %v674 = vpack.c.b16 %v652, %v651
      %v675 = vpack.c.b16 %v654, %v653
      %v676 = vpack.c.b16 %v656, %v655
      %v677 = vpack.c.b16 %v658, %v657
      %v678 = vpack.c.b16 %v660, %v659
      %v679 = vpack.c.b16 %v662, %v661
      %v680 = vpack.c.b16 %v664, %v663
      %697 = vmatprep.subr.bf16.mxu0 0
      %698 = vmatpush1.bf16.msra.mxu0 %v672
      %699 = vmatprep.subr.bf16.mxu0 0
      %700 = vmatpush1.bf16.msra.mxu0 %v671
      %701 = vmatprep.subr.bf16.mxu0 0
      %702 = vmatpush1.bf16.msra.mxu0 %v670
      %703 = vmatprep.subr.bf16.mxu0 0
      %704 = vmatpush1.bf16.msra.mxu0 %v669
      %705 = vmatprep.subr.bf16.mxu0 0
      %706 = vmatpush1.bf16.msra.mxu0 %v668
      %707 = vmatprep.subr.bf16.mxu0 0
      %708 = vmatpush1.bf16.msra.mxu0 %v667
      %709 = vmatprep.subr.bf16.mxu0 0
      %710 = vmatpush1.bf16.msra.mxu0 %v666
      %711 = vmatprep.subr.bf16.mxu0 0
      %712 = vmatpush1.bf16.msra.mxu0 %v665
      %713 = vmatprep.subr.bf16.mxu0 0
      %714 = vmatpush2.bf16.msra.mxu0 %v680
      %715 = vmatprep.subr.bf16.mxu0 0
      %716 = vmatpush2.bf16.msra.mxu0 %v679
      %717 = vmatprep.subr.bf16.mxu0 0
      %718 = vmatpush2.bf16.msra.mxu0 %v678
      %719 = vmatprep.subr.bf16.mxu0 0
      %720 = vmatpush2.bf16.msra.mxu0 %v677
      %721 = vmatprep.subr.bf16.mxu0 0
      %722 = vmatpush2.bf16.msra.mxu0 %v676
      %723 = vmatprep.subr.bf16.mxu0 0
      %724 = vmatpush2.bf16.msra.mxu0 %v675
      %725 = vmatprep.subr.bf16.mxu0 0
      %726 = vmatpush2.bf16.msra.mxu0 %v674
      %727 = vmatprep.subr.bf16.mxu0 0
      %728 = vmatpush2.bf16.msra.mxu0 %v673
      %729 = vmatprep.mubr.bf16.mxu0 %v474
      %730 = vmatmul.mubr.bf16.gmra.mxu0 %v473
      %v731 = vpop.f32.mrf.mxu0
      %v732 = vadd.f32 %v279, %v731
      %v733 = vpop.f32.mrf.mxu0
      %v734 = vpop.f32.mrf.mxu0
      %v735 = vadd.f32 %v279, %v734
      %v736 = vpop.f32.mrf.mxu0
      %737 = vmatprep.mubr.bf16.mxu0 %v476
      %738 = vmatmul.mubr.bf16.gmra.mxu0 %v475
      %v739 = vpop.f32.mrf.mxu0
      %v740 = vadd.f32 %v279, %v739
      %v741 = vpop.f32.mrf.mxu0
      %v742 = vpop.f32.mrf.mxu0
      %v743 = vadd.f32 %v279, %v742
      %v744 = vpop.f32.mrf.mxu0
      %745 = vmatprep.mubr.bf16.mxu0 %v478
      %746 = vmatmul.mubr.bf16.gmra.mxu0 %v477
      %v747 = vpop.f32.mrf.mxu0
      %v748 = vadd.f32 %v279, %v747
      %v749 = vpop.f32.mrf.mxu0
      %v750 = vpop.f32.mrf.mxu0
      %v751 = vadd.f32 %v279, %v750
      %v752 = vpop.f32.mrf.mxu0
      %753 = vmatprep.mubr.bf16.mxu0 %v480
      %754 = vmatmul.mubr.bf16.gmra.mxu0 %v479
      %v755 = vpop.f32.mrf.mxu0
      %v756 = vadd.f32 %v279, %v755
      %v757 = vpop.f32.mrf.mxu0
      %v758 = vpop.f32.mrf.mxu0
      %v759 = vadd.f32 %v279, %v758
      %v760 = vpop.f32.mrf.mxu0
      %761 = vmatprep.mubr.bf16.mxu0 %v482
      %762 = vmatmul.mubr.bf16.gmra.mxu0 %v481
      %v763 = vpop.f32.mrf.mxu0
      %v764 = vadd.f32 %v279, %v763
      %v765 = vpop.f32.mrf.mxu0
      %v766 = vpop.f32.mrf.mxu0
      %v767 = vadd.f32 %v279, %v766
      %v768 = vpop.f32.mrf.mxu0
      %769 = vmatprep.mubr.bf16.mxu0 %v484
      %770 = vmatmul.mubr.bf16.gmra.mxu0 %v483
      %v771 = vpop.f32.mrf.mxu0
      %v772 = vadd.f32 %v279, %v771
      %v773 = vpop.f32.mrf.mxu0
      %v774 = vpop.f32.mrf.mxu0
      %v775 = vadd.f32 %v279, %v774
      %v776 = vpop.f32.mrf.mxu0
      %777 = vmatprep.mubr.bf16.mxu0 %v486
      %778 = vmatmul.mubr.bf16.gmra.mxu0 %v485
      %v779 = vpop.f32.mrf.mxu0
      %v780 = vadd.f32 %v279, %v779
      %v781 = vpop.f32.mrf.mxu0
      %v782 = vpop.f32.mrf.mxu0
      %v783 = vadd.f32 %v279, %v782
      %v784 = vpop.f32.mrf.mxu0
      %785 = vmatprep.mubr.bf16.mxu0 %v488
      %786 = vmatmul.mubr.bf16.gmra.mxu0 %v487
      %v787 = vpop.f32.mrf.mxu0
      %v788 = vadd.f32 %v279, %v787
      %v789 = vpop.f32.mrf.mxu0
      %v790 = vpop.f32.mrf.mxu0
      %v791 = vadd.f32 %v279, %v790
      %v792 = vpop.f32.mrf.mxu0
      %793 = vmatprep.mubr.bf16.mxu0 %v490
      %794 = vmatmul.mubr.bf16.gmra.mxu0 %v489
      %v795 = vpop.f32.mrf.mxu0
      %v796 = vadd.f32 %v279, %v795
      %v797 = vpop.f32.mrf.mxu0
      %v798 = vpop.f32.mrf.mxu0
      %v799 = vadd.f32 %v279, %v798
      %v800 = vpop.f32.mrf.mxu0
      %801 = vmatprep.mubr.bf16.mxu0 %v492
      %802 = vmatmul.mubr.bf16.gmra.mxu0 %v491
      %v803 = vpop.f32.mrf.mxu0
      %v804 = vadd.f32 %v279, %v803
      %v805 = vpop.f32.mrf.mxu0
      %v806 = vpop.f32.mrf.mxu0
      %v807 = vadd.f32 %v279, %v806
      %v808 = vpop.f32.mrf.mxu0
      %809 = vmatprep.mubr.bf16.mxu0 %v494
      %810 = vmatmul.mubr.bf16.gmra.mxu0 %v493
      %v811 = vpop.f32.mrf.mxu0
      %v812 = vadd.f32 %v279, %v811
      %v813 = vpop.f32.mrf.mxu0
      %v814 = vpop.f32.mrf.mxu0
      %v815 = vadd.f32 %v279, %v814
      %v816 = vpop.f32.mrf.mxu0
      %817 = vmatprep.mubr.bf16.mxu0 %v496
      %818 = vmatmul.mubr.bf16.gmra.mxu0 %v495
      %v819 = vpop.f32.mrf.mxu0
      %v820 = vadd.f32 %v279, %v819
      %v821 = vpop.f32.mrf.mxu0
      %v822 = vpop.f32.mrf.mxu0
      %v823 = vadd.f32 %v279, %v822
      %v824 = vpop.f32.mrf.mxu0
      %825 = vmatprep.mubr.bf16.mxu0 %v498
      %826 = vmatmul.mubr.bf16.gmra.mxu0 %v497
      %v827 = vpop.f32.mrf.mxu0
      %v828 = vadd.f32 %v279, %v827
      %v829 = vpop.f32.mrf.mxu0
      %v830 = vpop.f32.mrf.mxu0
      %v831 = vadd.f32 %v279, %v830
      %v832 = vpop.f32.mrf.mxu0
      %833 = vmatprep.mubr.bf16.mxu0 %v500
      %834 = vmatmul.mubr.bf16.gmra.mxu0 %v499
      %v835 = vpop.f32.mrf.mxu0
      %v836 = vadd.f32 %v279, %v835
      %v837 = vpop.f32.mrf.mxu0
      %v838 = vpop.f32.mrf.mxu0
      %v839 = vadd.f32 %v279, %v838
      %v840 = vpop.f32.mrf.mxu0
      %841 = vmatprep.mubr.bf16.mxu0 %v502
      %842 = vmatmul.mubr.bf16.gmra.mxu0 %v501
      %v843 = vpop.f32.mrf.mxu0
      %v844 = vadd.f32 %v279, %v843
      %v845 = vpop.f32.mrf.mxu0
      %v846 = vpop.f32.mrf.mxu0
      %v847 = vadd.f32 %v279, %v846
      %v848 = vpop.f32.mrf.mxu0
      %849 = vmatprep.mubr.bf16.mxu0 %v504
      %850 = vmatmul.mubr.bf16.gmra.mxu0 %v503
      %v851 = vpop.f32.mrf.mxu0
      %v852 = vadd.f32 %v279, %v851
      %v853 = vpop.f32.mrf.mxu0
      %v854 = vpop.f32.mrf.mxu0
      %v855 = vadd.f32 %v279, %v854
      %v856 = vpop.f32.mrf.mxu0
      %857 = vmatprep.mubr.bf16.mxu0 %v506
      %858 = vmatmul.mubr.bf16.gmra.mxu0 %v505
      %v859 = vpop.f32.mrf.mxu0
      %v860 = vadd.f32 %v279, %v859
      %v861 = vpop.f32.mrf.mxu0
      %v862 = vpop.f32.mrf.mxu0
      %v863 = vadd.f32 %v279, %v862
      %v864 = vpop.f32.mrf.mxu0
      %865 = vmatprep.mubr.bf16.mxu0 %v508
      %866 = vmatmul.mubr.bf16.gmra.mxu0 %v507
      %v867 = vpop.f32.mrf.mxu0
      %v868 = vadd.f32 %v279, %v867
      %v869 = vpop.f32.mrf.mxu0
      %v870 = vpop.f32.mrf.mxu0
      %v871 = vadd.f32 %v279, %v870
      %v872 = vpop.f32.mrf.mxu0
      %873 = vmatprep.mubr.bf16.mxu0 %v510
      %874 = vmatmul.mubr.bf16.gmra.mxu0 %v509
      %v875 = vpop.f32.mrf.mxu0
      %v876 = vadd.f32 %v279, %v875
      %v877 = vpop.f32.mrf.mxu0
      %v878 = vpop.f32.mrf.mxu0
      %v879 = vadd.f32 %v279, %v878
      %v880 = vpop.f32.mrf.mxu0
      %881 = vmatprep.mubr.bf16.mxu0 %v512
      %882 = vmatmul.mubr.bf16.gmra.mxu0 %v511
      %v883 = vpop.f32.mrf.mxu0
      %v884 = vadd.f32 %v279, %v883
      %v885 = vpop.f32.mrf.mxu0
      %v886 = vpop.f32.mrf.mxu0
      %v887 = vadd.f32 %v279, %v886
      %v888 = vpop.f32.mrf.mxu0
      %889 = vmatprep.mubr.bf16.mxu0 %v514
      %890 = vmatmul.mubr.bf16.gmra.mxu0 %v513
      %v891 = vpop.f32.mrf.mxu0
      %v892 = vadd.f32 %v279, %v891
      %v893 = vpop.f32.mrf.mxu0
      %v894 = vpop.f32.mrf.mxu0
      %v895 = vadd.f32 %v279, %v894
      %v896 = vpop.f32.mrf.mxu0
      %897 = vmatprep.mubr.bf16.mxu0 %v516
      %898 = vmatmul.mubr.bf16.gmra.mxu0 %v515
      %v899 = vpop.f32.mrf.mxu0
      %v900 = vadd.f32 %v279, %v899
      %v901 = vpop.f32.mrf.mxu0
      %v902 = vpop.f32.mrf.mxu0
      %v903 = vadd.f32 %v279, %v902
      %v904 = vpop.f32.mrf.mxu0
      %905 = vmatprep.mubr.bf16.mxu0 %v518
      %906 = vmatmul.mubr.bf16.gmra.mxu0 %v517
      %v907 = vpop.f32.mrf.mxu0
      %v908 = vadd.f32 %v279, %v907
      %v909 = vpop.f32.mrf.mxu0
      %v910 = vpop.f32.mrf.mxu0
      %v911 = vadd.f32 %v279, %v910
      %v912 = vpop.f32.mrf.mxu0
      %913 = vmatprep.mubr.bf16.mxu0 %v520
      %914 = vmatmul.mubr.bf16.gmra.mxu0 %v519
      %v915 = vpop.f32.mrf.mxu0
      %v916 = vadd.f32 %v279, %v915
      %v917 = vpop.f32.mrf.mxu0
      %v918 = vpop.f32.mrf.mxu0
      %v919 = vadd.f32 %v279, %v918
      %v920 = vpop.f32.mrf.mxu0
      %921 = vmatprep.mubr.bf16.mxu0 %v522
      %922 = vmatmul.mubr.bf16.gmra.mxu0 %v521
      %v923 = vpop.f32.mrf.mxu0
      %v924 = vadd.f32 %v279, %v923
      %v925 = vpop.f32.mrf.mxu0
      %v926 = vpop.f32.mrf.mxu0
      %v927 = vadd.f32 %v279, %v926
      %v928 = vpop.f32.mrf.mxu0
      %929 = vmatprep.mubr.bf16.mxu0 %v524
      %930 = vmatmul.mubr.bf16.gmra.mxu0 %v523
      %v931 = vpop.f32.mrf.mxu0
      %v932 = vadd.f32 %v279, %v931
      %v933 = vpop.f32.mrf.mxu0
      %v934 = vpop.f32.mrf.mxu0
      %v935 = vadd.f32 %v279, %v934
      %v936 = vpop.f32.mrf.mxu0
      %937 = vmatprep.mubr.bf16.mxu0 %v526
      %938 = vmatmul.mubr.bf16.gmra.mxu0 %v525
      %v939 = vpop.f32.mrf.mxu0
      %v940 = vadd.f32 %v279, %v939
      %v941 = vpop.f32.mrf.mxu0
      %v942 = vpop.f32.mrf.mxu0
      %v943 = vadd.f32 %v279, %v942
      %v944 = vpop.f32.mrf.mxu0
      %945 = vmatprep.mubr.bf16.mxu0 %v528
      %946 = vmatmul.mubr.bf16.gmra.mxu0 %v527
      %v947 = vpop.f32.mrf.mxu0
      %v948 = vadd.f32 %v279, %v947
      %v949 = vpop.f32.mrf.mxu0
      %v950 = vpop.f32.mrf.mxu0
      %v951 = vadd.f32 %v279, %v950
      %v952 = vpop.f32.mrf.mxu0
      %953 = vmatprep.mubr.bf16.mxu0 %v530
      %954 = vmatmul.mubr.bf16.gmra.mxu0 %v529
      %v955 = vpop.f32.mrf.mxu0
      %v956 = vadd.f32 %v279, %v955
      %v957 = vpop.f32.mrf.mxu0
      %v958 = vpop.f32.mrf.mxu0
      %v959 = vadd.f32 %v279, %v958
      %v960 = vpop.f32.mrf.mxu0
      %961 = vmatprep.mubr.bf16.mxu0 %v532
      %962 = vmatmul.mubr.bf16.gmra.mxu0 %v531
      %v963 = vpop.f32.mrf.mxu0
      %v964 = vadd.f32 %v279, %v963
      %v965 = vpop.f32.mrf.mxu0
      %v966 = vpop.f32.mrf.mxu0
      %v967 = vadd.f32 %v279, %v966
      %v968 = vpop.f32.mrf.mxu0
      %969 = vmatprep.mubr.bf16.mxu0 %v534
      %970 = vmatmul.mubr.bf16.gmra.mxu0 %v533
      %v971 = vpop.f32.mrf.mxu0
      %v972 = vadd.f32 %v279, %v971
      %v973 = vpop.f32.mrf.mxu0
      %v974 = vpop.f32.mrf.mxu0
      %v975 = vadd.f32 %v279, %v974
      %v976 = vpop.f32.mrf.mxu0
      %977 = vmatprep.mubr.bf16.mxu0 %v536
      %978 = vmatmul.mubr.bf16.gmra.mxu0 %v535
      %v979 = vpop.f32.mrf.mxu0
      %v980 = vadd.f32 %v279, %v979
      %v981 = vpop.f32.mrf.mxu0
      %v982 = vpop.f32.mrf.mxu0
      %v983 = vadd.f32 %v279, %v982
      %v984 = vpop.f32.mrf.mxu0
      %985 = vdwg.mxu0
      %v986 = vtanh.pop %v732
      %v987 = vtanh.pop %v735
      %v988 = vtanh.pop %v740
      %v989 = vtanh.pop %v743
      %v990 = vtanh.pop %v748
      %v991 = vtanh.pop %v751
      %v992 = vtanh.pop %v756
      %v993 = vtanh.pop %v759
      %v994 = vtanh.pop %v764
      %v995 = vtanh.pop %v767
      %v996 = vtanh.pop %v772
      %v997 = vtanh.pop %v775
      %v998 = vtanh.pop %v780
      %v999 = vtanh.pop %v783
      %v1000 = vtanh.pop %v788
      %v1001 = vtanh.pop %v791
      %v1002 = vtanh.pop %v796
      %v1003 = vtanh.pop %v799
      %v1004 = vtanh.pop %v804
      %v1005 = vtanh.pop %v807
      %v1006 = vtanh.pop %v812
      %v1007 = vtanh.pop %v815
      %v1008 = vtanh.pop %v820
      %v1009 = vtanh.pop %v823
      %v1010 = vtanh.pop %v828
      %v1011 = vtanh.pop %v831
      %v1012 = vtanh.pop %v836
      %v1013 = vtanh.pop %v839
      %v1014 = vtanh.pop %v844
      %v1015 = vtanh.pop %v847
      %v1016 = vtanh.pop %v852
      %v1017 = vtanh.pop %v855
      %v1018 = vtanh.pop %v860
      %v1019 = vtanh.pop %v863
      %v1020 = vtanh.pop %v868
      %v1021 = vtanh.pop %v871
      %v1022 = vtanh.pop %v876
      %v1023 = vtanh.pop %v879
      %v1024 = vtanh.pop %v884
      %v1025 = vtanh.pop %v887
      %v1026 = vtanh.pop %v892
      %v1027 = vtanh.pop %v895
      %v1028 = vtanh.pop %v900
      %v1029 = vtanh.pop %v903
      %v1030 = vtanh.pop %v908
      %v1031 = vtanh.pop %v911
      %v1032 = vtanh.pop %v916
      %v1033 = vtanh.pop %v919
      %v1034 = vtanh.pop %v924
      %v1035 = vtanh.pop %v927
      %v1036 = vtanh.pop %v932
      %v1037 = vtanh.pop %v935
      %v1038 = vtanh.pop %v940
      %v1039 = vtanh.pop %v943
      %v1040 = vtanh.pop %v948
      %v1041 = vtanh.pop %v951
      %v1042 = vtanh.pop %v956
      %v1043 = vtanh.pop %v959
      %v1044 = vtanh.pop %v964
      %v1045 = vtanh.pop %v967
      %v1046 = vtanh.pop %v972
      %v1047 = vtanh.pop %v975
      %v1048 = vtanh.pop %v980
      %v1049 = vtanh.pop %v983
      %1050 = vst [vmem:[%s175] sm:$0xff] %v986
      %1051 = vst [vmem:[%s175 + $0x8] sm:$0xff] %v987
      %1052 = vst [vmem:[%s175 + $0x10] sm:$0xff] %v988
      %1053 = vst [vmem:[%s175 + $0x18] sm:$0xff] %v989
      %1054 = vst [vmem:[%s175 + $0x20] sm:$0xff] %v990
      %1055 = vst [vmem:[%s175 + $0x28] sm:$0xff] %v991
      %1056 = vst [vmem:[%s175 + $0x30] sm:$0xff] %v992
      %1057 = vst [vmem:[%s175 + $0x38] sm:$0xff] %v993
      %1058 = vst [vmem:[%s175 + $0x40] sm:$0xff] %v994
      %1059 = vst [vmem:[%s175 + $0x48] sm:$0xff] %v995
      %1060 = vst [vmem:[%s175 + $0x50] sm:$0xff] %v996
      %1061 = vst [vmem:[%s175 + $0x58] sm:$0xff] %v997
      %1062 = vst [vmem:[%s175 + $0x60] sm:$0xff] %v998
      %1063 = vst [vmem:[%s175 + $0x68] sm:$0xff] %v999
      %1064 = vst [vmem:[%s175 + $0x70] sm:$0xff] %v1000
      %1065 = vst [vmem:[%s175 + $0x78] sm:$0xff] %v1001
      %1066 = vst [vmem:[%s175 + $0x80] sm:$0xff] %v1002
      %1067 = vst [vmem:[%s175 + $0x88] sm:$0xff] %v1003
      %1068 = vst [vmem:[%s175 + $0x90] sm:$0xff] %v1004
      %1069 = vst [vmem:[%s175 + $0x98] sm:$0xff] %v1005
      %1070 = vst [vmem:[%s175 + $0xa0] sm:$0xff] %v1006
      %1071 = vst [vmem:[%s175 + $0xa8] sm:$0xff] %v1007
      %1072 = vst [vmem:[%s175 + $0xb0] sm:$0xff] %v1008
      %1073 = vst [vmem:[%s175 + $0xb8] sm:$0xff] %v1009
      %1074 = vst [vmem:[%s175 + $0xc0] sm:$0xff] %v1010
      %1075 = vst [vmem:[%s175 + $0xc8] sm:$0xff] %v1011
      %1076 = vst [vmem:[%s175 + $0xd0] sm:$0xff] %v1012
      %1077 = vst [vmem:[%s175 + $0xd8] sm:$0xff] %v1013
      %1078 = vst [vmem:[%s175 + $0xe0] sm:$0xff] %v1014
      %1079 = vst [vmem:[%s175 + $0xe8] sm:$0xff] %v1015
      %1080 = vst [vmem:[%s175 + $0xf0] sm:$0xff] %v1016
      %1081 = vst [vmem:[%s175 + $0xf8] sm:$0xff] %v1017
      %1082 = vst [vmem:[%s175 + $0x100] sm:$0xff] %v1018
      %1083 = vst [vmem:[%s175 + $0x108] sm:$0xff] %v1019
      %1084 = vst [vmem:[%s175 + $0x110] sm:$0xff] %v1020
      %1085 = vst [vmem:[%s175 + $0x118] sm:$0xff] %v1021
      %1086 = vst [vmem:[%s175 + $0x120] sm:$0xff] %v1022
      %1087 = vst [vmem:[%s175 + $0x128] sm:$0xff] %v1023
      %1088 = vst [vmem:[%s175 + $0x130] sm:$0xff] %v1024
      %1089 = vst [vmem:[%s175 + $0x138] sm:$0xff] %v1025
      %1090 = vst [vmem:[%s175 + $0x140] sm:$0xff] %v1026
      %1091 = vst [vmem:[%s175 + $0x148] sm:$0xff] %v1027
      %1092 = vst [vmem:[%s175 + $0x150] sm:$0xff] %v1028
      %1093 = vst [vmem:[%s175 + $0x158] sm:$0xff] %v1029
      %1094 = vst [vmem:[%s175 + $0x160] sm:$0xff] %v1030
      %1095 = vst [vmem:[%s175 + $0x168] sm:$0xff] %v1031
      %1096 = vst [vmem:[%s175 + $0x170] sm:$0xff] %v1032
      %1097 = vst [vmem:[%s175 + $0x178] sm:$0xff] %v1033
      %1098 = vst [vmem:[%s175 + $0x180] sm:$0xff] %v1034
      %1099 = vst [vmem:[%s175 + $0x188] sm:$0xff] %v1035
      %1100 = vst [vmem:[%s175 + $0x190] sm:$0xff] %v1036
      %1101 = vst [vmem:[%s175 + $0x198] sm:$0xff] %v1037
      %1102 = vst [vmem:[%s175 + $0x1a0] sm:$0xff] %v1038
      %1103 = vst [vmem:[%s175 + $0x1a8] sm:$0xff] %v1039
      %1104 = vst [vmem:[%s175 + $0x1b0] sm:$0xff] %v1040
      %1105 = vst [vmem:[%s175 + $0x1b8] sm:$0xff] %v1041
      %1106 = vst [vmem:[%s175 + $0x1c0] sm:$0xff] %v1042
      %1107 = vst [vmem:[%s175 + $0x1c8] sm:$0xff] %v1043
      %1108 = vst [vmem:[%s175 + $0x1d0] sm:$0xff] %v1044
      %1109 = vst [vmem:[%s175 + $0x1d8] sm:$0xff] %v1045
      %1110 = vst [vmem:[%s175 + $0x1e0] sm:$0xff] %v1046
      %1111 = vst [vmem:[%s175 + $0x1e8] sm:$0xff] %v1047
      %1112 = vst [vmem:[%s175 + $0x1f0] sm:$0xff] %v1048
      %1113 = vst [vmem:[%s175 + $0x1f8] sm:$0xff] %v1049
      %s1114 = smul.u32 64, %s14
      %p1115 = scmp.lt.s32.totalorder %s1114, 1023
      %s1116 = scalar_select %p1115, %s1114, 1023
      %s1117 = smul.addr %s1116, 8
      %s1118 = scalar_lea.vmem %s3, %s1117
      // Predicated region
      $region33: #{generator_forward.9} parent=31 // pred_check
        %p1119 = pneg %p100
      $region34: #{generator_forward.9} parent=31 // pred_check_branch
        %1121 = sbr.rel (%p1119) target = $region36
      $region35: #{generator_forward.9} parent=31 // pred_region
        %s1122 = smul.u32 64, %s14
      $region36: #{generator_forward.9} parent=31 // pred_fallthru
        _
    $region32: #{generator_forward.9} parent=5 // pred_fallthru
      _
    %p1123 = scmp.le.s32.totalorder 2, %s9
    // Predicated region
    $region37: #{generator_forward.9} parent=5 // pred_check
      %p1124 = pneg %p1123
    $region38: #{generator_forward.9} parent=5 // pred_check_branch
      %1126 = sbr.rel (%p1124) target = $region40
    $region39: #{generator_forward.9} parent=5 // pred_region
      %s1127 = ssub.s32 %s9, 2
      // Predicated region
      $region41: #{generator_forward.9} parent=39 // pred_check
        %p1128 = pneg %p106
      $region42: #{generator_forward.9} parent=39 // pred_check_branch
        %1130 = sbr.rel (%p1128) target = $region44
      $region43: #{generator_forward.9} parent=39 // pred_region
        %s1131 = smul.u32 64, %s15
        %p1132 = scmp.lt.s32.totalorder %s1131, 1023
        %s1133 = scalar_select %p1132, %s1131, 1023
        %s1134 = smul.addr %s1133, 8
        %s1135 = scalar_lea.vmem %s3, %s1134
      $region44: #{generator_forward.9} parent=39 // pred_fallthru
        _
    $region40: #{generator_forward.9} parent=5 // pred_fallthru
      _
  $region6: #{generator_forward.9} parent=0 // loop_footer
    %s13 = sadd.s32 1, %s9
  $region7: #{generator_forward.9} parent=0 // loop_footer_branch
    %8 = sbr.rel target = $region3
  $region8: #{generator_forward.9} parent=0 // loop_exit
    _

</llo_original>
